<compile_context>
chip_gen: v7x
topology: tpu7x:2x2x1
jax: 0.10.0
libtpu: 0.0.40
codegen_flags: <defaults>
</compile_context>

<pallas_src>
import jax
import jax.numpy as jnp
import numpy as np
from jax.experimental import pallas as pl
from jax.experimental.pallas import tpu as pltpu

BN_EPS = 1e-5


# --------------------------------------------------------------------------------------
# small helpers
# --------------------------------------------------------------------------------------
def _round_up(x, m):
    return ((x + m - 1) // m) * m


def _row_tile(n, target):
    """Largest aligned tile <= target dividing n (n is always a multiple of 8 here)."""
    for t in (target, 4096, 2048, 1024, 512, 256, 128, 64, 32, 16, 8):
        if t <= n and n % t == 0:
            return t
    return n


def _vmem_limit(block_bytes):
    """VMEM limit from the (double-buffered) block sizes, capped by the chip's capacity."""
    try:
        cap = int(getattr(pltpu.get_tpu_info(), "vmem_capacity_bytes", 0)) or (64 << 20)
    except Exception:
        cap = 64 << 20
    need = 2 * block_bytes + (4 << 20)
    return int(min(max(need, 32 << 20), int(cap * 0.9)))


def _affine_from_stats(stats, gamma, beta, n_rows):
    """Fold training-mode BatchNorm1d (biased batch variance) into a per-channel affine."""
    mean = stats[0] / n_rows
    var = jnp.maximum(stats[1] / n_rows - mean * mean, 0.0)
    rstd = jax.lax.rsqrt(var + BN_EPS)
    scale = (gamma * rstd).astype(jnp.float32)
    shift = (beta - mean * scale).astype(jnp.float32)
    return scale.reshape(1, -1), shift.reshape(1, -1)


# --------------------------------------------------------------------------------------
# kernel 1: fused [prev-BN affine + ReLU prologue] -> K-tap conv matmul -> BN stats
# --------------------------------------------------------------------------------------
def _make_conv_kernel(kk, tl, tlh, pad, l_valid, do_affine, need_out_mask, dot_dtype):
    def kernel(x_ref, w_ref, s_ref, b_ref, y_ref, st_ref):
        i = pl.program_id(2)
        base = pl.multiple_of(i * tl, 8)

        # haloed input window for this output tile (aligned load: base, tl, tlh all %8==0)
        xh = x_ref[pl.ds(base, tlh), :]
        if do_affine:
            # previous layer's BN affine + ReLU, applied once per tile (f32 math),
            # then mask halo / L-padding rows back to exact zeros ('same' conv padding).
            h = jnp.maximum(xh.astype(jnp.float32) * s_ref[...] + b_ref[...], 0.0)
            idx = base + jax.lax.broadcasted_iota(jnp.int32, (tlh, 1), 0)
            valid = jnp.logical_and(idx >= pad, idx < pad + l_valid)
            h = jnp.where(valid, h, 0.0).astype(dot_dtype)
        else:
            h = xh.astype(dot_dtype)

        cout = y_ref.shape[-1]
        acc = jnp.dot(h[0:tl, :], w_ref[0], preferred_element_type=jnp.float32)
        for k in range(1, kk):
            acc = acc + jnp.dot(h[k:k + tl, :], w_ref[k],
                                preferred_element_type=jnp.float32)

        # BN batch statistics from the f32 accumulator (exclude L-padding output rows)
        if need_out_mask:
            ridx = base + jax.lax.broadcasted_iota(jnp.int32, (tl, 1), 0)
            ystat = jnp.where(ridx < l_valid, acc, 0.0)
        else:
            ystat = acc
        part = jnp.concatenate(
            [jnp.sum(ystat, axis=0, keepdims=True),
             jnp.sum(ystat * ystat, axis=0, keepdims=True)], axis=0)

        @pl.when(jnp.logical_and(pl.program_id(1) == 0, pl.program_id(2) == 0))
        def _init():
            st_ref[...] = jnp.zeros_like(st_ref)

        st_ref[...] += part
        y_ref[...] = acc.astype(y_ref.dtype)

    return kernel


def conv_bn_stats(x_in, w, scale, shift, *, tl, lpad, l_valid, halo, pad,
                  do_affine, s_split, store_dtype, dot_dtype):
    """y = conv(prologue(x_in)) tiled over (megacore split, batch, L tiles) + BN stats."""
    bsz, lh, cin = x_in.shape
    kk, _, cout = w.shape
    assert lh == lpad + halo
    tlh = tl + halo
    n_tiles = lpad // tl
    bs = bsz // s_split
    need_out_mask = (lpad != l_valid)

    kernel = _make_conv_kernel(kk, tl, tlh, pad, l_valid, do_affine,
                               need_out_mask, dot_dtype)

    isz_s = jnp.dtype(store_dtype).itemsize
    isz_d = jnp.dtype(dot_dtype).itemsize
    block_bytes = (lh * cin * isz_s + kk * cin * cout * isz_d + 2 * cin * 4
                   + tl * cout * isz_s + 2 * cout * 4)
    flops = 2 * bsz * lpad * kk * cin * cout
    bytes_accessed = (x_in.size * isz_s + w.size * isz_d + 2 * cin * 4
                      + bsz * lpad * cout * isz_s + s_split * 2 * cout * 4)

    y, st = pl.pallas_call(
        kernel,
        out_shape=(jax.ShapeDtypeStruct((bsz, lpad, cout), store_dtype),
                   jax.ShapeDtypeStruct((s_split, 2, cout), jnp.float32)),
        grid=(s_split, bs, n_tiles),
        in_specs=[
            pl.BlockSpec((None, lh, cin), lambda s, b, i: (s * bs + b, 0, 0)),
            pl.BlockSpec((kk, cin, cout), lambda s, b, i: (0, 0, 0)),
            pl.BlockSpec((1, cin), lambda s, b, i: (0, 0)),
            pl.BlockSpec((1, cin), lambda s, b, i: (0, 0)),
        ],
        out_specs=(
            pl.BlockSpec((None, tl, cout), lambda s, b, i: (s * bs + b, i, 0)),
            pl.BlockSpec((None, 2, cout), lambda s, b, i: (s, 0, 0)),  # per-core accumulator
        ),
        compiler_params=pltpu.CompilerParams(
            dimension_semantics=("parallel", "arbitrary", "arbitrary"),
            vmem_limit_bytes=_vmem_limit(block_bytes)),
        cost_estimate=pl.CostEstimate(flops=flops, transcendentals=0,
                                      bytes_accessed=bytes_accessed),
    )(x_in, w, scale, shift)
    return y, jnp.sum(st, axis=0)


# --------------------------------------------------------------------------------------
# kernel 2: fused epilogue — bn4 affine + (optional downsample-BN affine) + add + ReLU
# --------------------------------------------------------------------------------------
def bn_residual_relu(y, scale, shift, res, res_scale=None, res_shift=None,
                     row_tile_target=2048):
    n, c = y.shape
    tr = _row_tile(n, row_tile_target)
    tile = pl.BlockSpec((tr, c), lambda i: (i, 0))
    vec = pl.BlockSpec((1, c), lambda i: (0, 0))

    if res_scale is None:
        # identity residual branch (Cin == Cout): no downsample conv, no extra affine
        def kernel(y_ref, s_ref, b_ref, r_ref, o_ref):
            main = y_ref[...].astype(jnp.float32) * s_ref[...] + b_ref[...]
            o_ref[...] = jnp.maximum(main + r_ref[...].astype(jnp.float32), 0.0)
        operands = (y, scale, shift, res)
        in_specs = [tile, vec, vec, tile]
    else:
        def kernel(y_ref, s_ref, b_ref, r_ref, rs_ref, rb_ref, o_ref):
            main = y_ref[...].astype(jnp.float32) * s_ref[...] + b_ref[...]
            resv = r_ref[...].astype(jnp.float32) * rs_ref[...] + rb_ref[...]
            o_ref[...] = jnp.maximum(main + resv, 0.0)
        operands = (y, scale, shift, res, res_scale, res_shift)
        in_specs = [tile, vec, vec, tile, vec, vec]

    isz = jnp.dtype(y.dtype).itemsize
    block_bytes = tr * c * (2 * isz + 4) + 4 * c * 4
    return pl.pallas_call(
        kernel,
        out_shape=jax.ShapeDtypeStruct((n, c), jnp.float32),
        grid=(n // tr,),
        in_specs=in_specs,
        out_specs=pl.BlockSpec((tr, c), lambda i: (i, 0)),
        compiler_params=pltpu.CompilerParams(
            dimension_semantics=("parallel",),
            vmem_limit_bytes=_vmem_limit(block_bytes)),
    )(*operands)


# --------------------------------------------------------------------------------------
# full block forward
# --------------------------------------------------------------------------------------
def dainet_res_block(x_ncl, params, pool_size=1, compute_dtype=jnp.bfloat16,
                     l_tile_target=512):
    """Forward pass of DaiNetResBlock.  x_ncl: (B, Cin, L) float32 (PyTorch NCL layout)."""
    if pool_size != 1:
        # TODO(synk): F.max_pool1d branch (pool_size != 1) not implemented; default path only.
        raise NotImplementedError("pool_size != 1 not implemented")

    w1, w2, w3, w4, wd, gamma, beta = params
    bsz, cin, l = x_ncl.shape
    cout, _, k = w1.shape
    assert k % 2 == 1, "kernel_size must be odd (even K changes output length in PyTorch)"
    pad = k // 2

    cp_in = _round_up(cin, 128)                        # lane-dense channel padding
    cp_out = _round_up(cout, 128)
    tl = min(_round_up(l_tile_target, 8), _round_up(l, 8))
    lpad = _round_up(l, tl)                            # no whole-array fallback: pad + mask
    halo = _round_up(2 * pad, 8) if pad > 0 else 0
    n_valid = bsz * l
    s_split = 2 if (bsz % 2 == 0 and bsz >= 2) else 1  # v7x megacore split (no-op on 1-TC)

    store_dtype = compute_dtype
    dot_dtype = compute_dtype

    # layout prep (channels-last, channel-padded)
    x_blc = jnp.transpose(x_ncl, (0, 2, 1)).astype(store_dtype)       # (B, L, Cin)
    x_cpad = jnp.pad(x_blc, ((0, 0), (0, 0), (0, cp_in - cin)))        # (B, L, Cp_in)

    gam = jnp.pad(gamma.astype(jnp.float32), ((0, 0), (0, cp_out - cout)))
    bet = jnp.pad(beta.astype(jnp.float32), ((0, 0), (0, cp_out - cout)))
    ones_in = jnp.ones((1, cp_in), jnp.float32)
    zeros_in = jnp.zeros((1, cp_in), jnp.float32)

    def packw(w, cpi):
        co, ci, kk = w.shape                              # PyTorch (Cout, Cin, K)
        wt = jnp.transpose(w, (2, 1, 0)).astype(jnp.float32)  # (K, Cin, Cout)
        wt = jnp.pad(wt, ((0, 0), (0, cpi - ci), (0, cp_out - co)))
        return wt.astype(dot_dtype)

    def pad_rows(a, lead, total):
        _, lsrc, _ = a.shape
        return jnp.pad(a, ((0, 0), (lead, total - lead - lsrc), (0, 0)))

    cvt = dict(tl=tl, lpad=lpad, l_valid=l, halo=halo, pad=pad,
               s_split=s_split, store_dtype=store_dtype, dot_dtype=dot_dtype)

    # conv1: identity prologue (raw input already zero-padded)
    x_in = pad_rows(x_cpad, pad, lpad + halo)
    y, st = conv_bn_stats(x_in, packw(w1, cp_in), ones_in, zeros_in,
                          do_affine=False, **cvt)
    scale, shift = _affine_from_stats(st, gam[0], bet[0], n_valid)

    # conv2, conv3: previous BN + ReLU fused as prologue
    for idx, w in ((1, w2), (2, w3)):
        x_in = pad_rows(y, pad, lpad + halo)
        y, st = conv_bn_stats(x_in, packw(w, cp_out), scale, shift,
                              do_affine=True, **cvt)
        scale, shift = _affine_from_stats(st, gam[idx], bet[idx], n_valid)

    # conv4: bn3+ReLU prologue; its own BN affine is fused into the residual epilogue
    x_in = pad_rows(y, pad, lpad + halo)
    y4, st4 = conv_bn_stats(x_in, packw(w4, cp_out), scale, shift,
                            do_affine=True, **cvt)
    s4, sh4 = _affine_from_stats(st4, gam[3], bet[3], n_valid)

    if cin == cout:
        res2d = pad_rows(x_cpad, 0, lpad).reshape(bsz * lpad, cp_out)
        out2d = bn_residual_relu(y4.reshape(bsz * lpad, cp_out), s4, sh4, res2d)
    else:
        x_ds = pad_rows(x_cpad, 0, lpad)
        cvt_ds = dict(cvt)
        cvt_ds.update(halo=0, pad=0)
        y_ds, st_ds = conv_bn_stats(x_ds, packw(wd, cp_in), ones_in, zeros_in,
                                    do_affine=False, **cvt_ds)
        s_ds, sh_ds = _affine_from_stats(st_ds, gam[4], bet[4], n_valid)
        out2d = bn_residual_relu(y4.reshape(bsz * lpad, cp_out), s4, sh4,
                                 y_ds.reshape(bsz * lpad, cp_out), s_ds, sh_ds)

    out = out2d.reshape(bsz, lpad, cp_out)[:, :l, :cout]
    return jnp.transpose(out, (0, 2, 1))


# ------------------------- pure-JAX reference (for checking) -------------------------
def _conv_ref(x, w, pad):  # x (B, Ci, L), w (Co, Ci, K)
    xp = jnp.pad(x, ((0, 0), (0, 0), (pad, pad)))
    kk, ll = w.shape[2], x.shape[2]
    out = jnp.zeros((x.shape[0], w.shape[0], ll), jnp.float32)
    for i in range(kk):
        out = out + jnp.einsum("bcl,oc->bol", xp[:, :, i:i + ll], w[:, :, i])
    return out


def _bn_ref(y, g, bb):  # training-mode BatchNorm1d (biased batch stats)
    mean = y.mean(axis=(0, 2), keepdims=True)
    var = ((y - mean) ** 2).mean(axis=(0, 2), keepdims=True)
    return g.reshape(1, -1, 1) * (y - mean) / jnp.sqrt(var + BN_EPS) + bb.reshape(1, -1, 1)


def ref_forward(x, params):
    w1, w2, w3, w4, wd, gamma, beta = params
    relu = lambda t: jnp.maximum(t, 0.0)
    p = w1.shape[2] // 2
    h = relu(_bn_ref(_conv_ref(x, w1, p), gamma[0], beta[0]))
    h = relu(_bn_ref(_conv_ref(h, w2, p), gamma[1], beta[1]))
    h = relu(_bn_ref(_conv_ref(h, w3, p), gamma[2], beta[2]))
    h = _bn_ref(_conv_ref(h, w4, p), gamma[3], beta[3])
    if x.shape == h.shape:
        return relu(h + x)
    return relu(h + _bn_ref(_conv_ref(x, wd, 0), gamma[4], beta[4]))


def make_params(key, cin, cout, k, faithful_bn_init=True):
    ks = jax.random.split(key, 5)
    w1 = 0.1 * jax.random.normal(ks[0], (cout, cin, k), jnp.float32)
    w2 = 0.1 * jax.random.normal(ks[1], (cout, cout, k), jnp.float32)
    w3 = 0.1 * jax.random.normal(ks[2], (cout, cout, k), jnp.float32)
    w4 = 0.1 * jax.random.normal(ks[3], (cout, cout, k), jnp.float32)
    wd = 0.1 * jax.random.normal(ks[4], (cout, cin, 1), jnp.float32)
    if faithful_bn_init:
        # init_bn: weight=1, bias=0; then bn4.weight = 0 (zero-init residual branch)
        gamma = jnp.ones((5, cout), jnp.float32).at[3].set(0.0)
        beta = jnp.zeros((5, cout), jnp.float32)
    else:
        gamma = 0.5 + 0.05 * jnp.arange(5 * cout, dtype=jnp.float32).reshape(5, cout)
        beta = 0.01 * jnp.arange(5 * cout, dtype=jnp.float32).reshape(5, cout)
    return (w1, w2, w3, w4, wd, gamma, beta)


if __name__ == "__main__":
    key = jax.random.PRNGKey(0)
    kx1, kp1, kx2, kp2 = jax.random.split(key, 4)

    fwd_f32 = jax.jit(lambda x, p: dainet_res_block(x, p, compute_dtype=jnp.float32,
                                                    l_tile_target=128))
    fwd_bf16 = jax.jit(lambda x, p: dainet_res_block(x, p, compute_dtype=jnp.bfloat16,
                                                     l_tile_target=128))
    fwd_f32_d = jax.jit(lambda x, p: dainet_res_block(x, p, compute_dtype=jnp.float32))

    # Case 1: Cin != Cout -> downsample residual branch (module-faithful BN init).
    # L=256 with 128-row tiles -> 2 L-tiles per batch, megacore split of 4 batches:
    # exercises gridded stats accumulation + per-core stats partials.
    B, Cin, Cout, L, K = 4, 4, 8, 256, 5
    x1 = jax.random.normal(kx1, (B, Cin, L), jnp.float32)
    p1 = make_params(kp1, Cin, Cout, K, faithful_bn_init=True)
    out1 = jax.block_until_ready(fwd_f32(x1, p1))
    ref1 = ref_forward(x1, p1)
    np.testing.assert_allclose(np.asarray(out1), np.asarray(ref1), rtol=2e-3, atol=2e-3)

    # Case 2: Cin == Cout -> identity residual; L=60 pads to 64 -> exercises the
    # padded-row masking for both the conv prologue and the BN statistics.
    B2, C2, L2, K2 = 2, 8, 60, 3
    x2 = jax.random.normal(kx2, (B2, C2, L2), jnp.float32)
    p2 = make_params(kp2, C2, C2, K2, faithful_bn_init=False)
    out2 = jax.block_until_ready(fwd_f32_d(x2, p2))
    ref2 = ref_forward(x2, p2)
    np.testing.assert_allclose(np.asarray(out2), np.asarray(ref2), rtol=2e-3, atol=2e-3)

    # bf16 default path (MXU fast path on v5e/v6e/v7x): loose sanity check vs f32 run.
    out1_bf16 = jax.block_until_ready(fwd_bf16(x1, p1))
    np.testing.assert_allclose(np.asarray(out1_bf16), np.asarray(out1), rtol=0.25, atol=0.25)

    print("KERNEL_OK")
</pallas_src>

<mosaic_0001>
module attributes {stable_mosaic.version = 11 : i64} {
  func.func @kernel(%arg0: i32, %arg1: i32, %arg2: i32, %arg3: memref<1x264x128xf32, #tpu.memory_space<vmem>>, %arg4: memref<5x128x128xf32, #tpu.memory_space<vmem>>, %arg5: memref<1x128xf32, #tpu.memory_space<vmem>>, %arg6: memref<1x128xf32, #tpu.memory_space<vmem>>, %arg7: memref<1x128x128xf32, #tpu.memory_space<vmem>>, %arg8: memref<1x2x128xf32, #tpu.memory_space<vmem>>) attributes {dimension_semantics = [#tpu.dimension_semantics<parallel>, #tpu.dimension_semantics<arbitrary>, #tpu.dimension_semantics<arbitrary>], iteration_bounds = array<i64: 2, 2, 2>, scalar_prefetch = 0 : i64, scratch_operands = 0 : i64, tpu.core_type = #tpu.core_type<tc>, window_params = [{transform_indices = @transform_0, window_bounds = array<i64: 1, 264, 128>}, {pipeline_mode = #tpu.pipeline_mode<synchronous>, transform_indices = @transform_1, window_bounds = array<i64: 5, 128, 128>}, {pipeline_mode = #tpu.pipeline_mode<synchronous>, transform_indices = @transform_2, window_bounds = array<i64: 1, 128>}, {pipeline_mode = #tpu.pipeline_mode<synchronous>, transform_indices = @transform_3, window_bounds = array<i64: 1, 128>}, {transform_indices = @transform_4, window_bounds = array<i64: 1, 128, 128>}, {transform_indices = @transform_5, window_bounds = array<i64: 1, 2, 128>}]} {
    %c128_i32 = arith.constant 128 : i32
    %0 = arith.muli %arg2, %c128_i32 : i32
    %1 = tpu.assume_multiple %0, 8 : i32
    %c0 = arith.constant 0 : index
    %2 = arith.index_cast %1 : i32 to index
    %c0_0 = arith.constant 0 : index
    %3 = vector.load %arg3[%c0, %2, %c0_0] : memref<1x264x128xf32, #tpu.memory_space<vmem>>, vector<1x136x128xf32>
    %4 = vector.shape_cast %3 : vector<1x136x128xf32> to vector<136x128xf32>
    %5 = vector.extract_strided_slice %4 {offsets = [0, 0], sizes = [128, 128], strides = [1, 1]} : vector<136x128xf32> to vector<128x128xf32>
    %c0_1 = arith.constant 0 : index
    %c0_2 = arith.constant 0 : index
    %c0_3 = arith.constant 0 : index
    %6 = vector.load %arg4[%c0_1, %c0_2, %c0_3] : memref<5x128x128xf32, #tpu.memory_space<vmem>>, vector<1x128x128xf32>
    %7 = vector.shape_cast %6 : vector<1x128x128xf32> to vector<128x128xf32>
    %cst = arith.constant dense<0.000000e+00> : vector<128x128xf32>
    %8 = tpu.matmul %5, %7, %cst {dimension_numbers = #tpu.dot_dimension_numbers<[1], [0], [0], [1], [0, 0, 1, 1], [], []>} : vector<128x128xf32>, vector<128x128xf32>, vector<128x128xf32> -> vector<128x128xf32>
    %9 = vector.extract_strided_slice %4 {offsets = [1, 0], sizes = [128, 128], strides = [1, 1]} : vector<136x128xf32> to vector<128x128xf32>
    %c1 = arith.constant 1 : index
    %c0_4 = arith.constant 0 : index
    %c0_5 = arith.constant 0 : index
    %10 = vector.load %arg4[%c1, %c0_4, %c0_5] : memref<5x128x128xf32, #tpu.memory_space<vmem>>, vector<1x128x128xf32>
    %11 = vector.shape_cast %10 : vector<1x128x128xf32> to vector<128x128xf32>
    %cst_6 = arith.constant dense<0.000000e+00> : vector<128x128xf32>
    %12 = tpu.matmul %9, %11, %cst_6 {dimension_numbers = #tpu.dot_dimension_numbers<[1], [0], [0], [1], [0, 0, 1, 1], [], []>} : vector<128x128xf32>, vector<128x128xf32>, vector<128x128xf32> -> vector<128x128xf32>
    %13 = arith.addf %8, %12 : vector<128x128xf32>
    %14 = vector.extract_strided_slice %4 {offsets = [2, 0], sizes = [128, 128], strides = [1, 1]} : vector<136x128xf32> to vector<128x128xf32>
    %c2 = arith.constant 2 : index
    %c0_7 = arith.constant 0 : index
    %c0_8 = arith.constant 0 : index
    %15 = vector.load %arg4[%c2, %c0_7, %c0_8] : memref<5x128x128xf32, #tpu.memory_space<vmem>>, vector<1x128x128xf32>
    %16 = vector.shape_cast %15 : vector<1x128x128xf32> to vector<128x128xf32>
    %cst_9 = arith.constant dense<0.000000e+00> : vector<128x128xf32>
    %17 = tpu.matmul %14, %16, %cst_9 {dimension_numbers = #tpu.dot_dimension_numbers<[1], [0], [0], [1], [0, 0, 1, 1], [], []>} : vector<128x128xf32>, vector<128x128xf32>, vector<128x128xf32> -> vector<128x128xf32>
    %18 = arith.addf %13, %17 : vector<128x128xf32>
    %19 = vector.extract_strided_slice %4 {offsets = [3, 0], sizes = [128, 128], strides = [1, 1]} : vector<136x128xf32> to vector<128x128xf32>
    %c3 = arith.constant 3 : index
    %c0_10 = arith.constant 0 : index
    %c0_11 = arith.constant 0 : index
    %20 = vector.load %arg4[%c3, %c0_10, %c0_11] : memref<5x128x128xf32, #tpu.memory_space<vmem>>, vector<1x128x128xf32>
    %21 = vector.shape_cast %20 : vector<1x128x128xf32> to vector<128x128xf32>
    %cst_12 = arith.constant dense<0.000000e+00> : vector<128x128xf32>
    %22 = tpu.matmul %19, %21, %cst_12 {dimension_numbers = #tpu.dot_dimension_numbers<[1], [0], [0], [1], [0, 0, 1, 1], [], []>} : vector<128x128xf32>, vector<128x128xf32>, vector<128x128xf32> -> vector<128x128xf32>
    %23 = arith.addf %18, %22 : vector<128x128xf32>
    %24 = vector.extract_strided_slice %4 {offsets = [4, 0], sizes = [128, 128], strides = [1, 1]} : vector<136x128xf32> to vector<128x128xf32>
    %c4 = arith.constant 4 : index
    %c0_13 = arith.constant 0 : index
    %c0_14 = arith.constant 0 : index
    %25 = vector.load %arg4[%c4, %c0_13, %c0_14] : memref<5x128x128xf32, #tpu.memory_space<vmem>>, vector<1x128x128xf32>
    %26 = vector.shape_cast %25 : vector<1x128x128xf32> to vector<128x128xf32>
    %cst_15 = arith.constant dense<0.000000e+00> : vector<128x128xf32>
    %27 = tpu.matmul %24, %26, %cst_15 {dimension_numbers = #tpu.dot_dimension_numbers<[1], [0], [0], [1], [0, 0, 1, 1], [], []>} : vector<128x128xf32>, vector<128x128xf32>, vector<128x128xf32> -> vector<128x128xf32>
    %28 = arith.addf %23, %27 : vector<128x128xf32>
    %cst_16 = arith.constant dense<0.000000e+00> : vector<128xf32>
    %29 = vector.multi_reduction <add>, %28, %cst_16 [0] : vector<128x128xf32> to vector<128xf32>
    %30 = vector.shape_cast %29 : vector<128xf32> to vector<1x128xf32>
    %31 = arith.mulf %28, %28 : vector<128x128xf32>
    %cst_17 = arith.constant dense<0.000000e+00> : vector<128xf32>
    %32 = vector.multi_reduction <add>, %31, %cst_17 [0] : vector<128x128xf32> to vector<128xf32>
    %33 = vector.shape_cast %32 : vector<128xf32> to vector<1x128xf32>
    %34 = tpu.concatenate %30, %33 in 0 : vector<1x128xf32>, vector<1x128xf32> -> vector<2x128xf32>
    %c0_i32 = arith.constant 0 : i32
    %35 = arith.cmpi eq, %arg1, %c0_i32 : i32
    %c0_i32_18 = arith.constant 0 : i32
    %36 = arith.cmpi eq, %arg2, %c0_i32_18 : i32
    %37 = arith.andi %35, %36 : i1
    %38 = arith.extui %37 : i1 to i32
    %c0_i32_19 = arith.constant 0 : i32
    %39 = arith.cmpi ne, %38, %c0_i32_19 : i32
    scf.if %39 {
      %cst_29 = arith.constant 0.000000e+00 : f32
      %49 = vector.broadcast %cst_29 : f32 to vector<2x128xf32>
      %c0_30 = arith.constant 0 : index
      %c0_31 = arith.constant 0 : index
      %c0_32 = arith.constant 0 : index
      %50 = vector.load %arg8[%c0_30, %c0_31, %c0_32] : memref<1x2x128xf32, #tpu.memory_space<vmem>>, vector<1x2x128xf32>
      %51 = vector.shape_cast %50 : vector<1x2x128xf32> to vector<2x128xf32>
      %52 = vector.shape_cast %49 : vector<2x128xf32> to vector<1x2x128xf32>
      tpu.vector_store %arg8[%c0_30, %c0_31, %c0_32], %52 {strides = array<i32>} : memref<1x2x128xf32, #tpu.memory_space<vmem>>, vector<1x2x128xf32>,
    } else {
    }
    %c0_20 = arith.constant 0 : index
    %c0_21 = arith.constant 0 : index
    %c0_22 = arith.constant 0 : index
    %40 = vector.load %arg8[%c0_20, %c0_21, %c0_22] : memref<1x2x128xf32, #tpu.memory_space<vmem>>, vector<1x2x128xf32>
    %41 = vector.shape_cast %40 : vector<1x2x128xf32> to vector<2x128xf32>
    %42 = arith.addf %41, %34 : vector<2x128xf32>
    %c0_23 = arith.constant 0 : index
    %c0_24 = arith.constant 0 : index
    %c0_25 = arith.constant 0 : index
    %43 = vector.load %arg8[%c0_23, %c0_24, %c0_25] : memref<1x2x128xf32, #tpu.memory_space<vmem>>, vector<1x2x128xf32>
    %44 = vector.shape_cast %43 : vector<1x2x128xf32> to vector<2x128xf32>
    %45 = vector.shape_cast %42 : vector<2x128xf32> to vector<1x2x128xf32>
    tpu.vector_store %arg8[%c0_23, %c0_24, %c0_25], %45 {strides = array<i32>} : memref<1x2x128xf32, #tpu.memory_space<vmem>>, vector<1x2x128xf32>,
    %c0_26 = arith.constant 0 : index
    %c0_27 = arith.constant 0 : index
    %c0_28 = arith.constant 0 : index
    %46 = vector.load %arg7[%c0_26, %c0_27, %c0_28] : memref<1x128x128xf32, #tpu.memory_space<vmem>>, vector<1x128x128xf32>
    %47 = vector.shape_cast %46 : vector<1x128x128xf32> to vector<128x128xf32>
    %48 = vector.shape_cast %28 : vector<128x128xf32> to vector<1x128x128xf32>
    tpu.vector_store %arg7[%c0_26, %c0_27, %c0_28], %48 {strides = array<i32>} : memref<1x128x128xf32, #tpu.memory_space<vmem>>, vector<1x128x128xf32>,
    return
  }
  func.func @transform_0(%arg0: i32, %arg1: i32, %arg2: i32) -> (i32, i32, i32) {
    %c2_i32 = arith.constant 2 : i32
    %0 = arith.muli %arg0, %c2_i32 : i32
    %1 = arith.addi %0, %arg1 : i32
    %c0_i32 = arith.constant 0 : i32
    %c0_i32_0 = arith.constant 0 : i32
    %c0_i32_1 = arith.constant 0 : i32
    return %1, %c0_i32, %c0_i32_0 : i32, i32, i32
  }
  func.func @transform_1(%arg0: i32, %arg1: i32, %arg2: i32) -> (i32, i32, i32) {
    %c0_i32 = arith.constant 0 : i32
    %c0_i32_0 = arith.constant 0 : i32
    %c0_i32_1 = arith.constant 0 : i32
    %c0_i32_2 = arith.constant 0 : i32
    return %c0_i32, %c0_i32_0, %c0_i32_1 : i32, i32, i32
  }
  func.func @transform_2(%arg0: i32, %arg1: i32, %arg2: i32) -> (i32, i32) {
    %c0_i32 = arith.constant 0 : i32
    %c0_i32_0 = arith.constant 0 : i32
    %c0_i32_1 = arith.constant 0 : i32
    return %c0_i32, %c0_i32_0 : i32, i32
  }
  func.func @transform_3(%arg0: i32, %arg1: i32, %arg2: i32) -> (i32, i32) {
    %c0_i32 = arith.constant 0 : i32
    %c0_i32_0 = arith.constant 0 : i32
    %c0_i32_1 = arith.constant 0 : i32
    return %c0_i32, %c0_i32_0 : i32, i32
  }
  func.func @transform_4(%arg0: i32, %arg1: i32, %arg2: i32) -> (i32, i32, i32) {
    %c2_i32 = arith.constant 2 : i32
    %0 = arith.muli %arg0, %c2_i32 : i32
    %1 = arith.addi %0, %arg1 : i32
    %c0_i32 = arith.constant 0 : i32
    %c0_i32_0 = arith.constant 0 : i32
    return %1, %arg2, %c0_i32 : i32, i32, i32
  }
  func.func @transform_5(%arg0: i32, %arg1: i32, %arg2: i32) -> (i32, i32, i32) {
    %c0_i32 = arith.constant 0 : i32
    %c0_i32_0 = arith.constant 0 : i32
    %c0_i32_1 = arith.constant 0 : i32
    return %arg0, %c0_i32, %c0_i32_0 : i32, i32, i32
  }
}

module attributes {stable_mosaic.version = 11 : i64} {
  func.func @kernel(%arg0: i32, %arg1: i32, %arg2: i32, %arg3: memref<1x264x128xf32, #tpu.memory_space<vmem>>, %arg4: memref<5x128x128xf32, #tpu.memory_space<vmem>>, %arg5: memref<1x128xf32, #tpu.memory_space<vmem>>, %arg6: memref<1x128xf32, #tpu.memory_space<vmem>>, %arg7: memref<1x128x128xf32, #tpu.memory_space<vmem>>, %arg8: memref<1x2x128xf32, #tpu.memory_space<vmem>>) attributes {dimension_semantics = [#tpu.dimension_semantics<parallel>, #tpu.dimension_semantics<arbitrary>, #tpu.dimension_semantics<arbitrary>], iteration_bounds = array<i64: 2, 2, 2>, scalar_prefetch = 0 : i64, scratch_operands = 0 : i64, tpu.core_type = #tpu.core_type<tc>, window_params = [{transform_indices = @transform_0, window_bounds = array<i64: 1, 264, 128>}, {pipeline_mode = #tpu.pipeline_mode<synchronous>, transform_indices = @transform_1, window_bounds = array<i64: 5, 128, 128>}, {pipeline_mode = #tpu.pipeline_mode<synchronous>, transform_indices = @transform_2, window_bounds = array<i64: 1, 128>}, {pipeline_mode = #tpu.pipeline_mode<synchronous>, transform_indices = @transform_3, window_bounds = array<i64: 1, 128>}, {transform_indices = @transform_4, window_bounds = array<i64: 1, 128, 128>}, {transform_indices = @transform_5, window_bounds = array<i64: 1, 2, 128>}]} {
    %c128_i32 = arith.constant 128 : i32
    %0 = arith.muli %arg2, %c128_i32 : i32
    %1 = tpu.assume_multiple %0, 8 : i32
    %c0 = arith.constant 0 : index
    %2 = arith.index_cast %1 : i32 to index
    %c0_0 = arith.constant 0 : index
    %3 = vector.load %arg3[%c0, %2, %c0_0] : memref<1x264x128xf32, #tpu.memory_space<vmem>>, vector<1x136x128xf32>
    %4 = vector.shape_cast %3 : vector<1x136x128xf32> to vector<136x128xf32>
    %c0_1 = arith.constant 0 : index
    %c0_2 = arith.constant 0 : index
    %5 = vector.load %arg5[%c0_1, %c0_2] : memref<1x128xf32, #tpu.memory_space<vmem>>, vector<1x128xf32>
    %6 = vector.broadcast %5 : vector<1x128xf32> to vector<136x128xf32>
    %7 = arith.mulf %4, %6 : vector<136x128xf32>
    %c0_3 = arith.constant 0 : index
    %c0_4 = arith.constant 0 : index
    %8 = vector.load %arg6[%c0_3, %c0_4] : memref<1x128xf32, #tpu.memory_space<vmem>>, vector<1x128xf32>
    %9 = vector.broadcast %8 : vector<1x128xf32> to vector<136x128xf32>
    %10 = arith.addf %7, %9 : vector<136x128xf32>
    %cst = arith.constant 0.000000e+00 : f32
    %11 = vector.broadcast %cst : f32 to vector<136x128xf32>
    %12 = arith.maximumf %10, %11 : vector<136x128xf32>
    %13 = tpu.iota {dimensions = array<i32: 0>} : vector<136x1xi32>
    %14 = vector.broadcast %1 : i32 to vector<136x1xi32>
    %15 = arith.addi %14, %13 : vector<136x1xi32>
    %c2_i32 = arith.constant 2 : i32
    %16 = vector.broadcast %c2_i32 : i32 to vector<136x1xi32>
    %17 = arith.cmpi sge, %15, %16 : vector<136x1xi32>
    %c258_i32 = arith.constant 258 : i32
    %18 = vector.broadcast %c258_i32 : i32 to vector<136x1xi32>
    %19 = arith.cmpi slt, %15, %18 : vector<136x1xi32>
    %20 = arith.andi %17, %19 : vector<136x1xi1>
    %cst_5 = arith.constant 0.000000e+00 : f32
    %21 = vector.shape_cast %20 : vector<136x1xi1> to vector<136x1xi1>
    %22 = vector.broadcast %21 : vector<136x1xi1> to vector<136x128xi1>
    %23 = vector.broadcast %cst_5 : f32 to vector<136x128xf32>
    %24 = arith.select %22, %12, %23 : vector<136x128xi1>, vector<136x128xf32>
    %25 = vector.extract_strided_slice %24 {offsets = [0, 0], sizes = [128, 128], strides = [1, 1]} : vector<136x128xf32> to vector<128x128xf32>
    %c0_6 = arith.constant 0 : index
    %c0_7 = arith.constant 0 : index
    %c0_8 = arith.constant 0 : index
    %26 = vector.load %arg4[%c0_6, %c0_7, %c0_8] : memref<5x128x128xf32, #tpu.memory_space<vmem>>, vector<1x128x128xf32>
    %27 = vector.shape_cast %26 : vector<1x128x128xf32> to vector<128x128xf32>
    %cst_9 = arith.constant dense<0.000000e+00> : vector<128x128xf32>
    %28 = tpu.matmul %25, %27, %cst_9 {dimension_numbers = #tpu.dot_dimension_numbers<[1], [0], [0], [1], [0, 0, 1, 1], [], []>} : vector<128x128xf32>, vector<128x128xf32>, vector<128x128xf32> -> vector<128x128xf32>
    %29 = vector.extract_strided_slice %24 {offsets = [1, 0], sizes = [128, 128], strides = [1, 1]} : vector<136x128xf32> to vector<128x128xf32>
    %c1 = arith.constant 1 : index
    %c0_10 = arith.constant 0 : index
    %c0_11 = arith.constant 0 : index
    %30 = vector.load %arg4[%c1, %c0_10, %c0_11] : memref<5x128x128xf32, #tpu.memory_space<vmem>>, vector<1x128x128xf32>
    %31 = vector.shape_cast %30 : vector<1x128x128xf32> to vector<128x128xf32>
    %cst_12 = arith.constant dense<0.000000e+00> : vector<128x128xf32>
    %32 = tpu.matmul %29, %31, %cst_12 {dimension_numbers = #tpu.dot_dimension_numbers<[1], [0], [0], [1], [0, 0, 1, 1], [], []>} : vector<128x128xf32>, vector<128x128xf32>, vector<128x128xf32> -> vector<128x128xf32>
    %33 = arith.addf %28, %32 : vector<128x128xf32>
    %34 = vector.extract_strided_slice %24 {offsets = [2, 0], sizes = [128, 128], strides = [1, 1]} : vector<136x128xf32> to vector<128x128xf32>
    %c2 = arith.constant 2 : index
    %c0_13 = arith.constant 0 : index
    %c0_14 = arith.constant 0 : index
    %35 = vector.load %arg4[%c2, %c0_13, %c0_14] : memref<5x128x128xf32, #tpu.memory_space<vmem>>, vector<1x128x128xf32>
    %36 = vector.shape_cast %35 : vector<1x128x128xf32> to vector<128x128xf32>
    %cst_15 = arith.constant dense<0.000000e+00> : vector<128x128xf32>
    %37 = tpu.matmul %34, %36, %cst_15 {dimension_numbers = #tpu.dot_dimension_numbers<[1], [0], [0], [1], [0, 0, 1, 1], [], []>} : vector<128x128xf32>, vector<128x128xf32>, vector<128x128xf32> -> vector<128x128xf32>
    %38 = arith.addf %33, %37 : vector<128x128xf32>
    %39 = vector.extract_strided_slice %24 {offsets = [3, 0], sizes = [128, 128], strides = [1, 1]} : vector<136x128xf32> to vector<128x128xf32>
    %c3 = arith.constant 3 : index
    %c0_16 = arith.constant 0 : index
    %c0_17 = arith.constant 0 : index
    %40 = vector.load %arg4[%c3, %c0_16, %c0_17] : memref<5x128x128xf32, #tpu.memory_space<vmem>>, vector<1x128x128xf32>
    %41 = vector.shape_cast %40 : vector<1x128x128xf32> to vector<128x128xf32>
    %cst_18 = arith.constant dense<0.000000e+00> : vector<128x128xf32>
    %42 = tpu.matmul %39, %41, %cst_18 {dimension_numbers = #tpu.dot_dimension_numbers<[1], [0], [0], [1], [0, 0, 1, 1], [], []>} : vector<128x128xf32>, vector<128x128xf32>, vector<128x128xf32> -> vector<128x128xf32>
    %43 = arith.addf %38, %42 : vector<128x128xf32>
    %44 = vector.extract_strided_slice %24 {offsets = [4, 0], sizes = [128, 128], strides = [1, 1]} : vector<136x128xf32> to vector<128x128xf32>
    %c4 = arith.constant 4 : index
    %c0_19 = arith.constant 0 : index
    %c0_20 = arith.constant 0 : index
    %45 = vector.load %arg4[%c4, %c0_19, %c0_20] : memref<5x128x128xf32, #tpu.memory_space<vmem>>, vector<1x128x128xf32>
    %46 = vector.shape_cast %45 : vector<1x128x128xf32> to vector<128x128xf32>
    %cst_21 = arith.constant dense<0.000000e+00> : vector<128x128xf32>
    %47 = tpu.matmul %44, %46, %cst_21 {dimension_numbers = #tpu.dot_dimension_numbers<[1], [0], [0], [1], [0, 0, 1, 1], [], []>} : vector<128x128xf32>, vector<128x128xf32>, vector<128x128xf32> -> vector<128x128xf32>
    %48 = arith.addf %43, %47 : vector<128x128xf32>
    %cst_22 = arith.constant dense<0.000000e+00> : vector<128xf32>
    %49 = vector.multi_reduction <add>, %48, %cst_22 [0] : vector<128x128xf32> to vector<128xf32>
    %50 = vector.shape_cast %49 : vector<128xf32> to vector<1x128xf32>
    %51 = arith.mulf %48, %48 : vector<128x128xf32>
    %cst_23 = arith.constant dense<0.000000e+00> : vector<128xf32>
    %52 = vector.multi_reduction <add>, %51, %cst_23 [0] : vector<128x128xf32> to vector<128xf32>
    %53 = vector.shape_cast %52 : vector<128xf32> to vector<1x128xf32>
    %54 = tpu.concatenate %50, %53 in 0 : vector<1x128xf32>, vector<1x128xf32> -> vector<2x128xf32>
    %c0_i32 = arith.constant 0 : i32
    %55 = arith.cmpi eq, %arg1, %c0_i32 : i32
    %c0_i32_24 = arith.constant 0 : i32
    %56 = arith.cmpi eq, %arg2, %c0_i32_24 : i32
    %57 = arith.andi %55, %56 : i1
    %58 = arith.extui %57 : i1 to i32
    %c0_i32_25 = arith.constant 0 : i32
    %59 = arith.cmpi ne, %58, %c0_i32_25 : i32
    scf.if %59 {
      %cst_35 = arith.constant 0.000000e+00 : f32
      %69 = vector.broadcast %cst_35 : f32 to vector<2x128xf32>
      %c0_36 = arith.constant 0 : index
      %c0_37 = arith.constant 0 : index
      %c0_38 = arith.constant 0 : index
      %70 = vector.load %arg8[%c0_36, %c0_37, %c0_38] : memref<1x2x128xf32, #tpu.memory_space<vmem>>, vector<1x2x128xf32>
      %71 = vector.shape_cast %70 : vector<1x2x128xf32> to vector<2x128xf32>
      %72 = vector.shape_cast %69 : vector<2x128xf32> to vector<1x2x128xf32>
      tpu.vector_store %arg8[%c0_36, %c0_37, %c0_38], %72 {strides = array<i32>} : memref<1x2x128xf32, #tpu.memory_space<vmem>>, vector<1x2x128xf32>,
    } else {
    }
    %c0_26 = arith.constant 0 : index
    %c0_27 = arith.constant 0 : index
    %c0_28 = arith.constant 0 : index
    %60 = vector.load %arg8[%c0_26, %c0_27, %c0_28] : memref<1x2x128xf32, #tpu.memory_space<vmem>>, vector<1x2x128xf32>
    %61 = vector.shape_cast %60 : vector<1x2x128xf32> to vector<2x128xf32>
    %62 = arith.addf %61, %54 : vector<2x128xf32>
    %c0_29 = arith.constant 0 : index
    %c0_30 = arith.constant 0 : index
    %c0_31 = arith.constant 0 : index
    %63 = vector.load %arg8[%c0_29, %c0_30, %c0_31] : memref<1x2x128xf32, #tpu.memory_space<vmem>>, vector<1x2x128xf32>
    %64 = vector.shape_cast %63 : vector<1x2x128xf32> to vector<2x128xf32>
    %65 = vector.shape_cast %62 : vector<2x128xf32> to vector<1x2x128xf32>
    tpu.vector_store %arg8[%c0_29, %c0_30, %c0_31], %65 {strides = array<i32>} : memref<1x2x128xf32, #tpu.memory_space<vmem>>, vector<1x2x128xf32>,
    %c0_32 = arith.constant 0 : index
    %c0_33 = arith.constant 0 : index
    %c0_34 = arith.constant 0 : index
    %66 = vector.load %arg7[%c0_32, %c0_33, %c0_34] : memref<1x128x128xf32, #tpu.memory_space<vmem>>, vector<1x128x128xf32>
    %67 = vector.shape_cast %66 : vector<1x128x128xf32> to vector<128x128xf32>
    %68 = vector.shape_cast %48 : vector<128x128xf32> to vector<1x128x128xf32>
    tpu.vector_store %arg7[%c0_32, %c0_33, %c0_34], %68 {strides = array<i32>} : memref<1x128x128xf32, #tpu.memory_space<vmem>>, vector<1x128x128xf32>,
    return
  }
  func.func @transform_0(%arg0: i32, %arg1: i32, %arg2: i32) -> (i32, i32, i32) {
    %c2_i32 = arith.constant 2 : i32
    %0 = arith.muli %arg0, %c2_i32 : i32
    %1 = arith.addi %0, %arg1 : i32
    %c0_i32 = arith.constant 0 : i32
    %c0_i32_0 = arith.constant 0 : i32
    %c0_i32_1 = arith.constant 0 : i32
    return %1, %c0_i32, %c0_i32_0 : i32, i32, i32
  }
  func.func @transform_1(%arg0: i32, %arg1: i32, %arg2: i32) -> (i32, i32, i32) {
    %c0_i32 = arith.constant 0 : i32
    %c0_i32_0 = arith.constant 0 : i32
    %c0_i32_1 = arith.constant 0 : i32
    %c0_i32_2 = arith.constant 0 : i32
    return %c0_i32, %c0_i32_0, %c0_i32_1 : i32, i32, i32
  }
  func.func @transform_2(%arg0: i32, %arg1: i32, %arg2: i32) -> (i32, i32) {
    %c0_i32 = arith.constant 0 : i32
    %c0_i32_0 = arith.constant 0 : i32
    %c0_i32_1 = arith.constant 0 : i32
    return %c0_i32, %c0_i32_0 : i32, i32
  }
  func.func @transform_3(%arg0: i32, %arg1: i32, %arg2: i32) -> (i32, i32) {
    %c0_i32 = arith.constant 0 : i32
    %c0_i32_0 = arith.constant 0 : i32
    %c0_i32_1 = arith.constant 0 : i32
    return %c0_i32, %c0_i32_0 : i32, i32
  }
  func.func @transform_4(%arg0: i32, %arg1: i32, %arg2: i32) -> (i32, i32, i32) {
    %c2_i32 = arith.constant 2 : i32
    %0 = arith.muli %arg0, %c2_i32 : i32
    %1 = arith.addi %0, %arg1 : i32
    %c0_i32 = arith.constant 0 : i32
    %c0_i32_0 = arith.constant 0 : i32
    return %1, %arg2, %c0_i32 : i32, i32, i32
  }
  func.func @transform_5(%arg0: i32, %arg1: i32, %arg2: i32) -> (i32, i32, i32) {
    %c0_i32 = arith.constant 0 : i32
    %c0_i32_0 = arith.constant 0 : i32
    %c0_i32_1 = arith.constant 0 : i32
    return %arg0, %c0_i32, %c0_i32_0 : i32, i32, i32
  }
}

module attributes {stable_mosaic.version = 11 : i64} {
  func.func @kernel(%arg0: i32, %arg1: i32, %arg2: i32, %arg3: memref<1x256x128xf32, #tpu.memory_space<vmem>>, %arg4: memref<1x128x128xf32, #tpu.memory_space<vmem>>, %arg5: memref<1x128xf32, #tpu.memory_space<vmem>>, %arg6: memref<1x128xf32, #tpu.memory_space<vmem>>, %arg7: memref<1x128x128xf32, #tpu.memory_space<vmem>>, %arg8: memref<1x2x128xf32, #tpu.memory_space<vmem>>) attributes {dimension_semantics = [#tpu.dimension_semantics<parallel>, #tpu.dimension_semantics<arbitrary>, #tpu.dimension_semantics<arbitrary>], iteration_bounds = array<i64: 2, 2, 2>, scalar_prefetch = 0 : i64, scratch_operands = 0 : i64, tpu.core_type = #tpu.core_type<tc>, window_params = [{transform_indices = @transform_0, window_bounds = array<i64: 1, 256, 128>}, {pipeline_mode = #tpu.pipeline_mode<synchronous>, transform_indices = @transform_1, window_bounds = array<i64: 1, 128, 128>}, {pipeline_mode = #tpu.pipeline_mode<synchronous>, transform_indices = @transform_2, window_bounds = array<i64: 1, 128>}, {pipeline_mode = #tpu.pipeline_mode<synchronous>, transform_indices = @transform_3, window_bounds = array<i64: 1, 128>}, {transform_indices = @transform_4, window_bounds = array<i64: 1, 128, 128>}, {transform_indices = @transform_5, window_bounds = array<i64: 1, 2, 128>}]} {
    %c128_i32 = arith.constant 128 : i32
    %0 = arith.muli %arg2, %c128_i32 : i32
    %1 = tpu.assume_multiple %0, 8 : i32
    %c0 = arith.constant 0 : index
    %2 = arith.index_cast %1 : i32 to index
    %c0_0 = arith.constant 0 : index
    %3 = vector.load %arg3[%c0, %2, %c0_0] : memref<1x256x128xf32, #tpu.memory_space<vmem>>, vector<1x128x128xf32>
    %4 = vector.shape_cast %3 : vector<1x128x128xf32> to vector<128x128xf32>
    %c0_1 = arith.constant 0 : index
    %c0_2 = arith.constant 0 : index
    %c0_3 = arith.constant 0 : index
    %5 = vector.load %arg4[%c0_1, %c0_2, %c0_3] : memref<1x128x128xf32, #tpu.memory_space<vmem>>, vector<1x128x128xf32>
    %6 = vector.shape_cast %5 : vector<1x128x128xf32> to vector<128x128xf32>
    %cst = arith.constant dense<0.000000e+00> : vector<128x128xf32>
    %7 = tpu.matmul %4, %6, %cst {dimension_numbers = #tpu.dot_dimension_numbers<[1], [0], [0], [1], [0, 0, 1, 1], [], []>} : vector<128x128xf32>, vector<128x128xf32>, vector<128x128xf32> -> vector<128x128xf32>
    %cst_4 = arith.constant dense<0.000000e+00> : vector<128xf32>
    %8 = vector.multi_reduction <add>, %7, %cst_4 [0] : vector<128x128xf32> to vector<128xf32>
    %9 = vector.shape_cast %8 : vector<128xf32> to vector<1x128xf32>
    %10 = arith.mulf %7, %7 : vector<128x128xf32>
    %cst_5 = arith.constant dense<0.000000e+00> : vector<128xf32>
    %11 = vector.multi_reduction <add>, %10, %cst_5 [0] : vector<128x128xf32> to vector<128xf32>
    %12 = vector.shape_cast %11 : vector<128xf32> to vector<1x128xf32>
    %13 = tpu.concatenate %9, %12 in 0 : vector<1x128xf32>, vector<1x128xf32> -> vector<2x128xf32>
    %c0_i32 = arith.constant 0 : i32
    %14 = arith.cmpi eq, %arg1, %c0_i32 : i32
    %c0_i32_6 = arith.constant 0 : i32
    %15 = arith.cmpi eq, %arg2, %c0_i32_6 : i32
    %16 = arith.andi %14, %15 : i1
    %17 = arith.extui %16 : i1 to i32
    %c0_i32_7 = arith.constant 0 : i32
    %18 = arith.cmpi ne, %17, %c0_i32_7 : i32
    scf.if %18 {
      %cst_17 = arith.constant 0.000000e+00 : f32
      %28 = vector.broadcast %cst_17 : f32 to vector<2x128xf32>
      %c0_18 = arith.constant 0 : index
      %c0_19 = arith.constant 0 : index
      %c0_20 = arith.constant 0 : index
      %29 = vector.load %arg8[%c0_18, %c0_19, %c0_20] : memref<1x2x128xf32, #tpu.memory_space<vmem>>, vector<1x2x128xf32>
      %30 = vector.shape_cast %29 : vector<1x2x128xf32> to vector<2x128xf32>
      %31 = vector.shape_cast %28 : vector<2x128xf32> to vector<1x2x128xf32>
      tpu.vector_store %arg8[%c0_18, %c0_19, %c0_20], %31 {strides = array<i32>} : memref<1x2x128xf32, #tpu.memory_space<vmem>>, vector<1x2x128xf32>,
    } else {
    }
    %c0_8 = arith.constant 0 : index
    %c0_9 = arith.constant 0 : index
    %c0_10 = arith.constant 0 : index
    %19 = vector.load %arg8[%c0_8, %c0_9, %c0_10] : memref<1x2x128xf32, #tpu.memory_space<vmem>>, vector<1x2x128xf32>
    %20 = vector.shape_cast %19 : vector<1x2x128xf32> to vector<2x128xf32>
    %21 = arith.addf %20, %13 : vector<2x128xf32>
    %c0_11 = arith.constant 0 : index
    %c0_12 = arith.constant 0 : index
    %c0_13 = arith.constant 0 : index
    %22 = vector.load %arg8[%c0_11, %c0_12, %c0_13] : memref<1x2x128xf32, #tpu.memory_space<vmem>>, vector<1x2x128xf32>
    %23 = vector.shape_cast %22 : vector<1x2x128xf32> to vector<2x128xf32>
    %24 = vector.shape_cast %21 : vector<2x128xf32> to vector<1x2x128xf32>
    tpu.vector_store %arg8[%c0_11, %c0_12, %c0_13], %24 {strides = array<i32>} : memref<1x2x128xf32, #tpu.memory_space<vmem>>, vector<1x2x128xf32>,
    %c0_14 = arith.constant 0 : index
    %c0_15 = arith.constant 0 : index
    %c0_16 = arith.constant 0 : index
    %25 = vector.load %arg7[%c0_14, %c0_15, %c0_16] : memref<1x128x128xf32, #tpu.memory_space<vmem>>, vector<1x128x128xf32>
    %26 = vector.shape_cast %25 : vector<1x128x128xf32> to vector<128x128xf32>
    %27 = vector.shape_cast %7 : vector<128x128xf32> to vector<1x128x128xf32>
    tpu.vector_store %arg7[%c0_14, %c0_15, %c0_16], %27 {strides = array<i32>} : memref<1x128x128xf32, #tpu.memory_space<vmem>>, vector<1x128x128xf32>,
    return
  }
  func.func @transform_0(%arg0: i32, %arg1: i32, %arg2: i32) -> (i32, i32, i32) {
    %c2_i32 = arith.constant 2 : i32
    %0 = arith.muli %arg0, %c2_i32 : i32
    %1 = arith.addi %0, %arg1 : i32
    %c0_i32 = arith.constant 0 : i32
    %c0_i32_0 = arith.constant 0 : i32
    %c0_i32_1 = arith.constant 0 : i32
    return %1, %c0_i32, %c0_i32_0 : i32, i32, i32
  }
  func.func @transform_1(%arg0: i32, %arg1: i32, %arg2: i32) -> (i32, i32, i32) {
    %c0_i32 = arith.constant 0 : i32
    %c0_i32_0 = arith.constant 0 : i32
    %c0_i32_1 = arith.constant 0 : i32
    %c0_i32_2 = arith.constant 0 : i32
    return %c0_i32, %c0_i32_0, %c0_i32_1 : i32, i32, i32
  }
  func.func @transform_2(%arg0: i32, %arg1: i32, %arg2: i32) -> (i32, i32) {
    %c0_i32 = arith.constant 0 : i32
    %c0_i32_0 = arith.constant 0 : i32
    %c0_i32_1 = arith.constant 0 : i32
    return %c0_i32, %c0_i32_0 : i32, i32
  }
  func.func @transform_3(%arg0: i32, %arg1: i32, %arg2: i32) -> (i32, i32) {
    %c0_i32 = arith.constant 0 : i32
    %c0_i32_0 = arith.constant 0 : i32
    %c0_i32_1 = arith.constant 0 : i32
    return %c0_i32, %c0_i32_0 : i32, i32
  }
  func.func @transform_4(%arg0: i32, %arg1: i32, %arg2: i32) -> (i32, i32, i32) {
    %c2_i32 = arith.constant 2 : i32
    %0 = arith.muli %arg0, %c2_i32 : i32
    %1 = arith.addi %0, %arg1 : i32
    %c0_i32 = arith.constant 0 : i32
    %c0_i32_0 = arith.constant 0 : i32
    return %1, %arg2, %c0_i32 : i32, i32, i32
  }
  func.func @transform_5(%arg0: i32, %arg1: i32, %arg2: i32) -> (i32, i32, i32) {
    %c0_i32 = arith.constant 0 : i32
    %c0_i32_0 = arith.constant 0 : i32
    %c0_i32_1 = arith.constant 0 : i32
    return %arg0, %c0_i32, %c0_i32_0 : i32, i32, i32
  }
}

module attributes {stable_mosaic.version = 11 : i64} {
  func.func @kernel(%arg0: i32, %arg1: memref<1024x128xf32, #tpu.memory_space<vmem>>, %arg2: memref<1x128xf32, #tpu.memory_space<vmem>>, %arg3: memref<1x128xf32, #tpu.memory_space<vmem>>, %arg4: memref<1024x128xf32, #tpu.memory_space<vmem>>, %arg5: memref<1x128xf32, #tpu.memory_space<vmem>>, %arg6: memref<1x128xf32, #tpu.memory_space<vmem>>, %arg7: memref<1024x128xf32, #tpu.memory_space<vmem>>) attributes {dimension_semantics = [#tpu.dimension_semantics<parallel>], iteration_bounds = array<i64: 1>, scalar_prefetch = 0 : i64, scratch_operands = 0 : i64, tpu.core_type = #tpu.core_type<tc>, window_params = [{transform_indices = @transform_0, window_bounds = array<i64: 1024, 128>}, {pipeline_mode = #tpu.pipeline_mode<synchronous>, transform_indices = @transform_1, window_bounds = array<i64: 1, 128>}, {pipeline_mode = #tpu.pipeline_mode<synchronous>, transform_indices = @transform_2, window_bounds = array<i64: 1, 128>}, {transform_indices = @transform_3, window_bounds = array<i64: 1024, 128>}, {pipeline_mode = #tpu.pipeline_mode<synchronous>, transform_indices = @transform_4, window_bounds = array<i64: 1, 128>}, {pipeline_mode = #tpu.pipeline_mode<synchronous>, transform_indices = @transform_5, window_bounds = array<i64: 1, 128>}, {transform_indices = @transform_6, window_bounds = array<i64: 1024, 128>}]} {
    %c0 = arith.constant 0 : index
    %c0_0 = arith.constant 0 : index
    %0 = vector.load %arg1[%c0, %c0_0] : memref<1024x128xf32, #tpu.memory_space<vmem>>, vector<1024x128xf32>
    %c0_1 = arith.constant 0 : index
    %c0_2 = arith.constant 0 : index
    %1 = vector.load %arg2[%c0_1, %c0_2] : memref<1x128xf32, #tpu.memory_space<vmem>>, vector<1x128xf32>
    %2 = vector.broadcast %1 : vector<1x128xf32> to vector<1024x128xf32>
    %3 = arith.mulf %0, %2 : vector<1024x128xf32>
    %c0_3 = arith.constant 0 : index
    %c0_4 = arith.constant 0 : index
    %4 = vector.load %arg3[%c0_3, %c0_4] : memref<1x128xf32, #tpu.memory_space<vmem>>, vector<1x128xf32>
    %5 = vector.broadcast %4 : vector<1x128xf32> to vector<1024x128xf32>
    %6 = arith.addf %3, %5 : vector<1024x128xf32>
    %c0_5 = arith.constant 0 : index
    %c0_6 = arith.constant 0 : index
    %7 = vector.load %arg4[%c0_5, %c0_6] : memref<1024x128xf32, #tpu.memory_space<vmem>>, vector<1024x128xf32>
    %c0_7 = arith.constant 0 : index
    %c0_8 = arith.constant 0 : index
    %8 = vector.load %arg5[%c0_7, %c0_8] : memref<1x128xf32, #tpu.memory_space<vmem>>, vector<1x128xf32>
    %9 = vector.broadcast %8 : vector<1x128xf32> to vector<1024x128xf32>
    %10 = arith.mulf %7, %9 : vector<1024x128xf32>
    %c0_9 = arith.constant 0 : index
    %c0_10 = arith.constant 0 : index
    %11 = vector.load %arg6[%c0_9, %c0_10] : memref<1x128xf32, #tpu.memory_space<vmem>>, vector<1x128xf32>
    %12 = vector.broadcast %11 : vector<1x128xf32> to vector<1024x128xf32>
    %13 = arith.addf %10, %12 : vector<1024x128xf32>
    %14 = arith.addf %6, %13 : vector<1024x128xf32>
    %cst = arith.constant 0.000000e+00 : f32
    %15 = vector.broadcast %cst : f32 to vector<1024x128xf32>
    %16 = arith.maximumf %14, %15 : vector<1024x128xf32>
    %c0_11 = arith.constant 0 : index
    %c0_12 = arith.constant 0 : index
    %17 = vector.load %arg7[%c0_11, %c0_12] : memref<1024x128xf32, #tpu.memory_space<vmem>>, vector<1024x128xf32>
    tpu.vector_store %arg7[%c0_11, %c0_12], %16 {strides = array<i32>} : memref<1024x128xf32, #tpu.memory_space<vmem>>, vector<1024x128xf32>,
    return
  }
  func.func @transform_0(%arg0: i32) -> (i32, i32) {
    %c0_i32 = arith.constant 0 : i32
    %c0_i32_0 = arith.constant 0 : i32
    return %arg0, %c0_i32 : i32, i32
  }
  func.func @transform_1(%arg0: i32) -> (i32, i32) {
    %c0_i32 = arith.constant 0 : i32
    %c0_i32_0 = arith.constant 0 : i32
    %c0_i32_1 = arith.constant 0 : i32
    return %c0_i32, %c0_i32_0 : i32, i32
  }
  func.func @transform_2(%arg0: i32) -> (i32, i32) {
    %c0_i32 = arith.constant 0 : i32
    %c0_i32_0 = arith.constant 0 : i32
    %c0_i32_1 = arith.constant 0 : i32
    return %c0_i32, %c0_i32_0 : i32, i32
  }
  func.func @transform_3(%arg0: i32) -> (i32, i32) {
    %c0_i32 = arith.constant 0 : i32
    %c0_i32_0 = arith.constant 0 : i32
    return %arg0, %c0_i32 : i32, i32
  }
  func.func @transform_4(%arg0: i32) -> (i32, i32) {
    %c0_i32 = arith.constant 0 : i32
    %c0_i32_0 = arith.constant 0 : i32
    %c0_i32_1 = arith.constant 0 : i32
    return %c0_i32, %c0_i32_0 : i32, i32
  }
  func.func @transform_5(%arg0: i32) -> (i32, i32) {
    %c0_i32 = arith.constant 0 : i32
    %c0_i32_0 = arith.constant 0 : i32
    %c0_i32_1 = arith.constant 0 : i32
    return %c0_i32, %c0_i32_0 : i32, i32
  }
  func.func @transform_6(%arg0: i32) -> (i32, i32) {
    %c0_i32 = arith.constant 0 : i32
    %c0_i32_0 = arith.constant 0 : i32
    return %arg0, %c0_i32 : i32, i32
  }
}

</mosaic_0001>

<llo_original>
// kernel: _lambda_.10
$region0: #{_lambda_.10}
  #allocation0 [shape = 'u32[]', space=smem, size = 0x4, offset = 0x4, fixed_abs, tag = 'smem constant byte address 0x4 - core index']
  #allocation1 [shape = 'u32[144,128]{1,0:T(1,128)}', space=vmem, size = 0x12000, scoped, tag = 'internal scratch']
  %s0 = inlined_call_operand.vmem [shape: f32[4,256,128], index: 0, kind: input, shape index: {}]
  %s1 = inlined_call_operand.vmem [shape: f32[1,128,128], index: 1, kind: input, shape index: {}]
  %s2 = inlined_call_operand.vmem [shape: f32[1,128], index: 2, kind: input, shape index: {}]
  %s3 = inlined_call_operand.vmem [shape: f32[1,128], index: 3, kind: input, shape index: {}]
  %s4 = inlined_call_operand.vmem [shape: f32[4,256,128], index: 4, kind: output, shape index: {0}]
  %s5 = inlined_call_operand.vmem [shape: f32[2,2,128], index: 5, kind: output, shape index: {1}]
  %6 = xla_tuple %s4, %s5
  %s7 = sld [smem:[#allocation0]]
  $region61: #{_lambda_.10} parent=0
    _
  %s9 = ssub.s32 1, %s7
  %s10 = scalar_select 0, %s9, %s7
  loop: start=0, step=1, limit=10
  $region2: #{_lambda_.10} parent=0 // loop_pre_header
    _
  $region3: #{_lambda_.10} parent=0 // loop_header
    %s12 = sphi 0, %s16
    %p13 = scmp.ge.s32.totalorder %s12, 10
    %s19 = sphi 0, %s38
    %s20 = sphi 0, %s34
    %s21 = sphi 0, %s30
    %s22 = sphi 0, %s19
    %s23 = sphi 0, %s20
    %s24 = sphi 0, %s21
    %s25 = sphi 0, %s22
    %s26 = sphi 0, %s23
    %s27 = sphi 0, %s24
    %s45 = sphi 0, %s47
    %s48 = sphi 0, %s45
    %s49 = sphi 0, %s48
    %s65 = sphi 0, %s49
    %s69 = sphi 0, %s69
    %s71 = sphi 0, %s69
    %s72 = sphi 0, %s71
    %s86 = sphi 0, %s72
    %s90 = sphi 0, %s90
    %s92 = sphi 0, %s90
    %s93 = sphi 0, %s92
    %s107 = sphi 0, %s93
    %s111 = sphi 0, %s111
    %s113 = sphi 0, %s111
    %s114 = sphi 0, %s113
    %s128 = sphi 0, %s114
    %s140 = sphi 0, %s142
    %s143 = sphi 0, %s140
    %s144 = sphi 0, %s143
    %s160 = sphi 0, %s144
    %s166 = sphi 0, %s168
    %s169 = sphi 0, %s166
    %s170 = sphi 0, %s169
    %s186 = sphi 0, %s170
  $region4: #{_lambda_.10} parent=0 // loop_header_branch
    %15 = sbr.rel (%p13) target = $region8
  $region5: #{_lambda_.10} parent=0 // loop_body
    %s17 = ssub.s32 %s12, 1
    %s18 = ssub.s32 %s12, 2
    %s28 = sadd.s32 1, %s21
    %p29 = scmp.ge.s32.totalorder %s28, 2
    %s30 = scalar_select %p29, 0, %s28
    %s31 = sadd.s32 1, %s20
    %s32 = scalar_select %p29, %s31, %s20
    %p33 = scmp.ge.s32.totalorder %s32, 2
    %s34 = scalar_select %p33, 0, %s32
    %s35 = sadd.s32 1, %s19
    %s36 = scalar_select %p33, %s35, %s19
    %p37 = scmp.ge.s32.totalorder %s36, 2
    %s38 = scalar_select %p37, 0, %s36
    %s39 = smul.u32 %s19, 2
    %s40 = sadd.s32 %s39, %s20
    %s41 = smul.u32 %s38, 2
    %s42 = sadd.s32 %s41, %s34
    %s43 = ssub.s32 %s40, %s42
    %p44 = scmp.eq.s32.totalorder %s43, 0
    %s46 = sadd.s32 %s45, 1
    %s47 = scalar_select %p44, %s45, %s46
    %p50 = pneg %p44
    %p51 = scmp.eq.s32.totalorder %s12, 7
    %p52 = por %p50, %p51
    %p53 = scmp.ne.s32.totalorder %s45, %s48
    %p54 = scmp.eq.s32.totalorder %s12, 0
    %p55 = por %p53, %p54
    %p56 = scmp.ne.s32.totalorder %s45, %s48
    %p57 = scmp.eq.s32.totalorder %s17, 7
    %p58 = por %p56, %p57
    %p59 = scmp.ne.s32.totalorder %s48, %s49
    %p60 = scmp.eq.s32.totalorder %s17, 0
    %p61 = por %p59, %p60
    %p62 = scmp.ne.s32.totalorder %s48, %s49
    %p63 = scmp.eq.s32.totalorder %s18, 7
    %p64 = por %p62, %p63
    %p66 = scmp.ne.s32.totalorder %s49, %s65
    %p67 = scmp.eq.s32.totalorder %s18, 0
    %p68 = por %p66, %p67
    %s70 = sadd.s32 %s69, 1
    %p73 = scmp.eq.s32.totalorder %s12, 7
    %p74 = scmp.ne.s32.totalorder %s69, %s71
    %p75 = scmp.eq.s32.totalorder %s12, 0
    %p76 = por %p74, %p75
    %p77 = scmp.ne.s32.totalorder %s69, %s71
    %p78 = scmp.eq.s32.totalorder %s17, 7
    %p79 = por %p77, %p78
    %p80 = scmp.ne.s32.totalorder %s71, %s72
    %p81 = scmp.eq.s32.totalorder %s17, 0
    %p82 = por %p80, %p81
    %p83 = scmp.ne.s32.totalorder %s71, %s72
    %p84 = scmp.eq.s32.totalorder %s18, 7
    %p85 = por %p83, %p84
    %p87 = scmp.ne.s32.totalorder %s72, %s86
    %p88 = scmp.eq.s32.totalorder %s18, 0
    %p89 = por %p87, %p88
    %s91 = sadd.s32 %s90, 1
    %p94 = scmp.eq.s32.totalorder %s12, 7
    %p95 = scmp.ne.s32.totalorder %s90, %s92
    %p96 = scmp.eq.s32.totalorder %s12, 0
    %p97 = por %p95, %p96
    %p98 = scmp.ne.s32.totalorder %s90, %s92
    %p99 = scmp.eq.s32.totalorder %s17, 7
    %p100 = por %p98, %p99
    %p101 = scmp.ne.s32.totalorder %s92, %s93
    %p102 = scmp.eq.s32.totalorder %s17, 0
    %p103 = por %p101, %p102
    %p104 = scmp.ne.s32.totalorder %s92, %s93
    %p105 = scmp.eq.s32.totalorder %s18, 7
    %p106 = por %p104, %p105
    %p108 = scmp.ne.s32.totalorder %s93, %s107
    %p109 = scmp.eq.s32.totalorder %s18, 0
    %p110 = por %p108, %p109
    %s112 = sadd.s32 %s111, 1
    %p115 = scmp.eq.s32.totalorder %s12, 7
    %p116 = scmp.ne.s32.totalorder %s111, %s113
    %p117 = scmp.eq.s32.totalorder %s12, 0
    %p118 = por %p116, %p117
    %p119 = scmp.ne.s32.totalorder %s111, %s113
    %p120 = scmp.eq.s32.totalorder %s17, 7
    %p121 = por %p119, %p120
    %p122 = scmp.ne.s32.totalorder %s113, %s114
    %p123 = scmp.eq.s32.totalorder %s17, 0
    %p124 = por %p122, %p123
    %p125 = scmp.ne.s32.totalorder %s113, %s114
    %p126 = scmp.eq.s32.totalorder %s18, 7
    %p127 = por %p125, %p126
    %p129 = scmp.ne.s32.totalorder %s114, %s128
    %p130 = scmp.eq.s32.totalorder %s18, 0
    %p131 = por %p129, %p130
    %s132 = smul.u32 %s19, 2
    %s133 = sadd.s32 %s132, %s20
    %s134 = smul.u32 %s38, 2
    %s135 = sadd.s32 %s134, %s34
    %s136 = ssub.s32 %s133, %s135
    %s137 = ssub.s32 %s21, %s30
    %s138 = sor.u32 %s136, %s137
    %p139 = scmp.eq.s32.totalorder %s138, 0
    %s141 = sadd.s32 %s140, 1
    %s142 = scalar_select %p139, %s140, %s141
    %p145 = pneg %p139
    %p146 = scmp.eq.s32.totalorder %s12, 7
    %p147 = por %p145, %p146
    %p148 = scmp.ne.s32.totalorder %s140, %s143
    %p149 = scmp.eq.s32.totalorder %s12, 0
    %p150 = por %p148, %p149
    %p151 = scmp.ne.s32.totalorder %s140, %s143
    %p152 = scmp.eq.s32.totalorder %s17, 7
    %p153 = por %p151, %p152
    %p154 = scmp.ne.s32.totalorder %s143, %s144
    %p155 = scmp.eq.s32.totalorder %s17, 0
    %p156 = por %p154, %p155
    %p157 = scmp.ne.s32.totalorder %s143, %s144
    %p158 = scmp.eq.s32.totalorder %s18, 7
    %p159 = por %p157, %p158
    %p161 = scmp.ne.s32.totalorder %s144, %s160
    %p162 = scmp.eq.s32.totalorder %s18, 0
    %p163 = por %p161, %p162
    %s164 = ssub.s32 %s19, %s38
    %p165 = scmp.eq.s32.totalorder %s164, 0
    %s167 = sadd.s32 %s166, 1
    %s168 = scalar_select %p165, %s166, %s167
    %p171 = pneg %p165
    %p172 = scmp.eq.s32.totalorder %s12, 7
    %p173 = por %p171, %p172
    %p174 = scmp.ne.s32.totalorder %s166, %s169
    %p175 = scmp.eq.s32.totalorder %s12, 0
    %p176 = por %p174, %p175
    %p177 = scmp.ne.s32.totalorder %s166, %s169
    %p178 = scmp.eq.s32.totalorder %s17, 7
    %p179 = por %p177, %p178
    %p180 = scmp.ne.s32.totalorder %s169, %s170
    %p181 = scmp.eq.s32.totalorder %s17, 0
    %p182 = por %p180, %p181
    %p183 = scmp.ne.s32.totalorder %s169, %s170
    %p184 = scmp.eq.s32.totalorder %s18, 7
    %p185 = por %p183, %p184
    %p187 = scmp.ne.s32.totalorder %s170, %s186
    %p188 = scmp.eq.s32.totalorder %s18, 0
    %p189 = por %p187, %p188
    %p190 = scmp.le.s32.totalorder 1, %s12
    %p191 = scmp.lt.s32.totalorder %s12, 9
    %p192 = pnand %p190, %p191
    %p193 = pneg %p192
    // Predicated region
    $region9: #{_lambda_.10} parent=5 // pred_check
      _
    $region10: #{_lambda_.10} parent=5 // pred_check_branch
      %195 = sbr.rel (%p192) target = $region12
    $region11: #{_lambda_.10} parent=5 // pred_region
      %s196 = ssub.s32 %s12, 1
      // Predicated region
      $region13: #{_lambda_.10} parent=11 // pred_check
        %p197 = pneg %p82
      $region14: #{_lambda_.10} parent=11 // pred_check_branch
        %199 = sbr.rel (%p197) target = $region16
      $region15: #{_lambda_.10} parent=11 // pred_region
        _
      $region16: #{_lambda_.10} parent=11 // pred_fallthru
        _
      // Predicated region
      $region17: #{_lambda_.10} parent=11 // pred_check
        %p200 = pneg %p103
      $region18: #{_lambda_.10} parent=11 // pred_check_branch
        %202 = sbr.rel (%p200) target = $region20
      $region19: #{_lambda_.10} parent=11 // pred_region
        _
      $region20: #{_lambda_.10} parent=11 // pred_fallthru
        _
      // Predicated region
      $region21: #{_lambda_.10} parent=11 // pred_check
        %p203 = pneg %p124
      $region22: #{_lambda_.10} parent=11 // pred_check_branch
        %205 = sbr.rel (%p203) target = $region24
      $region23: #{_lambda_.10} parent=11 // pred_region
        _
      $region24: #{_lambda_.10} parent=11 // pred_fallthru
        _
    $region12: #{_lambda_.10} parent=5 // pred_fallthru
      _
    %p206 = scmp.lt.s32.totalorder %s12, 8
    // Predicated region
    $region25: #{_lambda_.10} parent=5 // pred_check
      %p207 = pneg %p206
    $region26: #{_lambda_.10} parent=5 // pred_check_branch
      %209 = sbr.rel (%p207) target = $region28
    $region27: #{_lambda_.10} parent=5 // pred_region
      // Predicated region
      $region29: #{_lambda_.10} parent=27 // pred_check
        %p210 = pneg %p55
      $region30: #{_lambda_.10} parent=27 // pred_check_branch
        %212 = sbr.rel (%p210) target = $region32
      $region31: #{_lambda_.10} parent=27 // pred_region
        %s213 = smul.u32 %s19, 2
        %s214 = sadd.s32 %s213, %s20
        %p215 = scmp.lt.s32.totalorder %s214, 3
        %s216 = scalar_select %p215, %s214, 3
        %s217 = smul.addr %s216, 32
        %s218 = smul.addr %s217, 8
        %s219 = scalar_lea.vmem %s0, %s218
        %s220 = smul.u32 %s19, 2
        %s221 = sadd.s32 %s220, %s20
      $region32: #{_lambda_.10} parent=27 // pred_fallthru
        _
    $region28: #{_lambda_.10} parent=5 // pred_fallthru
      _
    %p222 = scmp.le.s32.totalorder 1, %s12
    %p223 = scmp.lt.s32.totalorder %s12, 9
    %p224 = pnand %p222, %p223
    %p225 = pneg %p224
    // Predicated region
    $region33: #{_lambda_.10} parent=5 // pred_check
      _
    $region34: #{_lambda_.10} parent=5 // pred_check_branch
      %227 = sbr.rel (%p224) target = $region36
    $region35: #{_lambda_.10} parent=5 // pred_region
      %s228 = ssub.s32 %s12, 1
      %s229 = smul.u32 %s22, 2
      %s230 = sadd.s32 %s229, %s23
      %p231 = scmp.lt.s32.totalorder %s230, 3
      %s232 = scalar_select %p231, %s230, 3
      %s233 = smul.addr %s232, 32
      %s234 = smul.addr %s233, 8
      %s235 = scalar_lea.vmem %s0, %s234
      %p236 = pneg %p61
      %p237 = pneg %p58
      %p238 = pneg %p82
      %p239 = pneg %p79
      %p240 = pneg %p103
      %p241 = pneg %p100
      %p242 = pneg %p124
      %p243 = pneg %p121
      %p244 = pneg %p156
      %p245 = pneg %p153
      %s246 = smul.u32 %s22, 2
      %s247 = sadd.s32 %s246, %s23
      %s248 = smul.u32 16, %s24
      %p249 = scmp.lt.s32.totalorder %s247, 3
      %s250 = scalar_select %p249, %s247, 3
      %p251 = scmp.lt.s32.totalorder %s248, 31
      %s252 = scalar_select %p251, %s248, 31
      %s253 = smul.addr %s250, 32
      %s254 = sadd.s32 %s252, %s253
      %s255 = smul.addr %s254, 8
      %s256 = scalar_lea.vmem %s4, %s255
      %p257 = pneg %p182
      %p258 = pneg %p179
      %p259 = scmp.lt.s32.totalorder %s22, 1
      %s260 = scalar_select %p259, %s22, 1
      %s261 = smul.addr %s260, 2
      %s262 = scalar_lea.vmem %s5, %s261
      %s263 = smul.u32 %s22, 2
      %s264 = sadd.s32 %s263, %s23
      %p265 = scmp.lt.s32.totalorder %s264, 3
      %s266 = scalar_select %p265, %s264, 3
      %s267 = smul.addr %s266, 32
      %s268 = smul.addr %s267, 8
      %s269 = scalar_lea.vmem %s0, %s268
      %s270 = smul.u32 %s22, 2
      %s271 = sadd.s32 %s270, %s23
      %s272 = smul.u32 %s22, 2
      %s273 = sadd.s32 %s272, %s23
      %s274 = smul.u32 16, %s24
      %p275 = scmp.lt.s32.totalorder %s273, 3
      %s276 = scalar_select %p275, %s273, 3
      %p277 = scmp.lt.s32.totalorder %s274, 31
      %s278 = scalar_select %p277, %s274, 31
      %s279 = smul.addr %s276, 32
      %s280 = sadd.s32 %s278, %s279
      %s281 = smul.addr %s280, 8
      %s282 = scalar_lea.vmem %s4, %s281
      %s283 = smul.u32 %s22, 2
      %s284 = sadd.s32 %s283, %s23
      %s285 = smul.u32 16, %s24
      %p286 = scmp.lt.s32.totalorder %s22, 1
      %s287 = scalar_select %p286, %s22, 1
      %s288 = smul.addr %s287, 2
      %s289 = scalar_lea.vmem %s5, %s288
      %s290 = smul.u32 %s24, 128
      %s291 = scalar_lea.vmem %s269, %s290
      %v292 = vld [vmem:[%s291] sm:$0xff]
      %v293 = vld [vmem:[%s291 + $0x8] sm:$0xff]
      %v294 = vld [vmem:[%s291 + $0x10] sm:$0xff]
      %v295 = vld [vmem:[%s291 + $0x18] sm:$0xff]
      %v296 = vld [vmem:[%s291 + $0x20] sm:$0xff]
      %v297 = vld [vmem:[%s291 + $0x28] sm:$0xff]
      %v298 = vld [vmem:[%s291 + $0x30] sm:$0xff]
      %v299 = vld [vmem:[%s291 + $0x38] sm:$0xff]
      %v300 = vld [vmem:[%s291 + $0x40] sm:$0xff]
      %v301 = vld [vmem:[%s291 + $0x48] sm:$0xff]
      %v302 = vld [vmem:[%s291 + $0x50] sm:$0xff]
      %v303 = vld [vmem:[%s291 + $0x58] sm:$0xff]
      %v304 = vld [vmem:[%s291 + $0x60] sm:$0xff]
      %v305 = vld [vmem:[%s291 + $0x68] sm:$0xff]
      %v306 = vld [vmem:[%s291 + $0x70] sm:$0xff]
      %v307 = vld [vmem:[%s291 + $0x78] sm:$0xff]
      %v308 = vld [vmem:[%s1] sm:$0xff]
      %v309 = vld [vmem:[%s1 + $0x8] sm:$0xff]
      %v310 = vld [vmem:[%s1 + $0x10] sm:$0xff]
      %v311 = vld [vmem:[%s1 + $0x18] sm:$0xff]
      %v312 = vld [vmem:[%s1 + $0x20] sm:$0xff]
      %v313 = vld [vmem:[%s1 + $0x28] sm:$0xff]
      %v314 = vld [vmem:[%s1 + $0x30] sm:$0xff]
      %v315 = vld [vmem:[%s1 + $0x38] sm:$0xff]
      %v316 = vld [vmem:[%s1 + $0x40] sm:$0xff]
      %v317 = vld [vmem:[%s1 + $0x48] sm:$0xff]
      %v318 = vld [vmem:[%s1 + $0x50] sm:$0xff]
      %v319 = vld [vmem:[%s1 + $0x58] sm:$0xff]
      %v320 = vld [vmem:[%s1 + $0x60] sm:$0xff]
      %v321 = vld [vmem:[%s1 + $0x68] sm:$0xff]
      %v322 = vld [vmem:[%s1 + $0x70] sm:$0xff]
      %v323 = vld [vmem:[%s1 + $0x78] sm:$0xff]
      %324 = vmatprep.subr.mxu0 0.0
      %325 = vmatpush1.msra.mxu0 %v308
      %326 = vmatprep.subr.mxu0 0.0
      %327 = vmatpush1.msra.mxu0 %v309
      %328 = vmatprep.subr.mxu0 0.0
      %329 = vmatpush1.msra.mxu0 %v310
      %330 = vmatprep.subr.mxu0 0.0
      %331 = vmatpush1.msra.mxu0 %v311
      %332 = vmatprep.subr.mxu0 0.0
      %333 = vmatpush1.msra.mxu0 %v312
      %334 = vmatprep.subr.mxu0 0.0
      %335 = vmatpush1.msra.mxu0 %v313
      %336 = vmatprep.subr.mxu0 0.0
      %337 = vmatpush1.msra.mxu0 %v314
      %338 = vmatprep.subr.mxu0 0.0
      %339 = vmatpush1.msra.mxu0 %v315
      %340 = vmatprep.subr.mxu0 0.0
      %341 = vmatpush1.msra.mxu0 %v316
      %342 = vmatprep.subr.mxu0 0.0
      %343 = vmatpush1.msra.mxu0 %v317
      %344 = vmatprep.subr.mxu0 0.0
      %345 = vmatpush1.msra.mxu0 %v318
      %346 = vmatprep.subr.mxu0 0.0
      %347 = vmatpush1.msra.mxu0 %v319
      %348 = vmatprep.subr.mxu0 0.0
      %349 = vmatpush1.msra.mxu0 %v320
      %350 = vmatprep.subr.mxu0 0.0
      %351 = vmatpush1.msra.mxu0 %v321
      %352 = vmatprep.subr.mxu0 0.0
      %353 = vmatpush1.msra.mxu0 %v322
      %354 = vmatprep.subr.mxu0 0.0
      %355 = vmatpush1.msra.mxu0 %v323
      %356 = vmatprep.subr.mxu0 0.0
      %357 = vmatpush1.msra.mxu0 0.0
      %358 = vmatprep.subr.mxu0 0.0
      %359 = vmatpush1.msra.mxu0 0.0
      %360 = vmatprep.subr.mxu0 0.0
      %361 = vmatpush1.msra.mxu0 0.0
      %362 = vmatprep.subr.mxu0 0.0
      %363 = vmatpush1.msra.mxu0 0.0
      %364 = vmatprep.subr.mxu0 0.0
      %365 = vmatpush1.msra.mxu0 0.0
      %366 = vmatprep.subr.mxu0 0.0
      %367 = vmatpush1.msra.mxu0 0.0
      %368 = vmatprep.subr.mxu0 0.0
      %369 = vmatpush1.msra.mxu0 0.0
      %370 = vmatprep.subr.mxu0 0.0
      %371 = vmatpush1.msra.mxu0 0.0
      %372 = vmatprep.subr.mxu0 0.0
      %373 = vmatpush1.msra.mxu0 0.0
      %374 = vmatprep.subr.mxu0 0.0
      %375 = vmatpush1.msra.mxu0 0.0
      %376 = vmatprep.subr.mxu0 0.0
      %377 = vmatpush1.msra.mxu0 0.0
      %378 = vmatprep.subr.mxu0 0.0
      %379 = vmatpush1.msra.mxu0 0.0
      %380 = vmatprep.subr.mxu0 0.0
      %381 = vmatpush1.msra.mxu0 0.0
      %382 = vmatprep.subr.mxu0 0.0
      %383 = vmatpush1.msra.mxu0 0.0
      %384 = vmatprep.subr.mxu0 0.0
      %385 = vmatpush1.msra.mxu0 0.0
      %386 = vmatprep.subr.mxu0 0.0
      %387 = vmatpush1.msra.mxu0 0.0
      %388 = vmatprep.mubr.f32.mxu0 0.0
      %389 = vmatmul.mubr.f32.gmra.mrb[0].mxu0 %v292
      %v390 = vpop.f32.mrb[0].mxu0
      %v391 = vadd.f32 0.0, %v390
      %v392 = vpop.f32.mrb[0].mxu0
      %393 = vmatprep.mubr.f32.mxu0 0.0
      %394 = vmatmul.mubr.f32.gmra.mrb[0].mxu0 %v293
      %v395 = vpop.f32.mrb[0].mxu0
      %v396 = vadd.f32 0.0, %v395
      %v397 = vpop.f32.mrb[0].mxu0
      %398 = vmatprep.mubr.f32.mxu0 0.0
      %399 = vmatmul.mubr.f32.gmra.mrb[0].mxu0 %v294
      %v400 = vpop.f32.mrb[0].mxu0
      %v401 = vadd.f32 0.0, %v400
      %v402 = vpop.f32.mrb[0].mxu0
      %403 = vmatprep.mubr.f32.mxu0 0.0
      %404 = vmatmul.mubr.f32.gmra.mrb[0].mxu0 %v295
      %v405 = vpop.f32.mrb[0].mxu0
      %v406 = vadd.f32 0.0, %v405
      %v407 = vpop.f32.mrb[0].mxu0
      %408 = vmatprep.mubr.f32.mxu0 0.0
      %409 = vmatmul.mubr.f32.gmra.mrb[0].mxu0 %v296
      %v410 = vpop.f32.mrb[0].mxu0
      %v411 = vadd.f32 0.0, %v410
      %v412 = vpop.f32.mrb[0].mxu0
      %413 = vmatprep.mubr.f32.mxu0 0.0
      %414 = vmatmul.mubr.f32.gmra.mrb[0].mxu0 %v297
      %v415 = vpop.f32.mrb[0].mxu0
      %v416 = vadd.f32 0.0, %v415
      %v417 = vpop.f32.mrb[0].mxu0
      %418 = vmatprep.mubr.f32.mxu0 0.0
      %419 = vmatmul.mubr.f32.gmra.mrb[0].mxu0 %v298
      %v420 = vpop.f32.mrb[0].mxu0
      %v421 = vadd.f32 0.0, %v420
      %v422 = vpop.f32.mrb[0].mxu0
      %423 = vmatprep.mubr.f32.mxu0 0.0
      %424 = vmatmul.mubr.f32.gmra.mrb[0].mxu0 %v299
      %v425 = vpop.f32.mrb[0].mxu0
      %v426 = vadd.f32 0.0, %v425
      %v427 = vpop.f32.mrb[0].mxu0
      %428 = vmatprep.mubr.f32.mxu0 0.0
      %429 = vmatmul.mubr.f32.gmra.mrb[0].mxu0 %v300
      %v430 = vpop.f32.mrb[0].mxu0
      %v431 = vadd.f32 0.0, %v430
      %v432 = vpop.f32.mrb[0].mxu0
      %433 = vmatprep.mubr.f32.mxu0 0.0
      %434 = vmatmul.mubr.f32.gmra.mrb[0].mxu0 %v301
      %v435 = vpop.f32.mrb[0].mxu0
      %v436 = vadd.f32 0.0, %v435
      %v437 = vpop.f32.mrb[0].mxu0
      %438 = vmatprep.mubr.f32.mxu0 0.0
      %439 = vmatmul.mubr.f32.gmra.mrb[0].mxu0 %v302
      %v440 = vpop.f32.mrb[0].mxu0
      %v441 = vadd.f32 0.0, %v440
      %v442 = vpop.f32.mrb[0].mxu0
      %443 = vmatprep.mubr.f32.mxu0 0.0
      %444 = vmatmul.mubr.f32.gmra.mrb[0].mxu0 %v303
      %v445 = vpop.f32.mrb[0].mxu0
      %v446 = vadd.f32 0.0, %v445
      %v447 = vpop.f32.mrb[0].mxu0
      %448 = vmatprep.mubr.f32.mxu0 0.0
      %449 = vmatmul.mubr.f32.gmra.mrb[0].mxu0 %v304
      %v450 = vpop.f32.mrb[0].mxu0
      %v451 = vadd.f32 0.0, %v450
      %v452 = vpop.f32.mrb[0].mxu0
      %453 = vmatprep.mubr.f32.mxu0 0.0
      %454 = vmatmul.mubr.f32.gmra.mrb[0].mxu0 %v305
      %v455 = vpop.f32.mrb[0].mxu0
      %v456 = vadd.f32 0.0, %v455
      %v457 = vpop.f32.mrb[0].mxu0
      %458 = vmatprep.mubr.f32.mxu0 0.0
      %459 = vmatmul.mubr.f32.gmra.mrb[0].mxu0 %v306
      %v460 = vpop.f32.mrb[0].mxu0
      %v461 = vadd.f32 0.0, %v460
      %v462 = vpop.f32.mrb[0].mxu0
      %463 = vmatprep.mubr.f32.mxu0 0.0
      %464 = vmatmul.mubr.f32.gmra.mrb[0].mxu0 %v307
      %v465 = vpop.f32.mrb[0].mxu0
      %v466 = vadd.f32 0.0, %v465
      %v467 = vpop.f32.mrb[0].mxu0
      %468 = vdwg.mxu0
      %v469 = vadd.f32 %v391, %v396
      %v470 = vadd.f32 %v469, %v401
      %v471 = vadd.f32 %v470, %v406
      %v472 = vadd.f32 %v471, %v411
      %v473 = vadd.f32 %v472, %v416
      %v474 = vadd.f32 %v473, %v421
      %v475 = vadd.f32 %v474, %v426
      %v476 = vadd.f32 %v475, %v431
      %v477 = vadd.f32 %v476, %v436
      %v478 = vadd.f32 %v477, %v441
      %v479 = vadd.f32 %v478, %v446
      %v480 = vadd.f32 %v479, %v451
      %v481 = vadd.f32 %v480, %v456
      %v482 = vadd.f32 %v481, %v461
      %v483 = vadd.f32 %v482, %v466
      %v484 = vrot.slane %v483, 4
      %v485 = vadd.f32 %v483, %v484
      %v486 = vrot.slane %v485, 2
      %v487 = vadd.f32 %v485, %v486
      %v488 = vrot.slane %v487, 1
      %v489 = vadd.f32 %v487, %v488
      %v490 = vmul.f32 %v391, %v391
      %v491 = vmul.f32 %v396, %v396
      %v492 = vmul.f32 %v401, %v401
      %v493 = vmul.f32 %v406, %v406
      %v494 = vmul.f32 %v411, %v411
      %v495 = vmul.f32 %v416, %v416
      %v496 = vmul.f32 %v421, %v421
      %v497 = vmul.f32 %v426, %v426
      %v498 = vmul.f32 %v431, %v431
      %v499 = vmul.f32 %v436, %v436
      %v500 = vmul.f32 %v441, %v441
      %v501 = vmul.f32 %v446, %v446
      %v502 = vmul.f32 %v451, %v451
      %v503 = vmul.f32 %v456, %v456
      %v504 = vmul.f32 %v461, %v461
      %v505 = vmul.f32 %v466, %v466
      %v506 = vadd.f32 %v490, %v491
      %v507 = vadd.f32 %v506, %v492
      %v508 = vadd.f32 %v507, %v493
      %v509 = vadd.f32 %v508, %v494
      %v510 = vadd.f32 %v509, %v495
      %v511 = vadd.f32 %v510, %v496
      %v512 = vadd.f32 %v511, %v497
      %v513 = vadd.f32 %v512, %v498
      %v514 = vadd.f32 %v513, %v499
      %v515 = vadd.f32 %v514, %v500
      %v516 = vadd.f32 %v515, %v501
      %v517 = vadd.f32 %v516, %v502
      %v518 = vadd.f32 %v517, %v503
      %v519 = vadd.f32 %v518, %v504
      %v520 = vadd.f32 %v519, %v505
      %v521 = vrot.slane %v520, 4
      %v522 = vadd.f32 %v520, %v521
      %v523 = vrot.slane %v522, 2
      %v524 = vadd.f32 %v522, %v523
      %v525 = vrot.slane %v524, 1
      %v526 = vadd.f32 %v524, %v525
      %vm527 = vcmask 1040384
      %v528 = vsel %vm527, %v489, %v526
      %p529 = scmp.eq.s32.totalorder %s23, 0
      %p530 = scmp.eq.s32.totalorder %s24, 0
      %p531 = pnand %p529, %p530
      %p532 = pneg %p531
      // Predicated region
      $region37: #{_lambda_.10} parent=35 // pred_check
        _
      $region38: #{_lambda_.10} parent=35 // pred_check_branch
        %534 = sbr.rel (%p531) target = $region40
      $region39: #{_lambda_.10} parent=35 // pred_region
        %535 = vst [vmem:[%s289] sm:$0x3] 0.0
      $region40: #{_lambda_.10} parent=35 // pred_fallthru
        _
      %v536 = vld [vmem:[%s289] sm:$0x3]
      %v537 = vadd.f32 %v536, %v528
      %538 = vst [vmem:[%s289] sm:$0x3] %v537
      %539 = vst [vmem:[%s282] sm:$0xff] %v391
      %540 = vst [vmem:[%s282 + $0x8] sm:$0xff] %v396
      %541 = vst [vmem:[%s282 + $0x10] sm:$0xff] %v401
      %542 = vst [vmem:[%s282 + $0x18] sm:$0xff] %v406
      %543 = vst [vmem:[%s282 + $0x20] sm:$0xff] %v411
      %544 = vst [vmem:[%s282 + $0x28] sm:$0xff] %v416
      %545 = vst [vmem:[%s282 + $0x30] sm:$0xff] %v421
      %546 = vst [vmem:[%s282 + $0x38] sm:$0xff] %v426
      %547 = vst [vmem:[%s282 + $0x40] sm:$0xff] %v431
      %548 = vst [vmem:[%s282 + $0x48] sm:$0xff] %v436
      %549 = vst [vmem:[%s282 + $0x50] sm:$0xff] %v441
      %550 = vst [vmem:[%s282 + $0x58] sm:$0xff] %v446
      %551 = vst [vmem:[%s282 + $0x60] sm:$0xff] %v451
      %552 = vst [vmem:[%s282 + $0x68] sm:$0xff] %v456
      %553 = vst [vmem:[%s282 + $0x70] sm:$0xff] %v461
      %554 = vst [vmem:[%s282 + $0x78] sm:$0xff] %v466
      %s555 = smul.u32 %s22, 2
      %s556 = sadd.s32 %s555, %s23
      %s557 = smul.u32 16, %s24
      %p558 = scmp.lt.s32.totalorder %s556, 3
      %s559 = scalar_select %p558, %s556, 3
      %p560 = scmp.lt.s32.totalorder %s557, 31
      %s561 = scalar_select %p560, %s557, 31
      %s562 = smul.addr %s559, 32
      %s563 = sadd.s32 %s561, %s562
      %s564 = smul.addr %s563, 8
      %s565 = scalar_lea.vmem %s4, %s564
      %p566 = scmp.lt.s32.totalorder %s22, 1
      %s567 = scalar_select %p566, %s22, 1
      %s568 = smul.addr %s567, 2
      %s569 = scalar_lea.vmem %s5, %s568
      // Predicated region
      $region41: #{_lambda_.10} parent=35 // pred_check
        %p570 = pneg %p153
      $region42: #{_lambda_.10} parent=35 // pred_check_branch
        %572 = sbr.rel (%p570) target = $region44
      $region43: #{_lambda_.10} parent=35 // pred_region
        %s573 = smul.u32 %s22, 2
        %s574 = sadd.s32 %s573, %s23
        %s575 = smul.u32 16, %s24
      $region44: #{_lambda_.10} parent=35 // pred_fallthru
        _
      // Predicated region
      $region45: #{_lambda_.10} parent=35 // pred_check
        %p576 = pneg %p179
      $region46: #{_lambda_.10} parent=35 // pred_check_branch
        %578 = sbr.rel (%p576) target = $region48
      $region47: #{_lambda_.10} parent=35 // pred_region
        _
      $region48: #{_lambda_.10} parent=35 // pred_fallthru
        _
    $region36: #{_lambda_.10} parent=5 // pred_fallthru
      _
    %p579 = scmp.le.s32.totalorder 2, %s12
    // Predicated region
    $region49: #{_lambda_.10} parent=5 // pred_check
      %p580 = pneg %p579
    $region50: #{_lambda_.10} parent=5 // pred_check_branch
      %582 = sbr.rel (%p580) target = $region52
    $region51: #{_lambda_.10} parent=5 // pred_region
      %s583 = ssub.s32 %s12, 2
      // Predicated region
      $region53: #{_lambda_.10} parent=51 // pred_check
        %p584 = pneg %p159
      $region54: #{_lambda_.10} parent=51 // pred_check_branch
        %586 = sbr.rel (%p584) target = $region56
      $region55: #{_lambda_.10} parent=51 // pred_region
        %s587 = smul.u32 %s25, 2
        %s588 = sadd.s32 %s587, %s26
        %s589 = smul.u32 16, %s27
        %p590 = scmp.lt.s32.totalorder %s588, 3
        %s591 = scalar_select %p590, %s588, 3
        %p592 = scmp.lt.s32.totalorder %s589, 31
        %s593 = scalar_select %p592, %s589, 31
        %s594 = smul.addr %s591, 32
        %s595 = sadd.s32 %s593, %s594
        %s596 = smul.addr %s595, 8
        %s597 = scalar_lea.vmem %s4, %s596
      $region56: #{_lambda_.10} parent=51 // pred_fallthru
        _
      // Predicated region
      $region57: #{_lambda_.10} parent=51 // pred_check
        %p598 = pneg %p185
      $region58: #{_lambda_.10} parent=51 // pred_check_branch
        %600 = sbr.rel (%p598) target = $region60
      $region59: #{_lambda_.10} parent=51 // pred_region
        %p601 = scmp.lt.s32.totalorder %s25, 1
        %s602 = scalar_select %p601, %s25, 1
        %s603 = smul.addr %s602, 2
        %s604 = scalar_lea.vmem %s5, %s603
      $region60: #{_lambda_.10} parent=51 // pred_fallthru
        _
    $region52: #{_lambda_.10} parent=5 // pred_fallthru
      _
  $region6: #{_lambda_.10} parent=0 // loop_footer
    %s16 = sadd.s32 1, %s12
  $region7: #{_lambda_.10} parent=0 // loop_footer_branch
    %11 = sbr.rel target = $region3
  $region8: #{_lambda_.10} parent=0 // loop_exit
    _

// kernel: _lambda_.7
$region0: #{_lambda_.7}
  #allocation0 [shape = 'u32[]', space=smem, size = 0x4, offset = 0x4, fixed_abs, tag = 'smem constant byte address 0x4 - core index']
  #allocation1 [shape = 'u32[144,128]{1,0:T(1,128)}', space=vmem, size = 0x12000, scoped, tag = 'internal scratch']
  %s0 = inlined_call_operand.vmem [shape: f32[4,264,128], index: 0, kind: input, shape index: {}]
  %s1 = inlined_call_operand.vmem [shape: f32[5,128,128], index: 1, kind: input, shape index: {}]
  %s2 = inlined_call_operand.vmem [shape: f32[1,128], index: 2, kind: input, shape index: {}]
  %s3 = inlined_call_operand.vmem [shape: f32[1,128], index: 3, kind: input, shape index: {}]
  %s4 = inlined_call_operand.vmem [shape: f32[4,256,128], index: 4, kind: output, shape index: {0}]
  %s5 = inlined_call_operand.vmem [shape: f32[2,2,128], index: 5, kind: output, shape index: {1}]
  %6 = xla_tuple %s4, %s5
  %s7 = sld [smem:[#allocation0]]
  $region61: #{_lambda_.7} parent=0
    _
  %s9 = ssub.s32 1, %s7
  %s10 = scalar_select 0, %s9, %s7
  loop: start=0, step=1, limit=10
  $region2: #{_lambda_.7} parent=0 // loop_pre_header
    _
  $region3: #{_lambda_.7} parent=0 // loop_header
    %s12 = sphi 0, %s16
    %p13 = scmp.ge.s32.totalorder %s12, 10
    %s19 = sphi 0, %s38
    %s20 = sphi 0, %s34
    %s21 = sphi 0, %s30
    %s22 = sphi 0, %s19
    %s23 = sphi 0, %s20
    %s24 = sphi 0, %s21
    %s25 = sphi 0, %s22
    %s26 = sphi 0, %s23
    %s27 = sphi 0, %s24
    %s45 = sphi 0, %s47
    %s48 = sphi 0, %s45
    %s49 = sphi 0, %s48
    %s65 = sphi 0, %s49
    %s69 = sphi 0, %s69
    %s71 = sphi 0, %s69
    %s72 = sphi 0, %s71
    %s86 = sphi 0, %s72
    %s90 = sphi 0, %s90
    %s92 = sphi 0, %s90
    %s93 = sphi 0, %s92
    %s107 = sphi 0, %s93
    %s111 = sphi 0, %s111
    %s113 = sphi 0, %s111
    %s114 = sphi 0, %s113
    %s128 = sphi 0, %s114
    %s140 = sphi 0, %s142
    %s143 = sphi 0, %s140
    %s144 = sphi 0, %s143
    %s160 = sphi 0, %s144
    %s166 = sphi 0, %s168
    %s169 = sphi 0, %s166
    %s170 = sphi 0, %s169
    %s186 = sphi 0, %s170
  $region4: #{_lambda_.7} parent=0 // loop_header_branch
    %15 = sbr.rel (%p13) target = $region8
  $region5: #{_lambda_.7} parent=0 // loop_body
    %s17 = ssub.s32 %s12, 1
    %s18 = ssub.s32 %s12, 2
    %s28 = sadd.s32 1, %s21
    %p29 = scmp.ge.s32.totalorder %s28, 2
    %s30 = scalar_select %p29, 0, %s28
    %s31 = sadd.s32 1, %s20
    %s32 = scalar_select %p29, %s31, %s20
    %p33 = scmp.ge.s32.totalorder %s32, 2
    %s34 = scalar_select %p33, 0, %s32
    %s35 = sadd.s32 1, %s19
    %s36 = scalar_select %p33, %s35, %s19
    %p37 = scmp.ge.s32.totalorder %s36, 2
    %s38 = scalar_select %p37, 0, %s36
    %s39 = smul.u32 %s19, 2
    %s40 = sadd.s32 %s39, %s20
    %s41 = smul.u32 %s38, 2
    %s42 = sadd.s32 %s41, %s34
    %s43 = ssub.s32 %s40, %s42
    %p44 = scmp.eq.s32.totalorder %s43, 0
    %s46 = sadd.s32 %s45, 1
    %s47 = scalar_select %p44, %s45, %s46
    %p50 = pneg %p44
    %p51 = scmp.eq.s32.totalorder %s12, 7
    %p52 = por %p50, %p51
    %p53 = scmp.ne.s32.totalorder %s45, %s48
    %p54 = scmp.eq.s32.totalorder %s12, 0
    %p55 = por %p53, %p54
    %p56 = scmp.ne.s32.totalorder %s45, %s48
    %p57 = scmp.eq.s32.totalorder %s17, 7
    %p58 = por %p56, %p57
    %p59 = scmp.ne.s32.totalorder %s48, %s49
    %p60 = scmp.eq.s32.totalorder %s17, 0
    %p61 = por %p59, %p60
    %p62 = scmp.ne.s32.totalorder %s48, %s49
    %p63 = scmp.eq.s32.totalorder %s18, 7
    %p64 = por %p62, %p63
    %p66 = scmp.ne.s32.totalorder %s49, %s65
    %p67 = scmp.eq.s32.totalorder %s18, 0
    %p68 = por %p66, %p67
    %s70 = sadd.s32 %s69, 1
    %p73 = scmp.eq.s32.totalorder %s12, 7
    %p74 = scmp.ne.s32.totalorder %s69, %s71
    %p75 = scmp.eq.s32.totalorder %s12, 0
    %p76 = por %p74, %p75
    %p77 = scmp.ne.s32.totalorder %s69, %s71
    %p78 = scmp.eq.s32.totalorder %s17, 7
    %p79 = por %p77, %p78
    %p80 = scmp.ne.s32.totalorder %s71, %s72
    %p81 = scmp.eq.s32.totalorder %s17, 0
    %p82 = por %p80, %p81
    %p83 = scmp.ne.s32.totalorder %s71, %s72
    %p84 = scmp.eq.s32.totalorder %s18, 7
    %p85 = por %p83, %p84
    %p87 = scmp.ne.s32.totalorder %s72, %s86
    %p88 = scmp.eq.s32.totalorder %s18, 0
    %p89 = por %p87, %p88
    %s91 = sadd.s32 %s90, 1
    %p94 = scmp.eq.s32.totalorder %s12, 7
    %p95 = scmp.ne.s32.totalorder %s90, %s92
    %p96 = scmp.eq.s32.totalorder %s12, 0
    %p97 = por %p95, %p96
    %p98 = scmp.ne.s32.totalorder %s90, %s92
    %p99 = scmp.eq.s32.totalorder %s17, 7
    %p100 = por %p98, %p99
    %p101 = scmp.ne.s32.totalorder %s92, %s93
    %p102 = scmp.eq.s32.totalorder %s17, 0
    %p103 = por %p101, %p102
    %p104 = scmp.ne.s32.totalorder %s92, %s93
    %p105 = scmp.eq.s32.totalorder %s18, 7
    %p106 = por %p104, %p105
    %p108 = scmp.ne.s32.totalorder %s93, %s107
    %p109 = scmp.eq.s32.totalorder %s18, 0
    %p110 = por %p108, %p109
    %s112 = sadd.s32 %s111, 1
    %p115 = scmp.eq.s32.totalorder %s12, 7
    %p116 = scmp.ne.s32.totalorder %s111, %s113
    %p117 = scmp.eq.s32.totalorder %s12, 0
    %p118 = por %p116, %p117
    %p119 = scmp.ne.s32.totalorder %s111, %s113
    %p120 = scmp.eq.s32.totalorder %s17, 7
    %p121 = por %p119, %p120
    %p122 = scmp.ne.s32.totalorder %s113, %s114
    %p123 = scmp.eq.s32.totalorder %s17, 0
    %p124 = por %p122, %p123
    %p125 = scmp.ne.s32.totalorder %s113, %s114
    %p126 = scmp.eq.s32.totalorder %s18, 7
    %p127 = por %p125, %p126
    %p129 = scmp.ne.s32.totalorder %s114, %s128
    %p130 = scmp.eq.s32.totalorder %s18, 0
    %p131 = por %p129, %p130
    %s132 = smul.u32 %s19, 2
    %s133 = sadd.s32 %s132, %s20
    %s134 = smul.u32 %s38, 2
    %s135 = sadd.s32 %s134, %s34
    %s136 = ssub.s32 %s133, %s135
    %s137 = ssub.s32 %s21, %s30
    %s138 = sor.u32 %s136, %s137
    %p139 = scmp.eq.s32.totalorder %s138, 0
    %s141 = sadd.s32 %s140, 1
    %s142 = scalar_select %p139, %s140, %s141
    %p145 = pneg %p139
    %p146 = scmp.eq.s32.totalorder %s12, 7
    %p147 = por %p145, %p146
    %p148 = scmp.ne.s32.totalorder %s140, %s143
    %p149 = scmp.eq.s32.totalorder %s12, 0
    %p150 = por %p148, %p149
    %p151 = scmp.ne.s32.totalorder %s140, %s143
    %p152 = scmp.eq.s32.totalorder %s17, 7
    %p153 = por %p151, %p152
    %p154 = scmp.ne.s32.totalorder %s143, %s144
    %p155 = scmp.eq.s32.totalorder %s17, 0
    %p156 = por %p154, %p155
    %p157 = scmp.ne.s32.totalorder %s143, %s144
    %p158 = scmp.eq.s32.totalorder %s18, 7
    %p159 = por %p157, %p158
    %p161 = scmp.ne.s32.totalorder %s144, %s160
    %p162 = scmp.eq.s32.totalorder %s18, 0
    %p163 = por %p161, %p162
    %s164 = ssub.s32 %s19, %s38
    %p165 = scmp.eq.s32.totalorder %s164, 0
    %s167 = sadd.s32 %s166, 1
    %s168 = scalar_select %p165, %s166, %s167
    %p171 = pneg %p165
    %p172 = scmp.eq.s32.totalorder %s12, 7
    %p173 = por %p171, %p172
    %p174 = scmp.ne.s32.totalorder %s166, %s169
    %p175 = scmp.eq.s32.totalorder %s12, 0
    %p176 = por %p174, %p175
    %p177 = scmp.ne.s32.totalorder %s166, %s169
    %p178 = scmp.eq.s32.totalorder %s17, 7
    %p179 = por %p177, %p178
    %p180 = scmp.ne.s32.totalorder %s169, %s170
    %p181 = scmp.eq.s32.totalorder %s17, 0
    %p182 = por %p180, %p181
    %p183 = scmp.ne.s32.totalorder %s169, %s170
    %p184 = scmp.eq.s32.totalorder %s18, 7
    %p185 = por %p183, %p184
    %p187 = scmp.ne.s32.totalorder %s170, %s186
    %p188 = scmp.eq.s32.totalorder %s18, 0
    %p189 = por %p187, %p188
    %p190 = scmp.le.s32.totalorder 1, %s12
    %p191 = scmp.lt.s32.totalorder %s12, 9
    %p192 = pnand %p190, %p191
    %p193 = pneg %p192
    // Predicated region
    $region9: #{_lambda_.7} parent=5 // pred_check
      _
    $region10: #{_lambda_.7} parent=5 // pred_check_branch
      %195 = sbr.rel (%p192) target = $region12
    $region11: #{_lambda_.7} parent=5 // pred_region
      %s196 = ssub.s32 %s12, 1
      // Predicated region
      $region13: #{_lambda_.7} parent=11 // pred_check
        %p197 = pneg %p82
      $region14: #{_lambda_.7} parent=11 // pred_check_branch
        %199 = sbr.rel (%p197) target = $region16
      $region15: #{_lambda_.7} parent=11 // pred_region
        _
      $region16: #{_lambda_.7} parent=11 // pred_fallthru
        _
      // Predicated region
      $region17: #{_lambda_.7} parent=11 // pred_check
        %p200 = pneg %p103
      $region18: #{_lambda_.7} parent=11 // pred_check_branch
        %202 = sbr.rel (%p200) target = $region20
      $region19: #{_lambda_.7} parent=11 // pred_region
        _
      $region20: #{_lambda_.7} parent=11 // pred_fallthru
        _
      // Predicated region
      $region21: #{_lambda_.7} parent=11 // pred_check
        %p203 = pneg %p124
      $region22: #{_lambda_.7} parent=11 // pred_check_branch
        %205 = sbr.rel (%p203) target = $region24
      $region23: #{_lambda_.7} parent=11 // pred_region
        _
      $region24: #{_lambda_.7} parent=11 // pred_fallthru
        _
    $region12: #{_lambda_.7} parent=5 // pred_fallthru
      _
    %p206 = scmp.lt.s32.totalorder %s12, 8
    // Predicated region
    $region25: #{_lambda_.7} parent=5 // pred_check
      %p207 = pneg %p206
    $region26: #{_lambda_.7} parent=5 // pred_check_branch
      %209 = sbr.rel (%p207) target = $region28
    $region27: #{_lambda_.7} parent=5 // pred_region
      // Predicated region
      $region29: #{_lambda_.7} parent=27 // pred_check
        %p210 = pneg %p55
      $region30: #{_lambda_.7} parent=27 // pred_check_branch
        %212 = sbr.rel (%p210) target = $region32
      $region31: #{_lambda_.7} parent=27 // pred_region
        %s213 = smul.u32 %s19, 2
        %s214 = sadd.s32 %s213, %s20
        %p215 = scmp.lt.s32.totalorder %s214, 3
        %s216 = scalar_select %p215, %s214, 3
        %s217 = smul.addr %s216, 33
        %s218 = smul.addr %s217, 8
        %s219 = scalar_lea.vmem %s0, %s218
        %s220 = smul.u32 %s19, 2
        %s221 = sadd.s32 %s220, %s20
      $region32: #{_lambda_.7} parent=27 // pred_fallthru
        _
    $region28: #{_lambda_.7} parent=5 // pred_fallthru
      _
    %p222 = scmp.le.s32.totalorder 1, %s12
    %p223 = scmp.lt.s32.totalorder %s12, 9
    %p224 = pnand %p222, %p223
    %p225 = pneg %p224
    // Predicated region
    $region33: #{_lambda_.7} parent=5 // pred_check
      _
    $region34: #{_lambda_.7} parent=5 // pred_check_branch
      %227 = sbr.rel (%p224) target = $region36
    $region35: #{_lambda_.7} parent=5 // pred_region
      %s228 = ssub.s32 %s12, 1
      %s229 = smul.u32 %s22, 2
      %s230 = sadd.s32 %s229, %s23
      %p231 = scmp.lt.s32.totalorder %s230, 3
      %s232 = scalar_select %p231, %s230, 3
      %s233 = smul.addr %s232, 33
      %s234 = smul.addr %s233, 8
      %s235 = scalar_lea.vmem %s0, %s234
      %p236 = pneg %p61
      %p237 = pneg %p58
      %p238 = pneg %p82
      %p239 = pneg %p79
      %p240 = pneg %p103
      %p241 = pneg %p100
      %p242 = pneg %p124
      %p243 = pneg %p121
      %p244 = pneg %p156
      %p245 = pneg %p153
      %s246 = smul.u32 %s22, 2
      %s247 = sadd.s32 %s246, %s23
      %s248 = smul.u32 16, %s24
      %p249 = scmp.lt.s32.totalorder %s247, 3
      %s250 = scalar_select %p249, %s247, 3
      %p251 = scmp.lt.s32.totalorder %s248, 31
      %s252 = scalar_select %p251, %s248, 31
      %s253 = smul.addr %s250, 32
      %s254 = sadd.s32 %s252, %s253
      %s255 = smul.addr %s254, 8
      %s256 = scalar_lea.vmem %s4, %s255
      %p257 = pneg %p182
      %p258 = pneg %p179
      %p259 = scmp.lt.s32.totalorder %s22, 1
      %s260 = scalar_select %p259, %s22, 1
      %s261 = smul.addr %s260, 2
      %s262 = scalar_lea.vmem %s5, %s261
      %s263 = smul.u32 %s22, 2
      %s264 = sadd.s32 %s263, %s23
      %p265 = scmp.lt.s32.totalorder %s264, 3
      %s266 = scalar_select %p265, %s264, 3
      %s267 = smul.addr %s266, 33
      %s268 = smul.addr %s267, 8
      %s269 = scalar_lea.vmem %s0, %s268
      %s270 = smul.u32 %s22, 2
      %s271 = sadd.s32 %s270, %s23
      %s272 = smul.u32 %s22, 2
      %s273 = sadd.s32 %s272, %s23
      %s274 = smul.u32 16, %s24
      %p275 = scmp.lt.s32.totalorder %s273, 3
      %s276 = scalar_select %p275, %s273, 3
      %p277 = scmp.lt.s32.totalorder %s274, 31
      %s278 = scalar_select %p277, %s274, 31
      %s279 = smul.addr %s276, 32
      %s280 = sadd.s32 %s278, %s279
      %s281 = smul.addr %s280, 8
      %s282 = scalar_lea.vmem %s4, %s281
      %s283 = smul.u32 %s22, 2
      %s284 = sadd.s32 %s283, %s23
      %s285 = smul.u32 16, %s24
      %p286 = scmp.lt.s32.totalorder %s22, 1
      %s287 = scalar_select %p286, %s22, 1
      %s288 = smul.addr %s287, 2
      %s289 = scalar_lea.vmem %s5, %s288
      %s290 = smul.u32 %s24, 128
      %s291 = scalar_lea.vmem %s269, %s290
      %v292 = vld [vmem:[%s291] sm:$0xff]
      %v293 = vld [vmem:[%s291 + $0x8] sm:$0xff]
      %v294 = vld [vmem:[%s291 + $0x10] sm:$0xff]
      %v295 = vld [vmem:[%s291 + $0x18] sm:$0xff]
      %v296 = vld [vmem:[%s291 + $0x20] sm:$0xff]
      %v297 = vld [vmem:[%s291 + $0x28] sm:$0xff]
      %v298 = vld [vmem:[%s291 + $0x30] sm:$0xff]
      %v299 = vld [vmem:[%s291 + $0x38] sm:$0xff]
      %v300 = vld [vmem:[%s291 + $0x40] sm:$0xff]
      %v301 = vld [vmem:[%s291 + $0x48] sm:$0xff]
      %v302 = vld [vmem:[%s291 + $0x50] sm:$0xff]
      %v303 = vld [vmem:[%s291 + $0x58] sm:$0xff]
      %v304 = vld [vmem:[%s291 + $0x60] sm:$0xff]
      %v305 = vld [vmem:[%s291 + $0x68] sm:$0xff]
      %v306 = vld [vmem:[%s291 + $0x70] sm:$0xff]
      %v307 = vld [vmem:[%s291 + $0x78] sm:$0xff]
      %v308 = vld [vmem:[%s291 + $0x80] sm:$0xff]
      %v309 = vld [vmem:[%s2] sm:$0x1]
      %v311 = vlaneseq
      %v312 = vshrl.u32 %v311, 7
      %v313 = vsub.s32 0, %v312
      %v314 = vrot.slane %v309, %v313
      %v316 = vmul.f32 %v292, %v314
      %v317 = vmul.f32 %v293, %v314
      %v318 = vmul.f32 %v294, %v314
      %v319 = vmul.f32 %v295, %v314
      %v320 = vmul.f32 %v296, %v314
      %v321 = vmul.f32 %v297, %v314
      %v322 = vmul.f32 %v298, %v314
      %v323 = vmul.f32 %v299, %v314
      %v324 = vmul.f32 %v300, %v314
      %v325 = vmul.f32 %v301, %v314
      %v326 = vmul.f32 %v302, %v314
      %v327 = vmul.f32 %v303, %v314
      %v328 = vmul.f32 %v304, %v314
      %v329 = vmul.f32 %v305, %v314
      %v330 = vmul.f32 %v306, %v314
      %v331 = vmul.f32 %v307, %v314
      %v332 = vmul.f32 %v308, %v314
      %v333 = vld [vmem:[%s3] sm:$0x1]
      %v335 = vlaneseq
      %v336 = vshrl.u32 %v335, 7
      %v337 = vsub.s32 0, %v336
      %v338 = vrot.slane %v333, %v337
      %v340 = vadd.f32 %v316, %v338
      %v341 = vadd.f32 %v317, %v338
      %v342 = vadd.f32 %v318, %v338
      %v343 = vadd.f32 %v319, %v338
      %v344 = vadd.f32 %v320, %v338
      %v345 = vadd.f32 %v321, %v338
      %v346 = vadd.f32 %v322, %v338
      %v347 = vadd.f32 %v323, %v338
      %v348 = vadd.f32 %v324, %v338
      %v349 = vadd.f32 %v325, %v338
      %v350 = vadd.f32 %v326, %v338
      %v351 = vadd.f32 %v327, %v338
      %v352 = vadd.f32 %v328, %v338
      %v353 = vadd.f32 %v329, %v338
      %v354 = vadd.f32 %v330, %v338
      %v355 = vadd.f32 %v331, %v338
      %v356 = vadd.f32 %v332, %v338
      %v357 = vmax.f32 %v340, 0.0
      %v358 = vmax.f32 %v341, 0.0
      %v359 = vmax.f32 %v342, 0.0
      %v360 = vmax.f32 %v343, 0.0
      %v361 = vmax.f32 %v344, 0.0
      %v362 = vmax.f32 %v345, 0.0
      %v363 = vmax.f32 %v346, 0.0
      %v364 = vmax.f32 %v347, 0.0
      %v365 = vmax.f32 %v348, 0.0
      %v366 = vmax.f32 %v349, 0.0
      %v367 = vmax.f32 %v350, 0.0
      %v368 = vmax.f32 %v351, 0.0
      %v369 = vmax.f32 %v352, 0.0
      %v370 = vmax.f32 %v353, 0.0
      %v371 = vmax.f32 %v354, 0.0
      %v372 = vmax.f32 %v355, 0.0
      %v373 = vmax.f32 %v356, 0.0
      %v374 = vlaneseq
      %v375 = vshrl.u32 %v374, 7
      %v376 = vadd.s32 %v375, 8
      %v377 = vadd.s32 %v375, 16
      %v378 = vadd.s32 %v375, 24
      %v379 = vadd.s32 %v375, 32
      %v380 = vadd.s32 %v375, 40
      %v381 = vadd.s32 %v375, 48
      %v382 = vadd.s32 %v375, 56
      %v383 = vadd.s32 %v375, 64
      %v384 = vadd.s32 %v375, 72
      %v385 = vadd.s32 %v375, 80
      %v386 = vadd.s32 %v375, 88
      %v387 = vadd.s32 %v375, 96
      %v388 = vadd.s32 %v375, 104
      %v389 = vadd.s32 %v375, 112
      %v390 = vadd.s32 %v375, 120
      %v391 = vadd.s32 %v375, 128
      %v392 = vstv %s290
      %v393 = vadd.s32 %v392, %v375
      %v394 = vadd.s32 %v392, %v376
      %v395 = vadd.s32 %v392, %v377
      %v396 = vadd.s32 %v392, %v378
      %v397 = vadd.s32 %v392, %v379
      %v398 = vadd.s32 %v392, %v380
      %v399 = vadd.s32 %v392, %v381
      %v400 = vadd.s32 %v392, %v382
      %v401 = vadd.s32 %v392, %v383
      %v402 = vadd.s32 %v392, %v384
      %v403 = vadd.s32 %v392, %v385
      %v404 = vadd.s32 %v392, %v386
      %v405 = vadd.s32 %v392, %v387
      %v406 = vadd.s32 %v392, %v388
      %v407 = vadd.s32 %v392, %v389
      %v408 = vadd.s32 %v392, %v390
      %v409 = vadd.s32 %v392, %v391
      %vm410 = vcmp.ge.s32.totalorder %v393, 2
      %vm411 = vcmp.ge.s32.totalorder %v394, 2
      %vm412 = vcmp.ge.s32.totalorder %v395, 2
      %vm413 = vcmp.ge.s32.totalorder %v396, 2
      %vm414 = vcmp.ge.s32.totalorder %v397, 2
      %vm415 = vcmp.ge.s32.totalorder %v398, 2
      %vm416 = vcmp.ge.s32.totalorder %v399, 2
      %vm417 = vcmp.ge.s32.totalorder %v400, 2
      %vm418 = vcmp.ge.s32.totalorder %v401, 2
      %vm419 = vcmp.ge.s32.totalorder %v402, 2
      %vm420 = vcmp.ge.s32.totalorder %v403, 2
      %vm421 = vcmp.ge.s32.totalorder %v404, 2
      %vm422 = vcmp.ge.s32.totalorder %v405, 2
      %vm423 = vcmp.ge.s32.totalorder %v406, 2
      %vm424 = vcmp.ge.s32.totalorder %v407, 2
      %vm425 = vcmp.ge.s32.totalorder %v408, 2
      %vm426 = vcmp.ge.s32.totalorder %v409, 2
      %vm427 = vcmp.lt.s32.totalorder %v393, 258
      %vm428 = vcmp.lt.s32.totalorder %v394, 258
      %vm429 = vcmp.lt.s32.totalorder %v395, 258
      %vm430 = vcmp.lt.s32.totalorder %v396, 258
      %vm431 = vcmp.lt.s32.totalorder %v397, 258
      %vm432 = vcmp.lt.s32.totalorder %v398, 258
      %vm433 = vcmp.lt.s32.totalorder %v399, 258
      %vm434 = vcmp.lt.s32.totalorder %v400, 258
      %vm435 = vcmp.lt.s32.totalorder %v401, 258
      %vm436 = vcmp.lt.s32.totalorder %v402, 258
      %vm437 = vcmp.lt.s32.totalorder %v403, 258
      %vm438 = vcmp.lt.s32.totalorder %v404, 258
      %vm439 = vcmp.lt.s32.totalorder %v405, 258
      %vm440 = vcmp.lt.s32.totalorder %v406, 258
      %vm441 = vcmp.lt.s32.totalorder %v407, 258
      %vm442 = vcmp.lt.s32.totalorder %v408, 258
      %vm443 = vcmp.lt.s32.totalorder %v409, 258
      %vm444 = vmand %vm410, %vm427
      %vm445 = vmand %vm411, %vm428
      %vm446 = vmand %vm412, %vm429
      %vm447 = vmand %vm413, %vm430
      %vm448 = vmand %vm414, %vm431
      %vm449 = vmand %vm415, %vm432
      %vm450 = vmand %vm416, %vm433
      %vm451 = vmand %vm417, %vm434
      %vm452 = vmand %vm418, %vm435
      %vm453 = vmand %vm419, %vm436
      %vm454 = vmand %vm420, %vm437
      %vm455 = vmand %vm421, %vm438
      %vm456 = vmand %vm422, %vm439
      %vm457 = vmand %vm423, %vm440
      %vm458 = vmand %vm424, %vm441
      %vm459 = vmand %vm425, %vm442
      %vm460 = vmand %vm426, %vm443
      %v461 = vsel %vm444, 1, 0
      %v462 = vsel %vm445, 1, 0
      %v463 = vsel %vm446, 1, 0
      %v464 = vsel %vm447, 1, 0
      %v465 = vsel %vm448, 1, 0
      %v466 = vsel %vm449, 1, 0
      %v467 = vsel %vm450, 1, 0
      %v468 = vsel %vm451, 1, 0
      %v469 = vsel %vm452, 1, 0
      %v470 = vsel %vm453, 1, 0
      %v471 = vsel %vm454, 1, 0
      %v472 = vsel %vm455, 1, 0
      %v473 = vsel %vm456, 1, 0
      %v474 = vsel %vm457, 1, 0
      %v475 = vsel %vm458, 1, 0
      %v476 = vsel %vm459, 1, 0
      %v477 = vsel %vm460, 1, 0
      %vm478 = vcmp.eq.s32.totalorder %v461, 1
      %vm479 = vcmp.eq.s32.totalorder %v462, 1
      %vm480 = vcmp.eq.s32.totalorder %v463, 1
      %vm481 = vcmp.eq.s32.totalorder %v464, 1
      %vm482 = vcmp.eq.s32.totalorder %v465, 1
      %vm483 = vcmp.eq.s32.totalorder %v466, 1
      %vm484 = vcmp.eq.s32.totalorder %v467, 1
      %vm485 = vcmp.eq.s32.totalorder %v468, 1
      %vm486 = vcmp.eq.s32.totalorder %v469, 1
      %vm487 = vcmp.eq.s32.totalorder %v470, 1
      %vm488 = vcmp.eq.s32.totalorder %v471, 1
      %vm489 = vcmp.eq.s32.totalorder %v472, 1
      %vm490 = vcmp.eq.s32.totalorder %v473, 1
      %vm491 = vcmp.eq.s32.totalorder %v474, 1
      %vm492 = vcmp.eq.s32.totalorder %v475, 1
      %vm493 = vcmp.eq.s32.totalorder %v476, 1
      %vm494 = vcmp.eq.s32.totalorder %v477, 1
      %v495 = vsel %vm478, %v357, 0.0
      %v496 = vsel %vm479, %v358, 0.0
      %v497 = vsel %vm480, %v359, 0.0
      %v498 = vsel %vm481, %v360, 0.0
      %v499 = vsel %vm482, %v361, 0.0
      %v500 = vsel %vm483, %v362, 0.0
      %v501 = vsel %vm484, %v363, 0.0
      %v502 = vsel %vm485, %v364, 0.0
      %v503 = vsel %vm486, %v365, 0.0
      %v504 = vsel %vm487, %v366, 0.0
      %v505 = vsel %vm488, %v367, 0.0
      %v506 = vsel %vm489, %v368, 0.0
      %v507 = vsel %vm490, %v369, 0.0
      %v508 = vsel %vm491, %v370, 0.0
      %v509 = vsel %vm492, %v371, 0.0
      %v510 = vsel %vm493, %v372, 0.0
      %v511 = vsel %vm494, %v373, 0.0
      %v512 = vld [vmem:[%s1] sm:$0xff]
      %v513 = vld [vmem:[%s1 + $0x8] sm:$0xff]
      %v514 = vld [vmem:[%s1 + $0x10] sm:$0xff]
      %v515 = vld [vmem:[%s1 + $0x18] sm:$0xff]
      %v516 = vld [vmem:[%s1 + $0x20] sm:$0xff]
      %v517 = vld [vmem:[%s1 + $0x28] sm:$0xff]
      %v518 = vld [vmem:[%s1 + $0x30] sm:$0xff]
      %v519 = vld [vmem:[%s1 + $0x38] sm:$0xff]
      %v520 = vld [vmem:[%s1 + $0x40] sm:$0xff]
      %v521 = vld [vmem:[%s1 + $0x48] sm:$0xff]
      %v522 = vld [vmem:[%s1 + $0x50] sm:$0xff]
      %v523 = vld [vmem:[%s1 + $0x58] sm:$0xff]
      %v524 = vld [vmem:[%s1 + $0x60] sm:$0xff]
      %v525 = vld [vmem:[%s1 + $0x68] sm:$0xff]
      %v526 = vld [vmem:[%s1 + $0x70] sm:$0xff]
      %v527 = vld [vmem:[%s1 + $0x78] sm:$0xff]
      %s528 = scalar_lea.vmem %s1, 128
      %v529 = vld [vmem:[%s528] sm:$0xff]
      %v530 = vld [vmem:[%s528 + $0x8] sm:$0xff]
      %v531 = vld [vmem:[%s528 + $0x10] sm:$0xff]
      %v532 = vld [vmem:[%s528 + $0x18] sm:$0xff]
      %v533 = vld [vmem:[%s528 + $0x20] sm:$0xff]
      %v534 = vld [vmem:[%s528 + $0x28] sm:$0xff]
      %v535 = vld [vmem:[%s528 + $0x30] sm:$0xff]
      %v536 = vld [vmem:[%s528 + $0x38] sm:$0xff]
      %v537 = vld [vmem:[%s528 + $0x40] sm:$0xff]
      %v538 = vld [vmem:[%s528 + $0x48] sm:$0xff]
      %v539 = vld [vmem:[%s528 + $0x50] sm:$0xff]
      %v540 = vld [vmem:[%s528 + $0x58] sm:$0xff]
      %v541 = vld [vmem:[%s528 + $0x60] sm:$0xff]
      %v542 = vld [vmem:[%s528 + $0x68] sm:$0xff]
      %v543 = vld [vmem:[%s528 + $0x70] sm:$0xff]
      %v544 = vld [vmem:[%s528 + $0x78] sm:$0xff]
      %vm562 = vcmask 1046528
      %v563 = vrot.slane %v495, 1
      %v564 = vrot.slane %v496, 1
      %v565 = vsel %vm562, %v563, %v564
      %v566 = vrot.slane %v497, 1
      %v567 = vsel %vm562, %v564, %v566
      %v568 = vrot.slane %v498, 1
      %v569 = vsel %vm562, %v566, %v568
      %v570 = vrot.slane %v499, 1
      %v571 = vsel %vm562, %v568, %v570
      %v572 = vrot.slane %v500, 1
      %v573 = vsel %vm562, %v570, %v572
      %v574 = vrot.slane %v501, 1
      %v575 = vsel %vm562, %v572, %v574
      %v576 = vrot.slane %v502, 1
      %v577 = vsel %vm562, %v574, %v576
      %v578 = vrot.slane %v503, 1
      %v579 = vsel %vm562, %v576, %v578
      %v580 = vrot.slane %v504, 1
      %v581 = vsel %vm562, %v578, %v580
      %v582 = vrot.slane %v505, 1
      %v583 = vsel %vm562, %v580, %v582
      %v584 = vrot.slane %v506, 1
      %v585 = vsel %vm562, %v582, %v584
      %v586 = vrot.slane %v507, 1
      %v587 = vsel %vm562, %v584, %v586
      %v588 = vrot.slane %v508, 1
      %v589 = vsel %vm562, %v586, %v588
      %v590 = vrot.slane %v509, 1
      %v591 = vsel %vm562, %v588, %v590
      %v592 = vrot.slane %v510, 1
      %v593 = vsel %vm562, %v590, %v592
      %v594 = vrot.slane %v511, 1
      %v595 = vsel %vm562, %v592, %v594
      %612 = vmatprep.subr.mxu0 0.0
      %613 = vmatpush1.msra.mxu0 %v529
      %614 = vmatprep.subr.mxu0 0.0
      %615 = vmatpush1.msra.mxu0 %v530
      %616 = vmatprep.subr.mxu0 0.0
      %617 = vmatpush1.msra.mxu0 %v531
      %618 = vmatprep.subr.mxu0 0.0
      %619 = vmatpush1.msra.mxu0 %v532
      %620 = vmatprep.subr.mxu0 0.0
      %621 = vmatpush1.msra.mxu0 %v533
      %622 = vmatprep.subr.mxu0 0.0
      %623 = vmatpush1.msra.mxu0 %v534
      %624 = vmatprep.subr.mxu0 0.0
      %625 = vmatpush1.msra.mxu0 %v535
      %626 = vmatprep.subr.mxu0 0.0
      %627 = vmatpush1.msra.mxu0 %v536
      %628 = vmatprep.subr.mxu0 0.0
      %629 = vmatpush1.msra.mxu0 %v537
      %630 = vmatprep.subr.mxu0 0.0
      %631 = vmatpush1.msra.mxu0 %v538
      %632 = vmatprep.subr.mxu0 0.0
      %633 = vmatpush1.msra.mxu0 %v539
      %634 = vmatprep.subr.mxu0 0.0
      %635 = vmatpush1.msra.mxu0 %v540
      %636 = vmatprep.subr.mxu0 0.0
      %637 = vmatpush1.msra.mxu0 %v541
      %638 = vmatprep.subr.mxu0 0.0
      %639 = vmatpush1.msra.mxu0 %v542
      %640 = vmatprep.subr.mxu0 0.0
      %641 = vmatpush1.msra.mxu0 %v543
      %642 = vmatprep.subr.mxu0 0.0
      %643 = vmatpush1.msra.mxu0 %v544
      %644 = vmatprep.subr.mxu0 0.0
      %645 = vmatpush1.msra.mxu0 0.0
      %646 = vmatprep.subr.mxu0 0.0
      %647 = vmatpush1.msra.mxu0 0.0
      %648 = vmatprep.subr.mxu0 0.0
      %649 = vmatpush1.msra.mxu0 0.0
      %650 = vmatprep.subr.mxu0 0.0
      %651 = vmatpush1.msra.mxu0 0.0
      %652 = vmatprep.subr.mxu0 0.0
      %653 = vmatpush1.msra.mxu0 0.0
      %654 = vmatprep.subr.mxu0 0.0
      %655 = vmatpush1.msra.mxu0 0.0
      %656 = vmatprep.subr.mxu0 0.0
      %657 = vmatpush1.msra.mxu0 0.0
      %658 = vmatprep.subr.mxu0 0.0
      %659 = vmatpush1.msra.mxu0 0.0
      %660 = vmatprep.subr.mxu0 0.0
      %661 = vmatpush1.msra.mxu0 0.0
      %662 = vmatprep.subr.mxu0 0.0
      %663 = vmatpush1.msra.mxu0 0.0
      %664 = vmatprep.subr.mxu0 0.0
      %665 = vmatpush1.msra.mxu0 0.0
      %666 = vmatprep.subr.mxu0 0.0
      %667 = vmatpush1.msra.mxu0 0.0
      %668 = vmatprep.subr.mxu0 0.0
      %669 = vmatpush1.msra.mxu0 0.0
      %670 = vmatprep.subr.mxu0 0.0
      %671 = vmatpush1.msra.mxu0 0.0
      %672 = vmatprep.subr.mxu0 0.0
      %673 = vmatpush1.msra.mxu0 0.0
      %674 = vmatprep.subr.mxu0 0.0
      %675 = vmatpush1.msra.mxu0 0.0
      %676 = vmatprep.mubr.f32.mxu0 0.0
      %677 = vmatmul.mubr.f32.gmra.mrb[0].mxu0 %v565
      %v678 = vpop.f32.mrb[0].mxu0
      %v679 = vadd.f32 0.0, %v678
      %v680 = vpop.f32.mrb[0].mxu0
      %681 = vmatprep.mubr.f32.mxu0 0.0
      %682 = vmatmul.mubr.f32.gmra.mrb[0].mxu0 %v567
      %v683 = vpop.f32.mrb[0].mxu0
      %v684 = vadd.f32 0.0, %v683
      %v685 = vpop.f32.mrb[0].mxu0
      %686 = vmatprep.mubr.f32.mxu0 0.0
      %687 = vmatmul.mubr.f32.gmra.mrb[0].mxu0 %v569
      %v688 = vpop.f32.mrb[0].mxu0
      %v689 = vadd.f32 0.0, %v688
      %v690 = vpop.f32.mrb[0].mxu0
      %691 = vmatprep.mubr.f32.mxu0 0.0
      %692 = vmatmul.mubr.f32.gmra.mrb[0].mxu0 %v571
      %v693 = vpop.f32.mrb[0].mxu0
      %v694 = vadd.f32 0.0, %v693
      %v695 = vpop.f32.mrb[0].mxu0
      %696 = vmatprep.mubr.f32.mxu0 0.0
      %697 = vmatmul.mubr.f32.gmra.mrb[0].mxu0 %v573
      %v698 = vpop.f32.mrb[0].mxu0
      %v699 = vadd.f32 0.0, %v698
      %v700 = vpop.f32.mrb[0].mxu0
      %701 = vmatprep.mubr.f32.mxu0 0.0
      %702 = vmatmul.mubr.f32.gmra.mrb[0].mxu0 %v575
      %v703 = vpop.f32.mrb[0].mxu0
      %v704 = vadd.f32 0.0, %v703
      %v705 = vpop.f32.mrb[0].mxu0
      %706 = vmatprep.mubr.f32.mxu0 0.0
      %707 = vmatmul.mubr.f32.gmra.mrb[0].mxu0 %v577
      %v708 = vpop.f32.mrb[0].mxu0
      %v709 = vadd.f32 0.0, %v708
      %v710 = vpop.f32.mrb[0].mxu0
      %711 = vmatprep.mubr.f32.mxu0 0.0
      %712 = vmatmul.mubr.f32.gmra.mrb[0].mxu0 %v579
      %v713 = vpop.f32.mrb[0].mxu0
      %v714 = vadd.f32 0.0, %v713
      %v715 = vpop.f32.mrb[0].mxu0
      %716 = vmatprep.mubr.f32.mxu0 0.0
      %717 = vmatmul.mubr.f32.gmra.mrb[0].mxu0 %v581
      %v718 = vpop.f32.mrb[0].mxu0
      %v719 = vadd.f32 0.0, %v718
      %v720 = vpop.f32.mrb[0].mxu0
      %721 = vmatprep.mubr.f32.mxu0 0.0
      %722 = vmatmul.mubr.f32.gmra.mrb[0].mxu0 %v583
      %v723 = vpop.f32.mrb[0].mxu0
      %v724 = vadd.f32 0.0, %v723
      %v725 = vpop.f32.mrb[0].mxu0
      %726 = vmatprep.mubr.f32.mxu0 0.0
      %727 = vmatmul.mubr.f32.gmra.mrb[0].mxu0 %v585
      %v728 = vpop.f32.mrb[0].mxu0
      %v729 = vadd.f32 0.0, %v728
      %v730 = vpop.f32.mrb[0].mxu0
      %731 = vmatprep.mubr.f32.mxu0 0.0
      %732 = vmatmul.mubr.f32.gmra.mrb[0].mxu0 %v587
      %v733 = vpop.f32.mrb[0].mxu0
      %v734 = vadd.f32 0.0, %v733
      %v735 = vpop.f32.mrb[0].mxu0
      %736 = vmatprep.mubr.f32.mxu0 0.0
      %737 = vmatmul.mubr.f32.gmra.mrb[0].mxu0 %v589
      %v738 = vpop.f32.mrb[0].mxu0
      %v739 = vadd.f32 0.0, %v738
      %v740 = vpop.f32.mrb[0].mxu0
      %741 = vmatprep.mubr.f32.mxu0 0.0
      %742 = vmatmul.mubr.f32.gmra.mrb[0].mxu0 %v591
      %v743 = vpop.f32.mrb[0].mxu0
      %v744 = vadd.f32 0.0, %v743
      %v745 = vpop.f32.mrb[0].mxu0
      %746 = vmatprep.mubr.f32.mxu0 0.0
      %747 = vmatmul.mubr.f32.gmra.mrb[0].mxu0 %v593
      %v748 = vpop.f32.mrb[0].mxu0
      %v749 = vadd.f32 0.0, %v748
      %v750 = vpop.f32.mrb[0].mxu0
      %751 = vmatprep.mubr.f32.mxu0 0.0
      %752 = vmatmul.mubr.f32.gmra.mrb[0].mxu0 %v595
      %v753 = vpop.f32.mrb[0].mxu0
      %v754 = vadd.f32 0.0, %v753
      %v755 = vpop.f32.mrb[0].mxu0
      %756 = vdwg.mxu0
      %757 = vmatprep.subr.mxu0 0.0
      %758 = vmatpush1.msra.mxu0 %v512
      %759 = vmatprep.subr.mxu0 0.0
      %760 = vmatpush1.msra.mxu0 %v513
      %761 = vmatprep.subr.mxu0 0.0
      %762 = vmatpush1.msra.mxu0 %v514
      %763 = vmatprep.subr.mxu0 0.0
      %764 = vmatpush1.msra.mxu0 %v515
      %765 = vmatprep.subr.mxu0 0.0
      %766 = vmatpush1.msra.mxu0 %v516
      %767 = vmatprep.subr.mxu0 0.0
      %768 = vmatpush1.msra.mxu0 %v517
      %769 = vmatprep.subr.mxu0 0.0
      %770 = vmatpush1.msra.mxu0 %v518
      %771 = vmatprep.subr.mxu0 0.0
      %772 = vmatpush1.msra.mxu0 %v519
      %773 = vmatprep.subr.mxu0 0.0
      %774 = vmatpush1.msra.mxu0 %v520
      %775 = vmatprep.subr.mxu0 0.0
      %776 = vmatpush1.msra.mxu0 %v521
      %777 = vmatprep.subr.mxu0 0.0
      %778 = vmatpush1.msra.mxu0 %v522
      %779 = vmatprep.subr.mxu0 0.0
      %780 = vmatpush1.msra.mxu0 %v523
      %781 = vmatprep.subr.mxu0 0.0
      %782 = vmatpush1.msra.mxu0 %v524
      %783 = vmatprep.subr.mxu0 0.0
      %784 = vmatpush1.msra.mxu0 %v525
      %785 = vmatprep.subr.mxu0 0.0
      %786 = vmatpush1.msra.mxu0 %v526
      %787 = vmatprep.subr.mxu0 0.0
      %788 = vmatpush1.msra.mxu0 %v527
      %789 = vmatprep.subr.mxu0 0.0
      %790 = vmatpush1.msra.mxu0 0.0
      %791 = vmatprep.subr.mxu0 0.0
      %792 = vmatpush1.msra.mxu0 0.0
      %793 = vmatprep.subr.mxu0 0.0
      %794 = vmatpush1.msra.mxu0 0.0
      %795 = vmatprep.subr.mxu0 0.0
      %796 = vmatpush1.msra.mxu0 0.0
      %797 = vmatprep.subr.mxu0 0.0
      %798 = vmatpush1.msra.mxu0 0.0
      %799 = vmatprep.subr.mxu0 0.0
      %800 = vmatpush1.msra.mxu0 0.0
      %801 = vmatprep.subr.mxu0 0.0
      %802 = vmatpush1.msra.mxu0 0.0
      %803 = vmatprep.subr.mxu0 0.0
      %804 = vmatpush1.msra.mxu0 0.0
      %805 = vmatprep.subr.mxu0 0.0
      %806 = vmatpush1.msra.mxu0 0.0
      %807 = vmatprep.subr.mxu0 0.0
      %808 = vmatpush1.msra.mxu0 0.0
      %809 = vmatprep.subr.mxu0 0.0
      %810 = vmatpush1.msra.mxu0 0.0
      %811 = vmatprep.subr.mxu0 0.0
      %812 = vmatpush1.msra.mxu0 0.0
      %813 = vmatprep.subr.mxu0 0.0
      %814 = vmatpush1.msra.mxu0 0.0
      %815 = vmatprep.subr.mxu0 0.0
      %816 = vmatpush1.msra.mxu0 0.0
      %817 = vmatprep.subr.mxu0 0.0
      %818 = vmatpush1.msra.mxu0 0.0
      %819 = vmatprep.subr.mxu0 0.0
      %820 = vmatpush1.msra.mxu0 0.0
      %821 = vmatprep.mubr.f32.mxu0 0.0
      %822 = vmatmul.mubr.f32.gmra.mrb[0].mxu0 %v495
      %v823 = vpop.f32.mrb[0].mxu0
      %v824 = vadd.f32 %v679, %v823
      %v825 = vpop.f32.mrb[0].mxu0
      %826 = vmatprep.mubr.f32.mxu0 0.0
      %827 = vmatmul.mubr.f32.gmra.mrb[0].mxu0 %v496
      %v828 = vpop.f32.mrb[0].mxu0
      %v829 = vadd.f32 %v684, %v828
      %v830 = vpop.f32.mrb[0].mxu0
      %831 = vmatprep.mubr.f32.mxu0 0.0
      %832 = vmatmul.mubr.f32.gmra.mrb[0].mxu0 %v497
      %v833 = vpop.f32.mrb[0].mxu0
      %v834 = vadd.f32 %v689, %v833
      %v835 = vpop.f32.mrb[0].mxu0
      %836 = vmatprep.mubr.f32.mxu0 0.0
      %837 = vmatmul.mubr.f32.gmra.mrb[0].mxu0 %v498
      %v838 = vpop.f32.mrb[0].mxu0
      %v839 = vadd.f32 %v694, %v838
      %v840 = vpop.f32.mrb[0].mxu0
      %841 = vmatprep.mubr.f32.mxu0 0.0
      %842 = vmatmul.mubr.f32.gmra.mrb[0].mxu0 %v499
      %v843 = vpop.f32.mrb[0].mxu0
      %v844 = vadd.f32 %v699, %v843
      %v845 = vpop.f32.mrb[0].mxu0
      %846 = vmatprep.mubr.f32.mxu0 0.0
      %847 = vmatmul.mubr.f32.gmra.mrb[0].mxu0 %v500
      %v848 = vpop.f32.mrb[0].mxu0
      %v849 = vadd.f32 %v704, %v848
      %v850 = vpop.f32.mrb[0].mxu0
      %851 = vmatprep.mubr.f32.mxu0 0.0
      %852 = vmatmul.mubr.f32.gmra.mrb[0].mxu0 %v501
      %v853 = vpop.f32.mrb[0].mxu0
      %v854 = vadd.f32 %v709, %v853
      %v855 = vpop.f32.mrb[0].mxu0
      %856 = vmatprep.mubr.f32.mxu0 0.0
      %857 = vmatmul.mubr.f32.gmra.mrb[0].mxu0 %v502
      %v858 = vpop.f32.mrb[0].mxu0
      %v859 = vadd.f32 %v714, %v858
      %v860 = vpop.f32.mrb[0].mxu0
      %861 = vmatprep.mubr.f32.mxu0 0.0
      %862 = vmatmul.mubr.f32.gmra.mrb[0].mxu0 %v503
      %v863 = vpop.f32.mrb[0].mxu0
      %v864 = vadd.f32 %v719, %v863
      %v865 = vpop.f32.mrb[0].mxu0
      %866 = vmatprep.mubr.f32.mxu0 0.0
      %867 = vmatmul.mubr.f32.gmra.mrb[0].mxu0 %v504
      %v868 = vpop.f32.mrb[0].mxu0
      %v869 = vadd.f32 %v724, %v868
      %v870 = vpop.f32.mrb[0].mxu0
      %871 = vmatprep.mubr.f32.mxu0 0.0
      %872 = vmatmul.mubr.f32.gmra.mrb[0].mxu0 %v505
      %v873 = vpop.f32.mrb[0].mxu0
      %v874 = vadd.f32 %v729, %v873
      %v875 = vpop.f32.mrb[0].mxu0
      %876 = vmatprep.mubr.f32.mxu0 0.0
      %877 = vmatmul.mubr.f32.gmra.mrb[0].mxu0 %v506
      %v878 = vpop.f32.mrb[0].mxu0
      %v879 = vadd.f32 %v734, %v878
      %v880 = vpop.f32.mrb[0].mxu0
      %881 = vmatprep.mubr.f32.mxu0 0.0
      %882 = vmatmul.mubr.f32.gmra.mrb[0].mxu0 %v507
      %v883 = vpop.f32.mrb[0].mxu0
      %v884 = vadd.f32 %v739, %v883
      %v885 = vpop.f32.mrb[0].mxu0
      %886 = vmatprep.mubr.f32.mxu0 0.0
      %887 = vmatmul.mubr.f32.gmra.mrb[0].mxu0 %v508
      %v888 = vpop.f32.mrb[0].mxu0
      %v889 = vadd.f32 %v744, %v888
      %v890 = vpop.f32.mrb[0].mxu0
      %891 = vmatprep.mubr.f32.mxu0 0.0
      %892 = vmatmul.mubr.f32.gmra.mrb[0].mxu0 %v509
      %v893 = vpop.f32.mrb[0].mxu0
      %v894 = vadd.f32 %v749, %v893
      %v895 = vpop.f32.mrb[0].mxu0
      %896 = vmatprep.mubr.f32.mxu0 0.0
      %897 = vmatmul.mubr.f32.gmra.mrb[0].mxu0 %v510
      %v898 = vpop.f32.mrb[0].mxu0
      %v899 = vadd.f32 %v754, %v898
      %v900 = vpop.f32.mrb[0].mxu0
      %901 = vdwg.mxu0
      %s902 = scalar_lea.vmem %s1, 256
      %v903 = vld [vmem:[%s902] sm:$0xff]
      %v904 = vld [vmem:[%s902 + $0x8] sm:$0xff]
      %v905 = vld [vmem:[%s902 + $0x10] sm:$0xff]
      %v906 = vld [vmem:[%s902 + $0x18] sm:$0xff]
      %v907 = vld [vmem:[%s902 + $0x20] sm:$0xff]
      %v908 = vld [vmem:[%s902 + $0x28] sm:$0xff]
      %v909 = vld [vmem:[%s902 + $0x30] sm:$0xff]
      %v910 = vld [vmem:[%s902 + $0x38] sm:$0xff]
      %v911 = vld [vmem:[%s902 + $0x40] sm:$0xff]
      %v912 = vld [vmem:[%s902 + $0x48] sm:$0xff]
      %v913 = vld [vmem:[%s902 + $0x50] sm:$0xff]
      %v914 = vld [vmem:[%s902 + $0x58] sm:$0xff]
      %v915 = vld [vmem:[%s902 + $0x60] sm:$0xff]
      %v916 = vld [vmem:[%s902 + $0x68] sm:$0xff]
      %v917 = vld [vmem:[%s902 + $0x70] sm:$0xff]
      %v918 = vld [vmem:[%s902 + $0x78] sm:$0xff]
      %vm919 = vcmask 1045504
      %v920 = vrot.slane %v495, 2
      %v921 = vrot.slane %v496, 2
      %v922 = vsel %vm919, %v920, %v921
      %v923 = vrot.slane %v497, 2
      %v924 = vsel %vm919, %v921, %v923
      %v925 = vrot.slane %v498, 2
      %v926 = vsel %vm919, %v923, %v925
      %v927 = vrot.slane %v499, 2
      %v928 = vsel %vm919, %v925, %v927
      %v929 = vrot.slane %v500, 2
      %v930 = vsel %vm919, %v927, %v929
      %v931 = vrot.slane %v501, 2
      %v932 = vsel %vm919, %v929, %v931
      %v933 = vrot.slane %v502, 2
      %v934 = vsel %vm919, %v931, %v933
      %v935 = vrot.slane %v503, 2
      %v936 = vsel %vm919, %v933, %v935
      %v937 = vrot.slane %v504, 2
      %v938 = vsel %vm919, %v935, %v937
      %v939 = vrot.slane %v505, 2
      %v940 = vsel %vm919, %v937, %v939
      %v941 = vrot.slane %v506, 2
      %v942 = vsel %vm919, %v939, %v941
      %v943 = vrot.slane %v507, 2
      %v944 = vsel %vm919, %v941, %v943
      %v945 = vrot.slane %v508, 2
      %v946 = vsel %vm919, %v943, %v945
      %v947 = vrot.slane %v509, 2
      %v948 = vsel %vm919, %v945, %v947
      %v949 = vrot.slane %v510, 2
      %v950 = vsel %vm919, %v947, %v949
      %v951 = vrot.slane %v511, 2
      %v952 = vsel %vm919, %v949, %v951
      %969 = vmatprep.subr.mxu0 0.0
      %970 = vmatpush1.msra.mxu0 %v903
      %971 = vmatprep.subr.mxu0 0.0
      %972 = vmatpush1.msra.mxu0 %v904
      %973 = vmatprep.subr.mxu0 0.0
      %974 = vmatpush1.msra.mxu0 %v905
      %975 = vmatprep.subr.mxu0 0.0
      %976 = vmatpush1.msra.mxu0 %v906
      %977 = vmatprep.subr.mxu0 0.0
      %978 = vmatpush1.msra.mxu0 %v907
      %979 = vmatprep.subr.mxu0 0.0
      %980 = vmatpush1.msra.mxu0 %v908
      %981 = vmatprep.subr.mxu0 0.0
      %982 = vmatpush1.msra.mxu0 %v909
      %983 = vmatprep.subr.mxu0 0.0
      %984 = vmatpush1.msra.mxu0 %v910
      %985 = vmatprep.subr.mxu0 0.0
      %986 = vmatpush1.msra.mxu0 %v911
      %987 = vmatprep.subr.mxu0 0.0
      %988 = vmatpush1.msra.mxu0 %v912
      %989 = vmatprep.subr.mxu0 0.0
      %990 = vmatpush1.msra.mxu0 %v913
      %991 = vmatprep.subr.mxu0 0.0
      %992 = vmatpush1.msra.mxu0 %v914
      %993 = vmatprep.subr.mxu0 0.0
      %994 = vmatpush1.msra.mxu0 %v915
      %995 = vmatprep.subr.mxu0 0.0
      %996 = vmatpush1.msra.mxu0 %v916
      %997 = vmatprep.subr.mxu0 0.0
      %998 = vmatpush1.msra.mxu0 %v917
      %999 = vmatprep.subr.mxu0 0.0
      %1000 = vmatpush1.msra.mxu0 %v918
      %1001 = vmatprep.subr.mxu0 0.0
      %1002 = vmatpush1.msra.mxu0 0.0
      %1003 = vmatprep.subr.mxu0 0.0
      %1004 = vmatpush1.msra.mxu0 0.0
      %1005 = vmatprep.subr.mxu0 0.0
      %1006 = vmatpush1.msra.mxu0 0.0
      %1007 = vmatprep.subr.mxu0 0.0
      %1008 = vmatpush1.msra.mxu0 0.0
      %1009 = vmatprep.subr.mxu0 0.0
      %1010 = vmatpush1.msra.mxu0 0.0
      %1011 = vmatprep.subr.mxu0 0.0
      %1012 = vmatpush1.msra.mxu0 0.0
      %1013 = vmatprep.subr.mxu0 0.0
      %1014 = vmatpush1.msra.mxu0 0.0
      %1015 = vmatprep.subr.mxu0 0.0
      %1016 = vmatpush1.msra.mxu0 0.0
      %1017 = vmatprep.subr.mxu0 0.0
      %1018 = vmatpush1.msra.mxu0 0.0
      %1019 = vmatprep.subr.mxu0 0.0
      %1020 = vmatpush1.msra.mxu0 0.0
      %1021 = vmatprep.subr.mxu0 0.0
      %1022 = vmatpush1.msra.mxu0 0.0
      %1023 = vmatprep.subr.mxu0 0.0
      %1024 = vmatpush1.msra.mxu0 0.0
      %1025 = vmatprep.subr.mxu0 0.0
      %1026 = vmatpush1.msra.mxu0 0.0
      %1027 = vmatprep.subr.mxu0 0.0
      %1028 = vmatpush1.msra.mxu0 0.0
      %1029 = vmatprep.subr.mxu0 0.0
      %1030 = vmatpush1.msra.mxu0 0.0
      %1031 = vmatprep.subr.mxu0 0.0
      %1032 = vmatpush1.msra.mxu0 0.0
      %1033 = vmatprep.mubr.f32.mxu0 0.0
      %1034 = vmatmul.mubr.f32.gmra.mrb[0].mxu0 %v922
      %v1035 = vpop.f32.mrb[0].mxu0
      %v1036 = vadd.f32 0.0, %v1035
      %v1037 = vpop.f32.mrb[0].mxu0
      %1038 = vmatprep.mubr.f32.mxu0 0.0
      %1039 = vmatmul.mubr.f32.gmra.mrb[0].mxu0 %v924
      %v1040 = vpop.f32.mrb[0].mxu0
      %v1041 = vadd.f32 0.0, %v1040
      %v1042 = vpop.f32.mrb[0].mxu0
      %1043 = vmatprep.mubr.f32.mxu0 0.0
      %1044 = vmatmul.mubr.f32.gmra.mrb[0].mxu0 %v926
      %v1045 = vpop.f32.mrb[0].mxu0
      %v1046 = vadd.f32 0.0, %v1045
      %v1047 = vpop.f32.mrb[0].mxu0
      %1048 = vmatprep.mubr.f32.mxu0 0.0
      %1049 = vmatmul.mubr.f32.gmra.mrb[0].mxu0 %v928
      %v1050 = vpop.f32.mrb[0].mxu0
      %v1051 = vadd.f32 0.0, %v1050
      %v1052 = vpop.f32.mrb[0].mxu0
      %1053 = vmatprep.mubr.f32.mxu0 0.0
      %1054 = vmatmul.mubr.f32.gmra.mrb[0].mxu0 %v930
      %v1055 = vpop.f32.mrb[0].mxu0
      %v1056 = vadd.f32 0.0, %v1055
      %v1057 = vpop.f32.mrb[0].mxu0
      %1058 = vmatprep.mubr.f32.mxu0 0.0
      %1059 = vmatmul.mubr.f32.gmra.mrb[0].mxu0 %v932
      %v1060 = vpop.f32.mrb[0].mxu0
      %v1061 = vadd.f32 0.0, %v1060
      %v1062 = vpop.f32.mrb[0].mxu0
      %1063 = vmatprep.mubr.f32.mxu0 0.0
      %1064 = vmatmul.mubr.f32.gmra.mrb[0].mxu0 %v934
      %v1065 = vpop.f32.mrb[0].mxu0
      %v1066 = vadd.f32 0.0, %v1065
      %v1067 = vpop.f32.mrb[0].mxu0
      %1068 = vmatprep.mubr.f32.mxu0 0.0
      %1069 = vmatmul.mubr.f32.gmra.mrb[0].mxu0 %v936
      %v1070 = vpop.f32.mrb[0].mxu0
      %v1071 = vadd.f32 0.0, %v1070
      %v1072 = vpop.f32.mrb[0].mxu0
      %1073 = vmatprep.mubr.f32.mxu0 0.0
      %1074 = vmatmul.mubr.f32.gmra.mrb[0].mxu0 %v938
      %v1075 = vpop.f32.mrb[0].mxu0
      %v1076 = vadd.f32 0.0, %v1075
      %v1077 = vpop.f32.mrb[0].mxu0
      %1078 = vmatprep.mubr.f32.mxu0 0.0
      %1079 = vmatmul.mubr.f32.gmra.mrb[0].mxu0 %v940
      %v1080 = vpop.f32.mrb[0].mxu0
      %v1081 = vadd.f32 0.0, %v1080
      %v1082 = vpop.f32.mrb[0].mxu0
      %1083 = vmatprep.mubr.f32.mxu0 0.0
      %1084 = vmatmul.mubr.f32.gmra.mrb[0].mxu0 %v942
      %v1085 = vpop.f32.mrb[0].mxu0
      %v1086 = vadd.f32 0.0, %v1085
      %v1087 = vpop.f32.mrb[0].mxu0
      %1088 = vmatprep.mubr.f32.mxu0 0.0
      %1089 = vmatmul.mubr.f32.gmra.mrb[0].mxu0 %v944
      %v1090 = vpop.f32.mrb[0].mxu0
      %v1091 = vadd.f32 0.0, %v1090
      %v1092 = vpop.f32.mrb[0].mxu0
      %1093 = vmatprep.mubr.f32.mxu0 0.0
      %1094 = vmatmul.mubr.f32.gmra.mrb[0].mxu0 %v946
      %v1095 = vpop.f32.mrb[0].mxu0
      %v1096 = vadd.f32 0.0, %v1095
      %v1097 = vpop.f32.mrb[0].mxu0
      %1098 = vmatprep.mubr.f32.mxu0 0.0
      %1099 = vmatmul.mubr.f32.gmra.mrb[0].mxu0 %v948
      %v1100 = vpop.f32.mrb[0].mxu0
      %v1101 = vadd.f32 0.0, %v1100
      %v1102 = vpop.f32.mrb[0].mxu0
      %1103 = vmatprep.mubr.f32.mxu0 0.0
      %1104 = vmatmul.mubr.f32.gmra.mrb[0].mxu0 %v950
      %v1105 = vpop.f32.mrb[0].mxu0
      %v1106 = vadd.f32 0.0, %v1105
      %v1107 = vpop.f32.mrb[0].mxu0
      %1108 = vmatprep.mubr.f32.mxu0 0.0
      %1109 = vmatmul.mubr.f32.gmra.mrb[0].mxu0 %v952
      %v1110 = vpop.f32.mrb[0].mxu0
      %v1111 = vadd.f32 0.0, %v1110
      %v1112 = vpop.f32.mrb[0].mxu0
      %1113 = vdwg.mxu0
      %v1114 = vadd.f32 %v824, %v1036
      %v1115 = vadd.f32 %v829, %v1041
      %v1116 = vadd.f32 %v834, %v1046
      %v1117 = vadd.f32 %v839, %v1051
      %v1118 = vadd.f32 %v844, %v1056
      %v1119 = vadd.f32 %v849, %v1061
      %v1120 = vadd.f32 %v854, %v1066
      %v1121 = vadd.f32 %v859, %v1071
      %v1122 = vadd.f32 %v864, %v1076
      %v1123 = vadd.f32 %v869, %v1081
      %v1124 = vadd.f32 %v874, %v1086
      %v1125 = vadd.f32 %v879, %v1091
      %v1126 = vadd.f32 %v884, %v1096
      %v1127 = vadd.f32 %v889, %v1101
      %v1128 = vadd.f32 %v894, %v1106
      %v1129 = vadd.f32 %v899, %v1111
      %s1130 = scalar_lea.vmem %s1, 384
      %v1131 = vld [vmem:[%s1130] sm:$0xff]
      %v1132 = vld [vmem:[%s1130 + $0x8] sm:$0xff]
      %v1133 = vld [vmem:[%s1130 + $0x10] sm:$0xff]
      %v1134 = vld [vmem:[%s1130 + $0x18] sm:$0xff]
      %v1135 = vld [vmem:[%s1130 + $0x20] sm:$0xff]
      %v1136 = vld [vmem:[%s1130 + $0x28] sm:$0xff]
      %v1137 = vld [vmem:[%s1130 + $0x30] sm:$0xff]
      %v1138 = vld [vmem:[%s1130 + $0x38] sm:$0xff]
      %v1139 = vld [vmem:[%s1130 + $0x40] sm:$0xff]
      %v1140 = vld [vmem:[%s1130 + $0x48] sm:$0xff]
      %v1141 = vld [vmem:[%s1130 + $0x50] sm:$0xff]
      %v1142 = vld [vmem:[%s1130 + $0x58] sm:$0xff]
      %v1143 = vld [vmem:[%s1130 + $0x60] sm:$0xff]
      %v1144 = vld [vmem:[%s1130 + $0x68] sm:$0xff]
      %v1145 = vld [vmem:[%s1130 + $0x70] sm:$0xff]
      %v1146 = vld [vmem:[%s1130 + $0x78] sm:$0xff]
      %vm1147 = vcmask 1044480
      %v1148 = vrot.slane %v495, 3
      %v1149 = vrot.slane %v496, 3
      %v1150 = vsel %vm1147, %v1148, %v1149
      %v1151 = vrot.slane %v497, 3
      %v1152 = vsel %vm1147, %v1149, %v1151
      %v1153 = vrot.slane %v498, 3
      %v1154 = vsel %vm1147, %v1151, %v1153
      %v1155 = vrot.slane %v499, 3
      %v1156 = vsel %vm1147, %v1153, %v1155
      %v1157 = vrot.slane %v500, 3
      %v1158 = vsel %vm1147, %v1155, %v1157
      %v1159 = vrot.slane %v501, 3
      %v1160 = vsel %vm1147, %v1157, %v1159
      %v1161 = vrot.slane %v502, 3
      %v1162 = vsel %vm1147, %v1159, %v1161
      %v1163 = vrot.slane %v503, 3
      %v1164 = vsel %vm1147, %v1161, %v1163
      %v1165 = vrot.slane %v504, 3
      %v1166 = vsel %vm1147, %v1163, %v1165
      %v1167 = vrot.slane %v505, 3
      %v1168 = vsel %vm1147, %v1165, %v1167
      %v1169 = vrot.slane %v506, 3
      %v1170 = vsel %vm1147, %v1167, %v1169
      %v1171 = vrot.slane %v507, 3
      %v1172 = vsel %vm1147, %v1169, %v1171
      %v1173 = vrot.slane %v508, 3
      %v1174 = vsel %vm1147, %v1171, %v1173
      %v1175 = vrot.slane %v509, 3
      %v1176 = vsel %vm1147, %v1173, %v1175
      %v1177 = vrot.slane %v510, 3
      %v1178 = vsel %vm1147, %v1175, %v1177
      %v1179 = vrot.slane %v511, 3
      %v1180 = vsel %vm1147, %v1177, %v1179
      %1197 = vmatprep.subr.mxu0 0.0
      %1198 = vmatpush1.msra.mxu0 %v1131
      %1199 = vmatprep.subr.mxu0 0.0
      %1200 = vmatpush1.msra.mxu0 %v1132
      %1201 = vmatprep.subr.mxu0 0.0
      %1202 = vmatpush1.msra.mxu0 %v1133
      %1203 = vmatprep.subr.mxu0 0.0
      %1204 = vmatpush1.msra.mxu0 %v1134
      %1205 = vmatprep.subr.mxu0 0.0
      %1206 = vmatpush1.msra.mxu0 %v1135
      %1207 = vmatprep.subr.mxu0 0.0
      %1208 = vmatpush1.msra.mxu0 %v1136
      %1209 = vmatprep.subr.mxu0 0.0
      %1210 = vmatpush1.msra.mxu0 %v1137
      %1211 = vmatprep.subr.mxu0 0.0
      %1212 = vmatpush1.msra.mxu0 %v1138
      %1213 = vmatprep.subr.mxu0 0.0
      %1214 = vmatpush1.msra.mxu0 %v1139
      %1215 = vmatprep.subr.mxu0 0.0
      %1216 = vmatpush1.msra.mxu0 %v1140
      %1217 = vmatprep.subr.mxu0 0.0
      %1218 = vmatpush1.msra.mxu0 %v1141
      %1219 = vmatprep.subr.mxu0 0.0
      %1220 = vmatpush1.msra.mxu0 %v1142
      %1221 = vmatprep.subr.mxu0 0.0
      %1222 = vmatpush1.msra.mxu0 %v1143
      %1223 = vmatprep.subr.mxu0 0.0
      %1224 = vmatpush1.msra.mxu0 %v1144
      %1225 = vmatprep.subr.mxu0 0.0
      %1226 = vmatpush1.msra.mxu0 %v1145
      %1227 = vmatprep.subr.mxu0 0.0
      %1228 = vmatpush1.msra.mxu0 %v1146
      %1229 = vmatprep.subr.mxu0 0.0
      %1230 = vmatpush1.msra.mxu0 0.0
      %1231 = vmatprep.subr.mxu0 0.0
      %1232 = vmatpush1.msra.mxu0 0.0
      %1233 = vmatprep.subr.mxu0 0.0
      %1234 = vmatpush1.msra.mxu0 0.0
      %1235 = vmatprep.subr.mxu0 0.0
      %1236 = vmatpush1.msra.mxu0 0.0
      %1237 = vmatprep.subr.mxu0 0.0
      %1238 = vmatpush1.msra.mxu0 0.0
      %1239 = vmatprep.subr.mxu0 0.0
      %1240 = vmatpush1.msra.mxu0 0.0
      %1241 = vmatprep.subr.mxu0 0.0
      %1242 = vmatpush1.msra.mxu0 0.0
      %1243 = vmatprep.subr.mxu0 0.0
      %1244 = vmatpush1.msra.mxu0 0.0
      %1245 = vmatprep.subr.mxu0 0.0
      %1246 = vmatpush1.msra.mxu0 0.0
      %1247 = vmatprep.subr.mxu0 0.0
      %1248 = vmatpush1.msra.mxu0 0.0
      %1249 = vmatprep.subr.mxu0 0.0
      %1250 = vmatpush1.msra.mxu0 0.0
      %1251 = vmatprep.subr.mxu0 0.0
      %1252 = vmatpush1.msra.mxu0 0.0
      %1253 = vmatprep.subr.mxu0 0.0
      %1254 = vmatpush1.msra.mxu0 0.0
      %1255 = vmatprep.subr.mxu0 0.0
      %1256 = vmatpush1.msra.mxu0 0.0
      %1257 = vmatprep.subr.mxu0 0.0
      %1258 = vmatpush1.msra.mxu0 0.0
      %1259 = vmatprep.subr.mxu0 0.0
      %1260 = vmatpush1.msra.mxu0 0.0
      %1261 = vmatprep.mubr.f32.mxu0 0.0
      %1262 = vmatmul.mubr.f32.gmra.mrb[0].mxu0 %v1150
      %v1263 = vpop.f32.mrb[0].mxu0
      %v1264 = vadd.f32 0.0, %v1263
      %v1265 = vpop.f32.mrb[0].mxu0
      %1266 = vmatprep.mubr.f32.mxu0 0.0
      %1267 = vmatmul.mubr.f32.gmra.mrb[0].mxu0 %v1152
      %v1268 = vpop.f32.mrb[0].mxu0
      %v1269 = vadd.f32 0.0, %v1268
      %v1270 = vpop.f32.mrb[0].mxu0
      %1271 = vmatprep.mubr.f32.mxu0 0.0
      %1272 = vmatmul.mubr.f32.gmra.mrb[0].mxu0 %v1154
      %v1273 = vpop.f32.mrb[0].mxu0
      %v1274 = vadd.f32 0.0, %v1273
      %v1275 = vpop.f32.mrb[0].mxu0
      %1276 = vmatprep.mubr.f32.mxu0 0.0
      %1277 = vmatmul.mubr.f32.gmra.mrb[0].mxu0 %v1156
      %v1278 = vpop.f32.mrb[0].mxu0
      %v1279 = vadd.f32 0.0, %v1278
      %v1280 = vpop.f32.mrb[0].mxu0
      %1281 = vmatprep.mubr.f32.mxu0 0.0
      %1282 = vmatmul.mubr.f32.gmra.mrb[0].mxu0 %v1158
      %v1283 = vpop.f32.mrb[0].mxu0
      %v1284 = vadd.f32 0.0, %v1283
      %v1285 = vpop.f32.mrb[0].mxu0
      %1286 = vmatprep.mubr.f32.mxu0 0.0
      %1287 = vmatmul.mubr.f32.gmra.mrb[0].mxu0 %v1160
      %v1288 = vpop.f32.mrb[0].mxu0
      %v1289 = vadd.f32 0.0, %v1288
      %v1290 = vpop.f32.mrb[0].mxu0
      %1291 = vmatprep.mubr.f32.mxu0 0.0
      %1292 = vmatmul.mubr.f32.gmra.mrb[0].mxu0 %v1162
      %v1293 = vpop.f32.mrb[0].mxu0
      %v1294 = vadd.f32 0.0, %v1293
      %v1295 = vpop.f32.mrb[0].mxu0
      %1296 = vmatprep.mubr.f32.mxu0 0.0
      %1297 = vmatmul.mubr.f32.gmra.mrb[0].mxu0 %v1164
      %v1298 = vpop.f32.mrb[0].mxu0
      %v1299 = vadd.f32 0.0, %v1298
      %v1300 = vpop.f32.mrb[0].mxu0
      %1301 = vmatprep.mubr.f32.mxu0 0.0
      %1302 = vmatmul.mubr.f32.gmra.mrb[0].mxu0 %v1166
      %v1303 = vpop.f32.mrb[0].mxu0
      %v1304 = vadd.f32 0.0, %v1303
      %v1305 = vpop.f32.mrb[0].mxu0
      %1306 = vmatprep.mubr.f32.mxu0 0.0
      %1307 = vmatmul.mubr.f32.gmra.mrb[0].mxu0 %v1168
      %v1308 = vpop.f32.mrb[0].mxu0
      %v1309 = vadd.f32 0.0, %v1308
      %v1310 = vpop.f32.mrb[0].mxu0
      %1311 = vmatprep.mubr.f32.mxu0 0.0
      %1312 = vmatmul.mubr.f32.gmra.mrb[0].mxu0 %v1170
      %v1313 = vpop.f32.mrb[0].mxu0
      %v1314 = vadd.f32 0.0, %v1313
      %v1315 = vpop.f32.mrb[0].mxu0
      %1316 = vmatprep.mubr.f32.mxu0 0.0
      %1317 = vmatmul.mubr.f32.gmra.mrb[0].mxu0 %v1172
      %v1318 = vpop.f32.mrb[0].mxu0
      %v1319 = vadd.f32 0.0, %v1318
      %v1320 = vpop.f32.mrb[0].mxu0
      %1321 = vmatprep.mubr.f32.mxu0 0.0
      %1322 = vmatmul.mubr.f32.gmra.mrb[0].mxu0 %v1174
      %v1323 = vpop.f32.mrb[0].mxu0
      %v1324 = vadd.f32 0.0, %v1323
      %v1325 = vpop.f32.mrb[0].mxu0
      %1326 = vmatprep.mubr.f32.mxu0 0.0
      %1327 = vmatmul.mubr.f32.gmra.mrb[0].mxu0 %v1176
      %v1328 = vpop.f32.mrb[0].mxu0
      %v1329 = vadd.f32 0.0, %v1328
      %v1330 = vpop.f32.mrb[0].mxu0
      %1331 = vmatprep.mubr.f32.mxu0 0.0
      %1332 = vmatmul.mubr.f32.gmra.mrb[0].mxu0 %v1178
      %v1333 = vpop.f32.mrb[0].mxu0
      %v1334 = vadd.f32 0.0, %v1333
      %v1335 = vpop.f32.mrb[0].mxu0
      %1336 = vmatprep.mubr.f32.mxu0 0.0
      %1337 = vmatmul.mubr.f32.gmra.mrb[0].mxu0 %v1180
      %v1338 = vpop.f32.mrb[0].mxu0
      %v1339 = vadd.f32 0.0, %v1338
      %v1340 = vpop.f32.mrb[0].mxu0
      %1341 = vdwg.mxu0
      %v1342 = vadd.f32 %v1114, %v1264
      %v1343 = vadd.f32 %v1115, %v1269
      %v1344 = vadd.f32 %v1116, %v1274
      %v1345 = vadd.f32 %v1117, %v1279
      %v1346 = vadd.f32 %v1118, %v1284
      %v1347 = vadd.f32 %v1119, %v1289
      %v1348 = vadd.f32 %v1120, %v1294
      %v1349 = vadd.f32 %v1121, %v1299
      %v1350 = vadd.f32 %v1122, %v1304
      %v1351 = vadd.f32 %v1123, %v1309
      %v1352 = vadd.f32 %v1124, %v1314
      %v1353 = vadd.f32 %v1125, %v1319
      %v1354 = vadd.f32 %v1126, %v1324
      %v1355 = vadd.f32 %v1127, %v1329
      %v1356 = vadd.f32 %v1128, %v1334
      %v1357 = vadd.f32 %v1129, %v1339
      %s1358 = scalar_lea.vmem %s1, 512
      %v1359 = vld [vmem:[%s1358] sm:$0xff]
      %v1360 = vld [vmem:[%s1358 + $0x8] sm:$0xff]
      %v1361 = vld [vmem:[%s1358 + $0x10] sm:$0xff]
      %v1362 = vld [vmem:[%s1358 + $0x18] sm:$0xff]
      %v1363 = vld [vmem:[%s1358 + $0x20] sm:$0xff]
      %v1364 = vld [vmem:[%s1358 + $0x28] sm:$0xff]
      %v1365 = vld [vmem:[%s1358 + $0x30] sm:$0xff]
      %v1366 = vld [vmem:[%s1358 + $0x38] sm:$0xff]
      %v1367 = vld [vmem:[%s1358 + $0x40] sm:$0xff]
      %v1368 = vld [vmem:[%s1358 + $0x48] sm:$0xff]
      %v1369 = vld [vmem:[%s1358 + $0x50] sm:$0xff]
      %v1370 = vld [vmem:[%s1358 + $0x58] sm:$0xff]
      %v1371 = vld [vmem:[%s1358 + $0x60] sm:$0xff]
      %v1372 = vld [vmem:[%s1358 + $0x68] sm:$0xff]
      %v1373 = vld [vmem:[%s1358 + $0x70] sm:$0xff]
      %v1374 = vld [vmem:[%s1358 + $0x78] sm:$0xff]
      %vm1375 = vcmask 1043456
      %v1376 = vrot.slane %v495, 4
      %v1377 = vrot.slane %v496, 4
      %v1378 = vsel %vm1375, %v1376, %v1377
      %v1379 = vrot.slane %v497, 4
      %v1380 = vsel %vm1375, %v1377, %v1379
      %v1381 = vrot.slane %v498, 4
      %v1382 = vsel %vm1375, %v1379, %v1381
      %v1383 = vrot.slane %v499, 4
      %v1384 = vsel %vm1375, %v1381, %v1383
      %v1385 = vrot.slane %v500, 4
      %v1386 = vsel %vm1375, %v1383, %v1385
      %v1387 = vrot.slane %v501, 4
      %v1388 = vsel %vm1375, %v1385, %v1387
      %v1389 = vrot.slane %v502, 4
      %v1390 = vsel %vm1375, %v1387, %v1389
      %v1391 = vrot.slane %v503, 4
      %v1392 = vsel %vm1375, %v1389, %v1391
      %v1393 = vrot.slane %v504, 4
      %v1394 = vsel %vm1375, %v1391, %v1393
      %v1395 = vrot.slane %v505, 4
      %v1396 = vsel %vm1375, %v1393, %v1395
      %v1397 = vrot.slane %v506, 4
      %v1398 = vsel %vm1375, %v1395, %v1397
      %v1399 = vrot.slane %v507, 4
      %v1400 = vsel %vm1375, %v1397, %v1399
      %v1401 = vrot.slane %v508, 4
      %v1402 = vsel %vm1375, %v1399, %v1401
      %v1403 = vrot.slane %v509, 4
      %v1404 = vsel %vm1375, %v1401, %v1403
      %v1405 = vrot.slane %v510, 4
      %v1406 = vsel %vm1375, %v1403, %v1405
      %v1407 = vrot.slane %v511, 4
      %v1408 = vsel %vm1375, %v1405, %v1407
      %1425 = vmatprep.subr.mxu0 0.0
      %1426 = vmatpush1.msra.mxu0 %v1359
      %1427 = vmatprep.subr.mxu0 0.0
      %1428 = vmatpush1.msra.mxu0 %v1360
      %1429 = vmatprep.subr.mxu0 0.0
      %1430 = vmatpush1.msra.mxu0 %v1361
      %1431 = vmatprep.subr.mxu0 0.0
      %1432 = vmatpush1.msra.mxu0 %v1362
      %1433 = vmatprep.subr.mxu0 0.0
      %1434 = vmatpush1.msra.mxu0 %v1363
      %1435 = vmatprep.subr.mxu0 0.0
      %1436 = vmatpush1.msra.mxu0 %v1364
      %1437 = vmatprep.subr.mxu0 0.0
      %1438 = vmatpush1.msra.mxu0 %v1365
      %1439 = vmatprep.subr.mxu0 0.0
      %1440 = vmatpush1.msra.mxu0 %v1366
      %1441 = vmatprep.subr.mxu0 0.0
      %1442 = vmatpush1.msra.mxu0 %v1367
      %1443 = vmatprep.subr.mxu0 0.0
      %1444 = vmatpush1.msra.mxu0 %v1368
      %1445 = vmatprep.subr.mxu0 0.0
      %1446 = vmatpush1.msra.mxu0 %v1369
      %1447 = vmatprep.subr.mxu0 0.0
      %1448 = vmatpush1.msra.mxu0 %v1370
      %1449 = vmatprep.subr.mxu0 0.0
      %1450 = vmatpush1.msra.mxu0 %v1371
      %1451 = vmatprep.subr.mxu0 0.0
      %1452 = vmatpush1.msra.mxu0 %v1372
      %1453 = vmatprep.subr.mxu0 0.0
      %1454 = vmatpush1.msra.mxu0 %v1373
      %1455 = vmatprep.subr.mxu0 0.0
      %1456 = vmatpush1.msra.mxu0 %v1374
      %1457 = vmatprep.subr.mxu0 0.0
      %1458 = vmatpush1.msra.mxu0 0.0
      %1459 = vmatprep.subr.mxu0 0.0
      %1460 = vmatpush1.msra.mxu0 0.0
      %1461 = vmatprep.subr.mxu0 0.0
      %1462 = vmatpush1.msra.mxu0 0.0
      %1463 = vmatprep.subr.mxu0 0.0
      %1464 = vmatpush1.msra.mxu0 0.0
      %1465 = vmatprep.subr.mxu0 0.0
      %1466 = vmatpush1.msra.mxu0 0.0
      %1467 = vmatprep.subr.mxu0 0.0
      %1468 = vmatpush1.msra.mxu0 0.0
      %1469 = vmatprep.subr.mxu0 0.0
      %1470 = vmatpush1.msra.mxu0 0.0
      %1471 = vmatprep.subr.mxu0 0.0
      %1472 = vmatpush1.msra.mxu0 0.0
      %1473 = vmatprep.subr.mxu0 0.0
      %1474 = vmatpush1.msra.mxu0 0.0
      %1475 = vmatprep.subr.mxu0 0.0
      %1476 = vmatpush1.msra.mxu0 0.0
      %1477 = vmatprep.subr.mxu0 0.0
      %1478 = vmatpush1.msra.mxu0 0.0
      %1479 = vmatprep.subr.mxu0 0.0
      %1480 = vmatpush1.msra.mxu0 0.0
      %1481 = vmatprep.subr.mxu0 0.0
      %1482 = vmatpush1.msra.mxu0 0.0
      %1483 = vmatprep.subr.mxu0 0.0
      %1484 = vmatpush1.msra.mxu0 0.0
      %1485 = vmatprep.subr.mxu0 0.0
      %1486 = vmatpush1.msra.mxu0 0.0
      %1487 = vmatprep.subr.mxu0 0.0
      %1488 = vmatpush1.msra.mxu0 0.0
      %1489 = vmatprep.mubr.f32.mxu0 0.0
      %1490 = vmatmul.mubr.f32.gmra.mrb[0].mxu0 %v1378
      %v1491 = vpop.f32.mrb[0].mxu0
      %v1492 = vadd.f32 0.0, %v1491
      %v1493 = vpop.f32.mrb[0].mxu0
      %1494 = vmatprep.mubr.f32.mxu0 0.0
      %1495 = vmatmul.mubr.f32.gmra.mrb[0].mxu0 %v1380
      %v1496 = vpop.f32.mrb[0].mxu0
      %v1497 = vadd.f32 0.0, %v1496
      %v1498 = vpop.f32.mrb[0].mxu0
      %1499 = vmatprep.mubr.f32.mxu0 0.0
      %1500 = vmatmul.mubr.f32.gmra.mrb[0].mxu0 %v1382
      %v1501 = vpop.f32.mrb[0].mxu0
      %v1502 = vadd.f32 0.0, %v1501
      %v1503 = vpop.f32.mrb[0].mxu0
      %1504 = vmatprep.mubr.f32.mxu0 0.0
      %1505 = vmatmul.mubr.f32.gmra.mrb[0].mxu0 %v1384
      %v1506 = vpop.f32.mrb[0].mxu0
      %v1507 = vadd.f32 0.0, %v1506
      %v1508 = vpop.f32.mrb[0].mxu0
      %1509 = vmatprep.mubr.f32.mxu0 0.0
      %1510 = vmatmul.mubr.f32.gmra.mrb[0].mxu0 %v1386
      %v1511 = vpop.f32.mrb[0].mxu0
      %v1512 = vadd.f32 0.0, %v1511
      %v1513 = vpop.f32.mrb[0].mxu0
      %1514 = vmatprep.mubr.f32.mxu0 0.0
      %1515 = vmatmul.mubr.f32.gmra.mrb[0].mxu0 %v1388
      %v1516 = vpop.f32.mrb[0].mxu0
      %v1517 = vadd.f32 0.0, %v1516
      %v1518 = vpop.f32.mrb[0].mxu0
      %1519 = vmatprep.mubr.f32.mxu0 0.0
      %1520 = vmatmul.mubr.f32.gmra.mrb[0].mxu0 %v1390
      %v1521 = vpop.f32.mrb[0].mxu0
      %v1522 = vadd.f32 0.0, %v1521
      %v1523 = vpop.f32.mrb[0].mxu0
      %1524 = vmatprep.mubr.f32.mxu0 0.0
      %1525 = vmatmul.mubr.f32.gmra.mrb[0].mxu0 %v1392
      %v1526 = vpop.f32.mrb[0].mxu0
      %v1527 = vadd.f32 0.0, %v1526
      %v1528 = vpop.f32.mrb[0].mxu0
      %1529 = vmatprep.mubr.f32.mxu0 0.0
      %1530 = vmatmul.mubr.f32.gmra.mrb[0].mxu0 %v1394
      %v1531 = vpop.f32.mrb[0].mxu0
      %v1532 = vadd.f32 0.0, %v1531
      %v1533 = vpop.f32.mrb[0].mxu0
      %1534 = vmatprep.mubr.f32.mxu0 0.0
      %1535 = vmatmul.mubr.f32.gmra.mrb[0].mxu0 %v1396
      %v1536 = vpop.f32.mrb[0].mxu0
      %v1537 = vadd.f32 0.0, %v1536
      %v1538 = vpop.f32.mrb[0].mxu0
      %1539 = vmatprep.mubr.f32.mxu0 0.0
      %1540 = vmatmul.mubr.f32.gmra.mrb[0].mxu0 %v1398
      %v1541 = vpop.f32.mrb[0].mxu0
      %v1542 = vadd.f32 0.0, %v1541
      %v1543 = vpop.f32.mrb[0].mxu0
      %1544 = vmatprep.mubr.f32.mxu0 0.0
      %1545 = vmatmul.mubr.f32.gmra.mrb[0].mxu0 %v1400
      %v1546 = vpop.f32.mrb[0].mxu0
      %v1547 = vadd.f32 0.0, %v1546
      %v1548 = vpop.f32.mrb[0].mxu0
      %1549 = vmatprep.mubr.f32.mxu0 0.0
      %1550 = vmatmul.mubr.f32.gmra.mrb[0].mxu0 %v1402
      %v1551 = vpop.f32.mrb[0].mxu0
      %v1552 = vadd.f32 0.0, %v1551
      %v1553 = vpop.f32.mrb[0].mxu0
      %1554 = vmatprep.mubr.f32.mxu0 0.0
      %1555 = vmatmul.mubr.f32.gmra.mrb[0].mxu0 %v1404
      %v1556 = vpop.f32.mrb[0].mxu0
      %v1557 = vadd.f32 0.0, %v1556
      %v1558 = vpop.f32.mrb[0].mxu0
      %1559 = vmatprep.mubr.f32.mxu0 0.0
      %1560 = vmatmul.mubr.f32.gmra.mrb[0].mxu0 %v1406
      %v1561 = vpop.f32.mrb[0].mxu0
      %v1562 = vadd.f32 0.0, %v1561
      %v1563 = vpop.f32.mrb[0].mxu0
      %1564 = vmatprep.mubr.f32.mxu0 0.0
      %1565 = vmatmul.mubr.f32.gmra.mrb[0].mxu0 %v1408
      %v1566 = vpop.f32.mrb[0].mxu0
      %v1567 = vadd.f32 0.0, %v1566
      %v1568 = vpop.f32.mrb[0].mxu0
      %1569 = vdwg.mxu0
      %v1570 = vadd.f32 %v1342, %v1492
      %v1571 = vadd.f32 %v1343, %v1497
      %v1572 = vadd.f32 %v1344, %v1502
      %v1573 = vadd.f32 %v1345, %v1507
      %v1574 = vadd.f32 %v1346, %v1512
      %v1575 = vadd.f32 %v1347, %v1517
      %v1576 = vadd.f32 %v1348, %v1522
      %v1577 = vadd.f32 %v1349, %v1527
      %v1578 = vadd.f32 %v1350, %v1532
      %v1579 = vadd.f32 %v1351, %v1537
      %v1580 = vadd.f32 %v1352, %v1542
      %v1581 = vadd.f32 %v1353, %v1547
      %v1582 = vadd.f32 %v1354, %v1552
      %v1583 = vadd.f32 %v1355, %v1557
      %v1584 = vadd.f32 %v1356, %v1562
      %v1585 = vadd.f32 %v1357, %v1567
      %v1586 = vadd.f32 %v1570, %v1571
      %v1587 = vadd.f32 %v1586, %v1572
      %v1588 = vadd.f32 %v1587, %v1573
      %v1589 = vadd.f32 %v1588, %v1574
      %v1590 = vadd.f32 %v1589, %v1575
      %v1591 = vadd.f32 %v1590, %v1576
      %v1592 = vadd.f32 %v1591, %v1577
      %v1593 = vadd.f32 %v1592, %v1578
      %v1594 = vadd.f32 %v1593, %v1579
      %v1595 = vadd.f32 %v1594, %v1580
      %v1596 = vadd.f32 %v1595, %v1581
      %v1597 = vadd.f32 %v1596, %v1582
      %v1598 = vadd.f32 %v1597, %v1583
      %v1599 = vadd.f32 %v1598, %v1584
      %v1600 = vadd.f32 %v1599, %v1585
      %v1601 = vrot.slane %v1600, 4
      %v1602 = vadd.f32 %v1600, %v1601
      %v1603 = vrot.slane %v1602, 2
      %v1604 = vadd.f32 %v1602, %v1603
      %v1605 = vrot.slane %v1604, 1
      %v1606 = vadd.f32 %v1604, %v1605
      %v1607 = vmul.f32 %v1570, %v1570
      %v1608 = vmul.f32 %v1571, %v1571
      %v1609 = vmul.f32 %v1572, %v1572
      %v1610 = vmul.f32 %v1573, %v1573
      %v1611 = vmul.f32 %v1574, %v1574
      %v1612 = vmul.f32 %v1575, %v1575
      %v1613 = vmul.f32 %v1576, %v1576
      %v1614 = vmul.f32 %v1577, %v1577
      %v1615 = vmul.f32 %v1578, %v1578
      %v1616 = vmul.f32 %v1579, %v1579
      %v1617 = vmul.f32 %v1580, %v1580
      %v1618 = vmul.f32 %v1581, %v1581
      %v1619 = vmul.f32 %v1582, %v1582
      %v1620 = vmul.f32 %v1583, %v1583
      %v1621 = vmul.f32 %v1584, %v1584
      %v1622 = vmul.f32 %v1585, %v1585
      %v1623 = vadd.f32 %v1607, %v1608
      %v1624 = vadd.f32 %v1623, %v1609
      %v1625 = vadd.f32 %v1624, %v1610
      %v1626 = vadd.f32 %v1625, %v1611
      %v1627 = vadd.f32 %v1626, %v1612
      %v1628 = vadd.f32 %v1627, %v1613
      %v1629 = vadd.f32 %v1628, %v1614
      %v1630 = vadd.f32 %v1629, %v1615
      %v1631 = vadd.f32 %v1630, %v1616
      %v1632 = vadd.f32 %v1631, %v1617
      %v1633 = vadd.f32 %v1632, %v1618
      %v1634 = vadd.f32 %v1633, %v1619
      %v1635 = vadd.f32 %v1634, %v1620
      %v1636 = vadd.f32 %v1635, %v1621
      %v1637 = vadd.f32 %v1636, %v1622
      %v1638 = vrot.slane %v1637, 4
      %v1639 = vadd.f32 %v1637, %v1638
      %v1640 = vrot.slane %v1639, 2
      %v1641 = vadd.f32 %v1639, %v1640
      %v1642 = vrot.slane %v1641, 1
      %v1643 = vadd.f32 %v1641, %v1642
      %vm1644 = vcmask 1040384
      %v1645 = vsel %vm1644, %v1606, %v1643
      %p1646 = scmp.eq.s32.totalorder %s23, 0
      %p1647 = scmp.eq.s32.totalorder %s24, 0
      %p1648 = pnand %p1646, %p1647
      %p1649 = pneg %p1648
      // Predicated region
      $region37: #{_lambda_.7} parent=35 // pred_check
        _
      $region38: #{_lambda_.7} parent=35 // pred_check_branch
        %1651 = sbr.rel (%p1648) target = $region40
      $region39: #{_lambda_.7} parent=35 // pred_region
        %1652 = vst [vmem:[%s289] sm:$0x3] 0.0
      $region40: #{_lambda_.7} parent=35 // pred_fallthru
        _
      %v1653 = vld [vmem:[%s289] sm:$0x3]
      %v1654 = vadd.f32 %v1653, %v1645
      %1655 = vst [vmem:[%s289] sm:$0x3] %v1654
      %1656 = vst [vmem:[%s282] sm:$0xff] %v1570
      %1657 = vst [vmem:[%s282 + $0x8] sm:$0xff] %v1571
      %1658 = vst [vmem:[%s282 + $0x10] sm:$0xff] %v1572
      %1659 = vst [vmem:[%s282 + $0x18] sm:$0xff] %v1573
      %1660 = vst [vmem:[%s282 + $0x20] sm:$0xff] %v1574
      %1661 = vst [vmem:[%s282 + $0x28] sm:$0xff] %v1575
      %1662 = vst [vmem:[%s282 + $0x30] sm:$0xff] %v1576
      %1663 = vst [vmem:[%s282 + $0x38] sm:$0xff] %v1577
      %1664 = vst [vmem:[%s282 + $0x40] sm:$0xff] %v1578
      %1665 = vst [vmem:[%s282 + $0x48] sm:$0xff] %v1579
      %1666 = vst [vmem:[%s282 + $0x50] sm:$0xff] %v1580
      %1667 = vst [vmem:[%s282 + $0x58] sm:$0xff] %v1581
      %1668 = vst [vmem:[%s282 + $0x60] sm:$0xff] %v1582
      %1669 = vst [vmem:[%s282 + $0x68] sm:$0xff] %v1583
      %1670 = vst [vmem:[%s282 + $0x70] sm:$0xff] %v1584
      %1671 = vst [vmem:[%s282 + $0x78] sm:$0xff] %v1585
      %s1672 = smul.u32 %s22, 2
      %s1673 = sadd.s32 %s1672, %s23
      %s1674 = smul.u32 16, %s24
      %p1675 = scmp.lt.s32.totalorder %s1673, 3
      %s1676 = scalar_select %p1675, %s1673, 3
      %p1677 = scmp.lt.s32.totalorder %s1674, 31
      %s1678 = scalar_select %p1677, %s1674, 31
      %s1679 = smul.addr %s1676, 32
      %s1680 = sadd.s32 %s1678, %s1679
      %s1681 = smul.addr %s1680, 8
      %s1682 = scalar_lea.vmem %s4, %s1681
      %p1683 = scmp.lt.s32.totalorder %s22, 1
      %s1684 = scalar_select %p1683, %s22, 1
      %s1685 = smul.addr %s1684, 2
      %s1686 = scalar_lea.vmem %s5, %s1685
      // Predicated region
      $region41: #{_lambda_.7} parent=35 // pred_check
        %p1687 = pneg %p153
      $region42: #{_lambda_.7} parent=35 // pred_check_branch
        %1689 = sbr.rel (%p1687) target = $region44
      $region43: #{_lambda_.7} parent=35 // pred_region
        %s1690 = smul.u32 %s22, 2
        %s1691 = sadd.s32 %s1690, %s23
        %s1692 = smul.u32 16, %s24
      $region44: #{_lambda_.7} parent=35 // pred_fallthru
        _
      // Predicated region
      $region45: #{_lambda_.7} parent=35 // pred_check
        %p1693 = pneg %p179
      $region46: #{_lambda_.7} parent=35 // pred_check_branch
        %1695 = sbr.rel (%p1693) target = $region48
      $region47: #{_lambda_.7} parent=35 // pred_region
        _
      $region48: #{_lambda_.7} parent=35 // pred_fallthru
        _
    $region36: #{_lambda_.7} parent=5 // pred_fallthru
      _
    %p1696 = scmp.le.s32.totalorder 2, %s12
    // Predicated region
    $region49: #{_lambda_.7} parent=5 // pred_check
      %p1697 = pneg %p1696
    $region50: #{_lambda_.7} parent=5 // pred_check_branch
      %1699 = sbr.rel (%p1697) target = $region52
    $region51: #{_lambda_.7} parent=5 // pred_region
      %s1700 = ssub.s32 %s12, 2
      // Predicated region
      $region53: #{_lambda_.7} parent=51 // pred_check
        %p1701 = pneg %p159
      $region54: #{_lambda_.7} parent=51 // pred_check_branch
        %1703 = sbr.rel (%p1701) target = $region56
      $region55: #{_lambda_.7} parent=51 // pred_region
        %s1704 = smul.u32 %s25, 2
        %s1705 = sadd.s32 %s1704, %s26
        %s1706 = smul.u32 16, %s27
        %p1707 = scmp.lt.s32.totalorder %s1705, 3
        %s1708 = scalar_select %p1707, %s1705, 3
        %p1709 = scmp.lt.s32.totalorder %s1706, 31
        %s1710 = scalar_select %p1709, %s1706, 31
        %s1711 = smul.addr %s1708, 32
        %s1712 = sadd.s32 %s1710, %s1711
        %s1713 = smul.addr %s1712, 8
        %s1714 = scalar_lea.vmem %s4, %s1713
      $region56: #{_lambda_.7} parent=51 // pred_fallthru
        _
      // Predicated region
      $region57: #{_lambda_.7} parent=51 // pred_check
        %p1715 = pneg %p185
      $region58: #{_lambda_.7} parent=51 // pred_check_branch
        %1717 = sbr.rel (%p1715) target = $region60
      $region59: #{_lambda_.7} parent=51 // pred_region
        %p1718 = scmp.lt.s32.totalorder %s25, 1
        %s1719 = scalar_select %p1718, %s25, 1
        %s1720 = smul.addr %s1719, 2
        %s1721 = scalar_lea.vmem %s5, %s1720
      $region60: #{_lambda_.7} parent=51 // pred_fallthru
        _
    $region52: #{_lambda_.7} parent=5 // pred_fallthru
      _
  $region6: #{_lambda_.7} parent=0 // loop_footer
    %s16 = sadd.s32 1, %s12
  $region7: #{_lambda_.7} parent=0 // loop_footer_branch
    %11 = sbr.rel target = $region3
  $region8: #{_lambda_.7} parent=0 // loop_exit
    _

// kernel: _lambda_.6
$region0: #{_lambda_.6}
  #allocation0 [shape = 'u32[]', space=smem, size = 0x4, offset = 0x4, fixed_abs, tag = 'smem constant byte address 0x4 - core index']
  #allocation1 [shape = 'u32[144,128]{1,0:T(1,128)}', space=vmem, size = 0x12000, scoped, tag = 'internal scratch']
  %s0 = inlined_call_operand.vmem [shape: f32[4,264,128], index: 0, kind: input, shape index: {}]
  %s1 = inlined_call_operand.vmem [shape: f32[5,128,128], index: 1, kind: input, shape index: {}]
  %s2 = inlined_call_operand.vmem [shape: f32[1,128], index: 2, kind: input, shape index: {}]
  %s3 = inlined_call_operand.vmem [shape: f32[1,128], index: 3, kind: input, shape index: {}]
  %s4 = inlined_call_operand.vmem [shape: f32[4,256,128], index: 4, kind: output, shape index: {0}]
  %s5 = inlined_call_operand.vmem [shape: f32[2,2,128], index: 5, kind: output, shape index: {1}]
  %6 = xla_tuple %s4, %s5
  %s7 = sld [smem:[#allocation0]]
  $region61: #{_lambda_.6} parent=0
    _
  %s9 = ssub.s32 1, %s7
  %s10 = scalar_select 0, %s9, %s7
  loop: start=0, step=1, limit=10
  $region2: #{_lambda_.6} parent=0 // loop_pre_header
    _
  $region3: #{_lambda_.6} parent=0 // loop_header
    %s12 = sphi 0, %s16
    %p13 = scmp.ge.s32.totalorder %s12, 10
    %s19 = sphi 0, %s38
    %s20 = sphi 0, %s34
    %s21 = sphi 0, %s30
    %s22 = sphi 0, %s19
    %s23 = sphi 0, %s20
    %s24 = sphi 0, %s21
    %s25 = sphi 0, %s22
    %s26 = sphi 0, %s23
    %s27 = sphi 0, %s24
    %s45 = sphi 0, %s47
    %s48 = sphi 0, %s45
    %s49 = sphi 0, %s48
    %s65 = sphi 0, %s49
    %s69 = sphi 0, %s69
    %s71 = sphi 0, %s69
    %s72 = sphi 0, %s71
    %s86 = sphi 0, %s72
    %s90 = sphi 0, %s90
    %s92 = sphi 0, %s90
    %s93 = sphi 0, %s92
    %s107 = sphi 0, %s93
    %s111 = sphi 0, %s111
    %s113 = sphi 0, %s111
    %s114 = sphi 0, %s113
    %s128 = sphi 0, %s114
    %s140 = sphi 0, %s142
    %s143 = sphi 0, %s140
    %s144 = sphi 0, %s143
    %s160 = sphi 0, %s144
    %s166 = sphi 0, %s168
    %s169 = sphi 0, %s166
    %s170 = sphi 0, %s169
    %s186 = sphi 0, %s170
  $region4: #{_lambda_.6} parent=0 // loop_header_branch
    %15 = sbr.rel (%p13) target = $region8
  $region5: #{_lambda_.6} parent=0 // loop_body
    %s17 = ssub.s32 %s12, 1
    %s18 = ssub.s32 %s12, 2
    %s28 = sadd.s32 1, %s21
    %p29 = scmp.ge.s32.totalorder %s28, 2
    %s30 = scalar_select %p29, 0, %s28
    %s31 = sadd.s32 1, %s20
    %s32 = scalar_select %p29, %s31, %s20
    %p33 = scmp.ge.s32.totalorder %s32, 2
    %s34 = scalar_select %p33, 0, %s32
    %s35 = sadd.s32 1, %s19
    %s36 = scalar_select %p33, %s35, %s19
    %p37 = scmp.ge.s32.totalorder %s36, 2
    %s38 = scalar_select %p37, 0, %s36
    %s39 = smul.u32 %s19, 2
    %s40 = sadd.s32 %s39, %s20
    %s41 = smul.u32 %s38, 2
    %s42 = sadd.s32 %s41, %s34
    %s43 = ssub.s32 %s40, %s42
    %p44 = scmp.eq.s32.totalorder %s43, 0
    %s46 = sadd.s32 %s45, 1
    %s47 = scalar_select %p44, %s45, %s46
    %p50 = pneg %p44
    %p51 = scmp.eq.s32.totalorder %s12, 7
    %p52 = por %p50, %p51
    %p53 = scmp.ne.s32.totalorder %s45, %s48
    %p54 = scmp.eq.s32.totalorder %s12, 0
    %p55 = por %p53, %p54
    %p56 = scmp.ne.s32.totalorder %s45, %s48
    %p57 = scmp.eq.s32.totalorder %s17, 7
    %p58 = por %p56, %p57
    %p59 = scmp.ne.s32.totalorder %s48, %s49
    %p60 = scmp.eq.s32.totalorder %s17, 0
    %p61 = por %p59, %p60
    %p62 = scmp.ne.s32.totalorder %s48, %s49
    %p63 = scmp.eq.s32.totalorder %s18, 7
    %p64 = por %p62, %p63
    %p66 = scmp.ne.s32.totalorder %s49, %s65
    %p67 = scmp.eq.s32.totalorder %s18, 0
    %p68 = por %p66, %p67
    %s70 = sadd.s32 %s69, 1
    %p73 = scmp.eq.s32.totalorder %s12, 7
    %p74 = scmp.ne.s32.totalorder %s69, %s71
    %p75 = scmp.eq.s32.totalorder %s12, 0
    %p76 = por %p74, %p75
    %p77 = scmp.ne.s32.totalorder %s69, %s71
    %p78 = scmp.eq.s32.totalorder %s17, 7
    %p79 = por %p77, %p78
    %p80 = scmp.ne.s32.totalorder %s71, %s72
    %p81 = scmp.eq.s32.totalorder %s17, 0
    %p82 = por %p80, %p81
    %p83 = scmp.ne.s32.totalorder %s71, %s72
    %p84 = scmp.eq.s32.totalorder %s18, 7
    %p85 = por %p83, %p84
    %p87 = scmp.ne.s32.totalorder %s72, %s86
    %p88 = scmp.eq.s32.totalorder %s18, 0
    %p89 = por %p87, %p88
    %s91 = sadd.s32 %s90, 1
    %p94 = scmp.eq.s32.totalorder %s12, 7
    %p95 = scmp.ne.s32.totalorder %s90, %s92
    %p96 = scmp.eq.s32.totalorder %s12, 0
    %p97 = por %p95, %p96
    %p98 = scmp.ne.s32.totalorder %s90, %s92
    %p99 = scmp.eq.s32.totalorder %s17, 7
    %p100 = por %p98, %p99
    %p101 = scmp.ne.s32.totalorder %s92, %s93
    %p102 = scmp.eq.s32.totalorder %s17, 0
    %p103 = por %p101, %p102
    %p104 = scmp.ne.s32.totalorder %s92, %s93
    %p105 = scmp.eq.s32.totalorder %s18, 7
    %p106 = por %p104, %p105
    %p108 = scmp.ne.s32.totalorder %s93, %s107
    %p109 = scmp.eq.s32.totalorder %s18, 0
    %p110 = por %p108, %p109
    %s112 = sadd.s32 %s111, 1
    %p115 = scmp.eq.s32.totalorder %s12, 7
    %p116 = scmp.ne.s32.totalorder %s111, %s113
    %p117 = scmp.eq.s32.totalorder %s12, 0
    %p118 = por %p116, %p117
    %p119 = scmp.ne.s32.totalorder %s111, %s113
    %p120 = scmp.eq.s32.totalorder %s17, 7
    %p121 = por %p119, %p120
    %p122 = scmp.ne.s32.totalorder %s113, %s114
    %p123 = scmp.eq.s32.totalorder %s17, 0
    %p124 = por %p122, %p123
    %p125 = scmp.ne.s32.totalorder %s113, %s114
    %p126 = scmp.eq.s32.totalorder %s18, 7
    %p127 = por %p125, %p126
    %p129 = scmp.ne.s32.totalorder %s114, %s128
    %p130 = scmp.eq.s32.totalorder %s18, 0
    %p131 = por %p129, %p130
    %s132 = smul.u32 %s19, 2
    %s133 = sadd.s32 %s132, %s20
    %s134 = smul.u32 %s38, 2
    %s135 = sadd.s32 %s134, %s34
    %s136 = ssub.s32 %s133, %s135
    %s137 = ssub.s32 %s21, %s30
    %s138 = sor.u32 %s136, %s137
    %p139 = scmp.eq.s32.totalorder %s138, 0
    %s141 = sadd.s32 %s140, 1
    %s142 = scalar_select %p139, %s140, %s141
    %p145 = pneg %p139
    %p146 = scmp.eq.s32.totalorder %s12, 7
    %p147 = por %p145, %p146
    %p148 = scmp.ne.s32.totalorder %s140, %s143
    %p149 = scmp.eq.s32.totalorder %s12, 0
    %p150 = por %p148, %p149
    %p151 = scmp.ne.s32.totalorder %s140, %s143
    %p152 = scmp.eq.s32.totalorder %s17, 7
    %p153 = por %p151, %p152
    %p154 = scmp.ne.s32.totalorder %s143, %s144
    %p155 = scmp.eq.s32.totalorder %s17, 0
    %p156 = por %p154, %p155
    %p157 = scmp.ne.s32.totalorder %s143, %s144
    %p158 = scmp.eq.s32.totalorder %s18, 7
    %p159 = por %p157, %p158
    %p161 = scmp.ne.s32.totalorder %s144, %s160
    %p162 = scmp.eq.s32.totalorder %s18, 0
    %p163 = por %p161, %p162
    %s164 = ssub.s32 %s19, %s38
    %p165 = scmp.eq.s32.totalorder %s164, 0
    %s167 = sadd.s32 %s166, 1
    %s168 = scalar_select %p165, %s166, %s167
    %p171 = pneg %p165
    %p172 = scmp.eq.s32.totalorder %s12, 7
    %p173 = por %p171, %p172
    %p174 = scmp.ne.s32.totalorder %s166, %s169
    %p175 = scmp.eq.s32.totalorder %s12, 0
    %p176 = por %p174, %p175
    %p177 = scmp.ne.s32.totalorder %s166, %s169
    %p178 = scmp.eq.s32.totalorder %s17, 7
    %p179 = por %p177, %p178
    %p180 = scmp.ne.s32.totalorder %s169, %s170
    %p181 = scmp.eq.s32.totalorder %s17, 0
    %p182 = por %p180, %p181
    %p183 = scmp.ne.s32.totalorder %s169, %s170
    %p184 = scmp.eq.s32.totalorder %s18, 7
    %p185 = por %p183, %p184
    %p187 = scmp.ne.s32.totalorder %s170, %s186
    %p188 = scmp.eq.s32.totalorder %s18, 0
    %p189 = por %p187, %p188
    %p190 = scmp.le.s32.totalorder 1, %s12
    %p191 = scmp.lt.s32.totalorder %s12, 9
    %p192 = pnand %p190, %p191
    %p193 = pneg %p192
    // Predicated region
    $region9: #{_lambda_.6} parent=5 // pred_check
      _
    $region10: #{_lambda_.6} parent=5 // pred_check_branch
      %195 = sbr.rel (%p192) target = $region12
    $region11: #{_lambda_.6} parent=5 // pred_region
      %s196 = ssub.s32 %s12, 1
      // Predicated region
      $region13: #{_lambda_.6} parent=11 // pred_check
        %p197 = pneg %p82
      $region14: #{_lambda_.6} parent=11 // pred_check_branch
        %199 = sbr.rel (%p197) target = $region16
      $region15: #{_lambda_.6} parent=11 // pred_region
        _
      $region16: #{_lambda_.6} parent=11 // pred_fallthru
        _
      // Predicated region
      $region17: #{_lambda_.6} parent=11 // pred_check
        %p200 = pneg %p103
      $region18: #{_lambda_.6} parent=11 // pred_check_branch
        %202 = sbr.rel (%p200) target = $region20
      $region19: #{_lambda_.6} parent=11 // pred_region
        _
      $region20: #{_lambda_.6} parent=11 // pred_fallthru
        _
      // Predicated region
      $region21: #{_lambda_.6} parent=11 // pred_check
        %p203 = pneg %p124
      $region22: #{_lambda_.6} parent=11 // pred_check_branch
        %205 = sbr.rel (%p203) target = $region24
      $region23: #{_lambda_.6} parent=11 // pred_region
        _
      $region24: #{_lambda_.6} parent=11 // pred_fallthru
        _
    $region12: #{_lambda_.6} parent=5 // pred_fallthru
      _
    %p206 = scmp.lt.s32.totalorder %s12, 8
    // Predicated region
    $region25: #{_lambda_.6} parent=5 // pred_check
      %p207 = pneg %p206
    $region26: #{_lambda_.6} parent=5 // pred_check_branch
      %209 = sbr.rel (%p207) target = $region28
    $region27: #{_lambda_.6} parent=5 // pred_region
      // Predicated region
      $region29: #{_lambda_.6} parent=27 // pred_check
        %p210 = pneg %p55
      $region30: #{_lambda_.6} parent=27 // pred_check_branch
        %212 = sbr.rel (%p210) target = $region32
      $region31: #{_lambda_.6} parent=27 // pred_region
        %s213 = smul.u32 %s19, 2
        %s214 = sadd.s32 %s213, %s20
        %p215 = scmp.lt.s32.totalorder %s214, 3
        %s216 = scalar_select %p215, %s214, 3
        %s217 = smul.addr %s216, 33
        %s218 = smul.addr %s217, 8
        %s219 = scalar_lea.vmem %s0, %s218
        %s220 = smul.u32 %s19, 2
        %s221 = sadd.s32 %s220, %s20
      $region32: #{_lambda_.6} parent=27 // pred_fallthru
        _
    $region28: #{_lambda_.6} parent=5 // pred_fallthru
      _
    %p222 = scmp.le.s32.totalorder 1, %s12
    %p223 = scmp.lt.s32.totalorder %s12, 9
    %p224 = pnand %p222, %p223
    %p225 = pneg %p224
    // Predicated region
    $region33: #{_lambda_.6} parent=5 // pred_check
      _
    $region34: #{_lambda_.6} parent=5 // pred_check_branch
      %227 = sbr.rel (%p224) target = $region36
    $region35: #{_lambda_.6} parent=5 // pred_region
      %s228 = ssub.s32 %s12, 1
      %s229 = smul.u32 %s22, 2
      %s230 = sadd.s32 %s229, %s23
      %p231 = scmp.lt.s32.totalorder %s230, 3
      %s232 = scalar_select %p231, %s230, 3
      %s233 = smul.addr %s232, 33
      %s234 = smul.addr %s233, 8
      %s235 = scalar_lea.vmem %s0, %s234
      %p236 = pneg %p61
      %p237 = pneg %p58
      %p238 = pneg %p82
      %p239 = pneg %p79
      %p240 = pneg %p103
      %p241 = pneg %p100
      %p242 = pneg %p124
      %p243 = pneg %p121
      %p244 = pneg %p156
      %p245 = pneg %p153
      %s246 = smul.u32 %s22, 2
      %s247 = sadd.s32 %s246, %s23
      %s248 = smul.u32 16, %s24
      %p249 = scmp.lt.s32.totalorder %s247, 3
      %s250 = scalar_select %p249, %s247, 3
      %p251 = scmp.lt.s32.totalorder %s248, 31
      %s252 = scalar_select %p251, %s248, 31
      %s253 = smul.addr %s250, 32
      %s254 = sadd.s32 %s252, %s253
      %s255 = smul.addr %s254, 8
      %s256 = scalar_lea.vmem %s4, %s255
      %p257 = pneg %p182
      %p258 = pneg %p179
      %p259 = scmp.lt.s32.totalorder %s22, 1
      %s260 = scalar_select %p259, %s22, 1
      %s261 = smul.addr %s260, 2
      %s262 = scalar_lea.vmem %s5, %s261
      %s263 = smul.u32 %s22, 2
      %s264 = sadd.s32 %s263, %s23
      %p265 = scmp.lt.s32.totalorder %s264, 3
      %s266 = scalar_select %p265, %s264, 3
      %s267 = smul.addr %s266, 33
      %s268 = smul.addr %s267, 8
      %s269 = scalar_lea.vmem %s0, %s268
      %s270 = smul.u32 %s22, 2
      %s271 = sadd.s32 %s270, %s23
      %s272 = smul.u32 %s22, 2
      %s273 = sadd.s32 %s272, %s23
      %s274 = smul.u32 16, %s24
      %p275 = scmp.lt.s32.totalorder %s273, 3
      %s276 = scalar_select %p275, %s273, 3
      %p277 = scmp.lt.s32.totalorder %s274, 31
      %s278 = scalar_select %p277, %s274, 31
      %s279 = smul.addr %s276, 32
      %s280 = sadd.s32 %s278, %s279
      %s281 = smul.addr %s280, 8
      %s282 = scalar_lea.vmem %s4, %s281
      %s283 = smul.u32 %s22, 2
      %s284 = sadd.s32 %s283, %s23
      %s285 = smul.u32 16, %s24
      %p286 = scmp.lt.s32.totalorder %s22, 1
      %s287 = scalar_select %p286, %s22, 1
      %s288 = smul.addr %s287, 2
      %s289 = scalar_lea.vmem %s5, %s288
      %s290 = smul.u32 %s24, 128
      %s291 = scalar_lea.vmem %s269, %s290
      %v292 = vld [vmem:[%s291] sm:$0xff]
      %v293 = vld [vmem:[%s291 + $0x8] sm:$0xff]
      %v294 = vld [vmem:[%s291 + $0x10] sm:$0xff]
      %v295 = vld [vmem:[%s291 + $0x18] sm:$0xff]
      %v296 = vld [vmem:[%s291 + $0x20] sm:$0xff]
      %v297 = vld [vmem:[%s291 + $0x28] sm:$0xff]
      %v298 = vld [vmem:[%s291 + $0x30] sm:$0xff]
      %v299 = vld [vmem:[%s291 + $0x38] sm:$0xff]
      %v300 = vld [vmem:[%s291 + $0x40] sm:$0xff]
      %v301 = vld [vmem:[%s291 + $0x48] sm:$0xff]
      %v302 = vld [vmem:[%s291 + $0x50] sm:$0xff]
      %v303 = vld [vmem:[%s291 + $0x58] sm:$0xff]
      %v304 = vld [vmem:[%s291 + $0x60] sm:$0xff]
      %v305 = vld [vmem:[%s291 + $0x68] sm:$0xff]
      %v306 = vld [vmem:[%s291 + $0x70] sm:$0xff]
      %v307 = vld [vmem:[%s291 + $0x78] sm:$0xff]
      %v308 = vld [vmem:[%s291 + $0x80] sm:$0xff]
      %v309 = vld [vmem:[%s1] sm:$0xff]
      %v310 = vld [vmem:[%s1 + $0x8] sm:$0xff]
      %v311 = vld [vmem:[%s1 + $0x10] sm:$0xff]
      %v312 = vld [vmem:[%s1 + $0x18] sm:$0xff]
      %v313 = vld [vmem:[%s1 + $0x20] sm:$0xff]
      %v314 = vld [vmem:[%s1 + $0x28] sm:$0xff]
      %v315 = vld [vmem:[%s1 + $0x30] sm:$0xff]
      %v316 = vld [vmem:[%s1 + $0x38] sm:$0xff]
      %v317 = vld [vmem:[%s1 + $0x40] sm:$0xff]
      %v318 = vld [vmem:[%s1 + $0x48] sm:$0xff]
      %v319 = vld [vmem:[%s1 + $0x50] sm:$0xff]
      %v320 = vld [vmem:[%s1 + $0x58] sm:$0xff]
      %v321 = vld [vmem:[%s1 + $0x60] sm:$0xff]
      %v322 = vld [vmem:[%s1 + $0x68] sm:$0xff]
      %v323 = vld [vmem:[%s1 + $0x70] sm:$0xff]
      %v324 = vld [vmem:[%s1 + $0x78] sm:$0xff]
      %s325 = scalar_lea.vmem %s1, 128
      %v326 = vld [vmem:[%s325] sm:$0xff]
      %v327 = vld [vmem:[%s325 + $0x8] sm:$0xff]
      %v328 = vld [vmem:[%s325 + $0x10] sm:$0xff]
      %v329 = vld [vmem:[%s325 + $0x18] sm:$0xff]
      %v330 = vld [vmem:[%s325 + $0x20] sm:$0xff]
      %v331 = vld [vmem:[%s325 + $0x28] sm:$0xff]
      %v332 = vld [vmem:[%s325 + $0x30] sm:$0xff]
      %v333 = vld [vmem:[%s325 + $0x38] sm:$0xff]
      %v334 = vld [vmem:[%s325 + $0x40] sm:$0xff]
      %v335 = vld [vmem:[%s325 + $0x48] sm:$0xff]
      %v336 = vld [vmem:[%s325 + $0x50] sm:$0xff]
      %v337 = vld [vmem:[%s325 + $0x58] sm:$0xff]
      %v338 = vld [vmem:[%s325 + $0x60] sm:$0xff]
      %v339 = vld [vmem:[%s325 + $0x68] sm:$0xff]
      %v340 = vld [vmem:[%s325 + $0x70] sm:$0xff]
      %v341 = vld [vmem:[%s325 + $0x78] sm:$0xff]
      %vm359 = vcmask 1046528
      %v360 = vrot.slane %v292, 1
      %v361 = vrot.slane %v293, 1
      %v362 = vsel %vm359, %v360, %v361
      %v363 = vrot.slane %v294, 1
      %v364 = vsel %vm359, %v361, %v363
      %v365 = vrot.slane %v295, 1
      %v366 = vsel %vm359, %v363, %v365
      %v367 = vrot.slane %v296, 1
      %v368 = vsel %vm359, %v365, %v367
      %v369 = vrot.slane %v297, 1
      %v370 = vsel %vm359, %v367, %v369
      %v371 = vrot.slane %v298, 1
      %v372 = vsel %vm359, %v369, %v371
      %v373 = vrot.slane %v299, 1
      %v374 = vsel %vm359, %v371, %v373
      %v375 = vrot.slane %v300, 1
      %v376 = vsel %vm359, %v373, %v375
      %v377 = vrot.slane %v301, 1
      %v378 = vsel %vm359, %v375, %v377
      %v379 = vrot.slane %v302, 1
      %v380 = vsel %vm359, %v377, %v379
      %v381 = vrot.slane %v303, 1
      %v382 = vsel %vm359, %v379, %v381
      %v383 = vrot.slane %v304, 1
      %v384 = vsel %vm359, %v381, %v383
      %v385 = vrot.slane %v305, 1
      %v386 = vsel %vm359, %v383, %v385
      %v387 = vrot.slane %v306, 1
      %v388 = vsel %vm359, %v385, %v387
      %v389 = vrot.slane %v307, 1
      %v390 = vsel %vm359, %v387, %v389
      %v391 = vrot.slane %v308, 1
      %v392 = vsel %vm359, %v389, %v391
      %409 = vmatprep.subr.mxu0 0.0
      %410 = vmatpush1.msra.mxu0 %v326
      %411 = vmatprep.subr.mxu0 0.0
      %412 = vmatpush1.msra.mxu0 %v327
      %413 = vmatprep.subr.mxu0 0.0
      %414 = vmatpush1.msra.mxu0 %v328
      %415 = vmatprep.subr.mxu0 0.0
      %416 = vmatpush1.msra.mxu0 %v329
      %417 = vmatprep.subr.mxu0 0.0
      %418 = vmatpush1.msra.mxu0 %v330
      %419 = vmatprep.subr.mxu0 0.0
      %420 = vmatpush1.msra.mxu0 %v331
      %421 = vmatprep.subr.mxu0 0.0
      %422 = vmatpush1.msra.mxu0 %v332
      %423 = vmatprep.subr.mxu0 0.0
      %424 = vmatpush1.msra.mxu0 %v333
      %425 = vmatprep.subr.mxu0 0.0
      %426 = vmatpush1.msra.mxu0 %v334
      %427 = vmatprep.subr.mxu0 0.0
      %428 = vmatpush1.msra.mxu0 %v335
      %429 = vmatprep.subr.mxu0 0.0
      %430 = vmatpush1.msra.mxu0 %v336
      %431 = vmatprep.subr.mxu0 0.0
      %432 = vmatpush1.msra.mxu0 %v337
      %433 = vmatprep.subr.mxu0 0.0
      %434 = vmatpush1.msra.mxu0 %v338
      %435 = vmatprep.subr.mxu0 0.0
      %436 = vmatpush1.msra.mxu0 %v339
      %437 = vmatprep.subr.mxu0 0.0
      %438 = vmatpush1.msra.mxu0 %v340
      %439 = vmatprep.subr.mxu0 0.0
      %440 = vmatpush1.msra.mxu0 %v341
      %441 = vmatprep.subr.mxu0 0.0
      %442 = vmatpush1.msra.mxu0 0.0
      %443 = vmatprep.subr.mxu0 0.0
      %444 = vmatpush1.msra.mxu0 0.0
      %445 = vmatprep.subr.mxu0 0.0
      %446 = vmatpush1.msra.mxu0 0.0
      %447 = vmatprep.subr.mxu0 0.0
      %448 = vmatpush1.msra.mxu0 0.0
      %449 = vmatprep.subr.mxu0 0.0
      %450 = vmatpush1.msra.mxu0 0.0
      %451 = vmatprep.subr.mxu0 0.0
      %452 = vmatpush1.msra.mxu0 0.0
      %453 = vmatprep.subr.mxu0 0.0
      %454 = vmatpush1.msra.mxu0 0.0
      %455 = vmatprep.subr.mxu0 0.0
      %456 = vmatpush1.msra.mxu0 0.0
      %457 = vmatprep.subr.mxu0 0.0
      %458 = vmatpush1.msra.mxu0 0.0
      %459 = vmatprep.subr.mxu0 0.0
      %460 = vmatpush1.msra.mxu0 0.0
      %461 = vmatprep.subr.mxu0 0.0
      %462 = vmatpush1.msra.mxu0 0.0
      %463 = vmatprep.subr.mxu0 0.0
      %464 = vmatpush1.msra.mxu0 0.0
      %465 = vmatprep.subr.mxu0 0.0
      %466 = vmatpush1.msra.mxu0 0.0
      %467 = vmatprep.subr.mxu0 0.0
      %468 = vmatpush1.msra.mxu0 0.0
      %469 = vmatprep.subr.mxu0 0.0
      %470 = vmatpush1.msra.mxu0 0.0
      %471 = vmatprep.subr.mxu0 0.0
      %472 = vmatpush1.msra.mxu0 0.0
      %473 = vmatprep.mubr.f32.mxu0 0.0
      %474 = vmatmul.mubr.f32.gmra.mrb[0].mxu0 %v362
      %v475 = vpop.f32.mrb[0].mxu0
      %v476 = vadd.f32 0.0, %v475
      %v477 = vpop.f32.mrb[0].mxu0
      %478 = vmatprep.mubr.f32.mxu0 0.0
      %479 = vmatmul.mubr.f32.gmra.mrb[0].mxu0 %v364
      %v480 = vpop.f32.mrb[0].mxu0
      %v481 = vadd.f32 0.0, %v480
      %v482 = vpop.f32.mrb[0].mxu0
      %483 = vmatprep.mubr.f32.mxu0 0.0
      %484 = vmatmul.mubr.f32.gmra.mrb[0].mxu0 %v366
      %v485 = vpop.f32.mrb[0].mxu0
      %v486 = vadd.f32 0.0, %v485
      %v487 = vpop.f32.mrb[0].mxu0
      %488 = vmatprep.mubr.f32.mxu0 0.0
      %489 = vmatmul.mubr.f32.gmra.mrb[0].mxu0 %v368
      %v490 = vpop.f32.mrb[0].mxu0
      %v491 = vadd.f32 0.0, %v490
      %v492 = vpop.f32.mrb[0].mxu0
      %493 = vmatprep.mubr.f32.mxu0 0.0
      %494 = vmatmul.mubr.f32.gmra.mrb[0].mxu0 %v370
      %v495 = vpop.f32.mrb[0].mxu0
      %v496 = vadd.f32 0.0, %v495
      %v497 = vpop.f32.mrb[0].mxu0
      %498 = vmatprep.mubr.f32.mxu0 0.0
      %499 = vmatmul.mubr.f32.gmra.mrb[0].mxu0 %v372
      %v500 = vpop.f32.mrb[0].mxu0
      %v501 = vadd.f32 0.0, %v500
      %v502 = vpop.f32.mrb[0].mxu0
      %503 = vmatprep.mubr.f32.mxu0 0.0
      %504 = vmatmul.mubr.f32.gmra.mrb[0].mxu0 %v374
      %v505 = vpop.f32.mrb[0].mxu0
      %v506 = vadd.f32 0.0, %v505
      %v507 = vpop.f32.mrb[0].mxu0
      %508 = vmatprep.mubr.f32.mxu0 0.0
      %509 = vmatmul.mubr.f32.gmra.mrb[0].mxu0 %v376
      %v510 = vpop.f32.mrb[0].mxu0
      %v511 = vadd.f32 0.0, %v510
      %v512 = vpop.f32.mrb[0].mxu0
      %513 = vmatprep.mubr.f32.mxu0 0.0
      %514 = vmatmul.mubr.f32.gmra.mrb[0].mxu0 %v378
      %v515 = vpop.f32.mrb[0].mxu0
      %v516 = vadd.f32 0.0, %v515
      %v517 = vpop.f32.mrb[0].mxu0
      %518 = vmatprep.mubr.f32.mxu0 0.0
      %519 = vmatmul.mubr.f32.gmra.mrb[0].mxu0 %v380
      %v520 = vpop.f32.mrb[0].mxu0
      %v521 = vadd.f32 0.0, %v520
      %v522 = vpop.f32.mrb[0].mxu0
      %523 = vmatprep.mubr.f32.mxu0 0.0
      %524 = vmatmul.mubr.f32.gmra.mrb[0].mxu0 %v382
      %v525 = vpop.f32.mrb[0].mxu0
      %v526 = vadd.f32 0.0, %v525
      %v527 = vpop.f32.mrb[0].mxu0
      %528 = vmatprep.mubr.f32.mxu0 0.0
      %529 = vmatmul.mubr.f32.gmra.mrb[0].mxu0 %v384
      %v530 = vpop.f32.mrb[0].mxu0
      %v531 = vadd.f32 0.0, %v530
      %v532 = vpop.f32.mrb[0].mxu0
      %533 = vmatprep.mubr.f32.mxu0 0.0
      %534 = vmatmul.mubr.f32.gmra.mrb[0].mxu0 %v386
      %v535 = vpop.f32.mrb[0].mxu0
      %v536 = vadd.f32 0.0, %v535
      %v537 = vpop.f32.mrb[0].mxu0
      %538 = vmatprep.mubr.f32.mxu0 0.0
      %539 = vmatmul.mubr.f32.gmra.mrb[0].mxu0 %v388
      %v540 = vpop.f32.mrb[0].mxu0
      %v541 = vadd.f32 0.0, %v540
      %v542 = vpop.f32.mrb[0].mxu0
      %543 = vmatprep.mubr.f32.mxu0 0.0
      %544 = vmatmul.mubr.f32.gmra.mrb[0].mxu0 %v390
      %v545 = vpop.f32.mrb[0].mxu0
      %v546 = vadd.f32 0.0, %v545
      %v547 = vpop.f32.mrb[0].mxu0
      %548 = vmatprep.mubr.f32.mxu0 0.0
      %549 = vmatmul.mubr.f32.gmra.mrb[0].mxu0 %v392
      %v550 = vpop.f32.mrb[0].mxu0
      %v551 = vadd.f32 0.0, %v550
      %v552 = vpop.f32.mrb[0].mxu0
      %553 = vdwg.mxu0
      %554 = vmatprep.subr.mxu0 0.0
      %555 = vmatpush1.msra.mxu0 %v309
      %556 = vmatprep.subr.mxu0 0.0
      %557 = vmatpush1.msra.mxu0 %v310
      %558 = vmatprep.subr.mxu0 0.0
      %559 = vmatpush1.msra.mxu0 %v311
      %560 = vmatprep.subr.mxu0 0.0
      %561 = vmatpush1.msra.mxu0 %v312
      %562 = vmatprep.subr.mxu0 0.0
      %563 = vmatpush1.msra.mxu0 %v313
      %564 = vmatprep.subr.mxu0 0.0
      %565 = vmatpush1.msra.mxu0 %v314
      %566 = vmatprep.subr.mxu0 0.0
      %567 = vmatpush1.msra.mxu0 %v315
      %568 = vmatprep.subr.mxu0 0.0
      %569 = vmatpush1.msra.mxu0 %v316
      %570 = vmatprep.subr.mxu0 0.0
      %571 = vmatpush1.msra.mxu0 %v317
      %572 = vmatprep.subr.mxu0 0.0
      %573 = vmatpush1.msra.mxu0 %v318
      %574 = vmatprep.subr.mxu0 0.0
      %575 = vmatpush1.msra.mxu0 %v319
      %576 = vmatprep.subr.mxu0 0.0
      %577 = vmatpush1.msra.mxu0 %v320
      %578 = vmatprep.subr.mxu0 0.0
      %579 = vmatpush1.msra.mxu0 %v321
      %580 = vmatprep.subr.mxu0 0.0
      %581 = vmatpush1.msra.mxu0 %v322
      %582 = vmatprep.subr.mxu0 0.0
      %583 = vmatpush1.msra.mxu0 %v323
      %584 = vmatprep.subr.mxu0 0.0
      %585 = vmatpush1.msra.mxu0 %v324
      %586 = vmatprep.subr.mxu0 0.0
      %587 = vmatpush1.msra.mxu0 0.0
      %588 = vmatprep.subr.mxu0 0.0
      %589 = vmatpush1.msra.mxu0 0.0
      %590 = vmatprep.subr.mxu0 0.0
      %591 = vmatpush1.msra.mxu0 0.0
      %592 = vmatprep.subr.mxu0 0.0
      %593 = vmatpush1.msra.mxu0 0.0
      %594 = vmatprep.subr.mxu0 0.0
      %595 = vmatpush1.msra.mxu0 0.0
      %596 = vmatprep.subr.mxu0 0.0
      %597 = vmatpush1.msra.mxu0 0.0
      %598 = vmatprep.subr.mxu0 0.0
      %599 = vmatpush1.msra.mxu0 0.0
      %600 = vmatprep.subr.mxu0 0.0
      %601 = vmatpush1.msra.mxu0 0.0
      %602 = vmatprep.subr.mxu0 0.0
      %603 = vmatpush1.msra.mxu0 0.0
      %604 = vmatprep.subr.mxu0 0.0
      %605 = vmatpush1.msra.mxu0 0.0
      %606 = vmatprep.subr.mxu0 0.0
      %607 = vmatpush1.msra.mxu0 0.0
      %608 = vmatprep.subr.mxu0 0.0
      %609 = vmatpush1.msra.mxu0 0.0
      %610 = vmatprep.subr.mxu0 0.0
      %611 = vmatpush1.msra.mxu0 0.0
      %612 = vmatprep.subr.mxu0 0.0
      %613 = vmatpush1.msra.mxu0 0.0
      %614 = vmatprep.subr.mxu0 0.0
      %615 = vmatpush1.msra.mxu0 0.0
      %616 = vmatprep.subr.mxu0 0.0
      %617 = vmatpush1.msra.mxu0 0.0
      %618 = vmatprep.mubr.f32.mxu0 0.0
      %619 = vmatmul.mubr.f32.gmra.mrb[0].mxu0 %v292
      %v620 = vpop.f32.mrb[0].mxu0
      %v621 = vadd.f32 %v476, %v620
      %v622 = vpop.f32.mrb[0].mxu0
      %623 = vmatprep.mubr.f32.mxu0 0.0
      %624 = vmatmul.mubr.f32.gmra.mrb[0].mxu0 %v293
      %v625 = vpop.f32.mrb[0].mxu0
      %v626 = vadd.f32 %v481, %v625
      %v627 = vpop.f32.mrb[0].mxu0
      %628 = vmatprep.mubr.f32.mxu0 0.0
      %629 = vmatmul.mubr.f32.gmra.mrb[0].mxu0 %v294
      %v630 = vpop.f32.mrb[0].mxu0
      %v631 = vadd.f32 %v486, %v630
      %v632 = vpop.f32.mrb[0].mxu0
      %633 = vmatprep.mubr.f32.mxu0 0.0
      %634 = vmatmul.mubr.f32.gmra.mrb[0].mxu0 %v295
      %v635 = vpop.f32.mrb[0].mxu0
      %v636 = vadd.f32 %v491, %v635
      %v637 = vpop.f32.mrb[0].mxu0
      %638 = vmatprep.mubr.f32.mxu0 0.0
      %639 = vmatmul.mubr.f32.gmra.mrb[0].mxu0 %v296
      %v640 = vpop.f32.mrb[0].mxu0
      %v641 = vadd.f32 %v496, %v640
      %v642 = vpop.f32.mrb[0].mxu0
      %643 = vmatprep.mubr.f32.mxu0 0.0
      %644 = vmatmul.mubr.f32.gmra.mrb[0].mxu0 %v297
      %v645 = vpop.f32.mrb[0].mxu0
      %v646 = vadd.f32 %v501, %v645
      %v647 = vpop.f32.mrb[0].mxu0
      %648 = vmatprep.mubr.f32.mxu0 0.0
      %649 = vmatmul.mubr.f32.gmra.mrb[0].mxu0 %v298
      %v650 = vpop.f32.mrb[0].mxu0
      %v651 = vadd.f32 %v506, %v650
      %v652 = vpop.f32.mrb[0].mxu0
      %653 = vmatprep.mubr.f32.mxu0 0.0
      %654 = vmatmul.mubr.f32.gmra.mrb[0].mxu0 %v299
      %v655 = vpop.f32.mrb[0].mxu0
      %v656 = vadd.f32 %v511, %v655
      %v657 = vpop.f32.mrb[0].mxu0
      %658 = vmatprep.mubr.f32.mxu0 0.0
      %659 = vmatmul.mubr.f32.gmra.mrb[0].mxu0 %v300
      %v660 = vpop.f32.mrb[0].mxu0
      %v661 = vadd.f32 %v516, %v660
      %v662 = vpop.f32.mrb[0].mxu0
      %663 = vmatprep.mubr.f32.mxu0 0.0
      %664 = vmatmul.mubr.f32.gmra.mrb[0].mxu0 %v301
      %v665 = vpop.f32.mrb[0].mxu0
      %v666 = vadd.f32 %v521, %v665
      %v667 = vpop.f32.mrb[0].mxu0
      %668 = vmatprep.mubr.f32.mxu0 0.0
      %669 = vmatmul.mubr.f32.gmra.mrb[0].mxu0 %v302
      %v670 = vpop.f32.mrb[0].mxu0
      %v671 = vadd.f32 %v526, %v670
      %v672 = vpop.f32.mrb[0].mxu0
      %673 = vmatprep.mubr.f32.mxu0 0.0
      %674 = vmatmul.mubr.f32.gmra.mrb[0].mxu0 %v303
      %v675 = vpop.f32.mrb[0].mxu0
      %v676 = vadd.f32 %v531, %v675
      %v677 = vpop.f32.mrb[0].mxu0
      %678 = vmatprep.mubr.f32.mxu0 0.0
      %679 = vmatmul.mubr.f32.gmra.mrb[0].mxu0 %v304
      %v680 = vpop.f32.mrb[0].mxu0
      %v681 = vadd.f32 %v536, %v680
      %v682 = vpop.f32.mrb[0].mxu0
      %683 = vmatprep.mubr.f32.mxu0 0.0
      %684 = vmatmul.mubr.f32.gmra.mrb[0].mxu0 %v305
      %v685 = vpop.f32.mrb[0].mxu0
      %v686 = vadd.f32 %v541, %v685
      %v687 = vpop.f32.mrb[0].mxu0
      %688 = vmatprep.mubr.f32.mxu0 0.0
      %689 = vmatmul.mubr.f32.gmra.mrb[0].mxu0 %v306
      %v690 = vpop.f32.mrb[0].mxu0
      %v691 = vadd.f32 %v546, %v690
      %v692 = vpop.f32.mrb[0].mxu0
      %693 = vmatprep.mubr.f32.mxu0 0.0
      %694 = vmatmul.mubr.f32.gmra.mrb[0].mxu0 %v307
      %v695 = vpop.f32.mrb[0].mxu0
      %v696 = vadd.f32 %v551, %v695
      %v697 = vpop.f32.mrb[0].mxu0
      %698 = vdwg.mxu0
      %s699 = scalar_lea.vmem %s1, 256
      %v700 = vld [vmem:[%s699] sm:$0xff]
      %v701 = vld [vmem:[%s699 + $0x8] sm:$0xff]
      %v702 = vld [vmem:[%s699 + $0x10] sm:$0xff]
      %v703 = vld [vmem:[%s699 + $0x18] sm:$0xff]
      %v704 = vld [vmem:[%s699 + $0x20] sm:$0xff]
      %v705 = vld [vmem:[%s699 + $0x28] sm:$0xff]
      %v706 = vld [vmem:[%s699 + $0x30] sm:$0xff]
      %v707 = vld [vmem:[%s699 + $0x38] sm:$0xff]
      %v708 = vld [vmem:[%s699 + $0x40] sm:$0xff]
      %v709 = vld [vmem:[%s699 + $0x48] sm:$0xff]
      %v710 = vld [vmem:[%s699 + $0x50] sm:$0xff]
      %v711 = vld [vmem:[%s699 + $0x58] sm:$0xff]
      %v712 = vld [vmem:[%s699 + $0x60] sm:$0xff]
      %v713 = vld [vmem:[%s699 + $0x68] sm:$0xff]
      %v714 = vld [vmem:[%s699 + $0x70] sm:$0xff]
      %v715 = vld [vmem:[%s699 + $0x78] sm:$0xff]
      %vm716 = vcmask 1045504
      %v717 = vrot.slane %v292, 2
      %v718 = vrot.slane %v293, 2
      %v719 = vsel %vm716, %v717, %v718
      %v720 = vrot.slane %v294, 2
      %v721 = vsel %vm716, %v718, %v720
      %v722 = vrot.slane %v295, 2
      %v723 = vsel %vm716, %v720, %v722
      %v724 = vrot.slane %v296, 2
      %v725 = vsel %vm716, %v722, %v724
      %v726 = vrot.slane %v297, 2
      %v727 = vsel %vm716, %v724, %v726
      %v728 = vrot.slane %v298, 2
      %v729 = vsel %vm716, %v726, %v728
      %v730 = vrot.slane %v299, 2
      %v731 = vsel %vm716, %v728, %v730
      %v732 = vrot.slane %v300, 2
      %v733 = vsel %vm716, %v730, %v732
      %v734 = vrot.slane %v301, 2
      %v735 = vsel %vm716, %v732, %v734
      %v736 = vrot.slane %v302, 2
      %v737 = vsel %vm716, %v734, %v736
      %v738 = vrot.slane %v303, 2
      %v739 = vsel %vm716, %v736, %v738
      %v740 = vrot.slane %v304, 2
      %v741 = vsel %vm716, %v738, %v740
      %v742 = vrot.slane %v305, 2
      %v743 = vsel %vm716, %v740, %v742
      %v744 = vrot.slane %v306, 2
      %v745 = vsel %vm716, %v742, %v744
      %v746 = vrot.slane %v307, 2
      %v747 = vsel %vm716, %v744, %v746
      %v748 = vrot.slane %v308, 2
      %v749 = vsel %vm716, %v746, %v748
      %766 = vmatprep.subr.mxu0 0.0
      %767 = vmatpush1.msra.mxu0 %v700
      %768 = vmatprep.subr.mxu0 0.0
      %769 = vmatpush1.msra.mxu0 %v701
      %770 = vmatprep.subr.mxu0 0.0
      %771 = vmatpush1.msra.mxu0 %v702
      %772 = vmatprep.subr.mxu0 0.0
      %773 = vmatpush1.msra.mxu0 %v703
      %774 = vmatprep.subr.mxu0 0.0
      %775 = vmatpush1.msra.mxu0 %v704
      %776 = vmatprep.subr.mxu0 0.0
      %777 = vmatpush1.msra.mxu0 %v705
      %778 = vmatprep.subr.mxu0 0.0
      %779 = vmatpush1.msra.mxu0 %v706
      %780 = vmatprep.subr.mxu0 0.0
      %781 = vmatpush1.msra.mxu0 %v707
      %782 = vmatprep.subr.mxu0 0.0
      %783 = vmatpush1.msra.mxu0 %v708
      %784 = vmatprep.subr.mxu0 0.0
      %785 = vmatpush1.msra.mxu0 %v709
      %786 = vmatprep.subr.mxu0 0.0
      %787 = vmatpush1.msra.mxu0 %v710
      %788 = vmatprep.subr.mxu0 0.0
      %789 = vmatpush1.msra.mxu0 %v711
      %790 = vmatprep.subr.mxu0 0.0
      %791 = vmatpush1.msra.mxu0 %v712
      %792 = vmatprep.subr.mxu0 0.0
      %793 = vmatpush1.msra.mxu0 %v713
      %794 = vmatprep.subr.mxu0 0.0
      %795 = vmatpush1.msra.mxu0 %v714
      %796 = vmatprep.subr.mxu0 0.0
      %797 = vmatpush1.msra.mxu0 %v715
      %798 = vmatprep.subr.mxu0 0.0
      %799 = vmatpush1.msra.mxu0 0.0
      %800 = vmatprep.subr.mxu0 0.0
      %801 = vmatpush1.msra.mxu0 0.0
      %802 = vmatprep.subr.mxu0 0.0
      %803 = vmatpush1.msra.mxu0 0.0
      %804 = vmatprep.subr.mxu0 0.0
      %805 = vmatpush1.msra.mxu0 0.0
      %806 = vmatprep.subr.mxu0 0.0
      %807 = vmatpush1.msra.mxu0 0.0
      %808 = vmatprep.subr.mxu0 0.0
      %809 = vmatpush1.msra.mxu0 0.0
      %810 = vmatprep.subr.mxu0 0.0
      %811 = vmatpush1.msra.mxu0 0.0
      %812 = vmatprep.subr.mxu0 0.0
      %813 = vmatpush1.msra.mxu0 0.0
      %814 = vmatprep.subr.mxu0 0.0
      %815 = vmatpush1.msra.mxu0 0.0
      %816 = vmatprep.subr.mxu0 0.0
      %817 = vmatpush1.msra.mxu0 0.0
      %818 = vmatprep.subr.mxu0 0.0
      %819 = vmatpush1.msra.mxu0 0.0
      %820 = vmatprep.subr.mxu0 0.0
      %821 = vmatpush1.msra.mxu0 0.0
      %822 = vmatprep.subr.mxu0 0.0
      %823 = vmatpush1.msra.mxu0 0.0
      %824 = vmatprep.subr.mxu0 0.0
      %825 = vmatpush1.msra.mxu0 0.0
      %826 = vmatprep.subr.mxu0 0.0
      %827 = vmatpush1.msra.mxu0 0.0
      %828 = vmatprep.subr.mxu0 0.0
      %829 = vmatpush1.msra.mxu0 0.0
      %830 = vmatprep.mubr.f32.mxu0 0.0
      %831 = vmatmul.mubr.f32.gmra.mrb[0].mxu0 %v719
      %v832 = vpop.f32.mrb[0].mxu0
      %v833 = vadd.f32 0.0, %v832
      %v834 = vpop.f32.mrb[0].mxu0
      %835 = vmatprep.mubr.f32.mxu0 0.0
      %836 = vmatmul.mubr.f32.gmra.mrb[0].mxu0 %v721
      %v837 = vpop.f32.mrb[0].mxu0
      %v838 = vadd.f32 0.0, %v837
      %v839 = vpop.f32.mrb[0].mxu0
      %840 = vmatprep.mubr.f32.mxu0 0.0
      %841 = vmatmul.mubr.f32.gmra.mrb[0].mxu0 %v723
      %v842 = vpop.f32.mrb[0].mxu0
      %v843 = vadd.f32 0.0, %v842
      %v844 = vpop.f32.mrb[0].mxu0
      %845 = vmatprep.mubr.f32.mxu0 0.0
      %846 = vmatmul.mubr.f32.gmra.mrb[0].mxu0 %v725
      %v847 = vpop.f32.mrb[0].mxu0
      %v848 = vadd.f32 0.0, %v847
      %v849 = vpop.f32.mrb[0].mxu0
      %850 = vmatprep.mubr.f32.mxu0 0.0
      %851 = vmatmul.mubr.f32.gmra.mrb[0].mxu0 %v727
      %v852 = vpop.f32.mrb[0].mxu0
      %v853 = vadd.f32 0.0, %v852
      %v854 = vpop.f32.mrb[0].mxu0
      %855 = vmatprep.mubr.f32.mxu0 0.0
      %856 = vmatmul.mubr.f32.gmra.mrb[0].mxu0 %v729
      %v857 = vpop.f32.mrb[0].mxu0
      %v858 = vadd.f32 0.0, %v857
      %v859 = vpop.f32.mrb[0].mxu0
      %860 = vmatprep.mubr.f32.mxu0 0.0
      %861 = vmatmul.mubr.f32.gmra.mrb[0].mxu0 %v731
      %v862 = vpop.f32.mrb[0].mxu0
      %v863 = vadd.f32 0.0, %v862
      %v864 = vpop.f32.mrb[0].mxu0
      %865 = vmatprep.mubr.f32.mxu0 0.0
      %866 = vmatmul.mubr.f32.gmra.mrb[0].mxu0 %v733
      %v867 = vpop.f32.mrb[0].mxu0
      %v868 = vadd.f32 0.0, %v867
      %v869 = vpop.f32.mrb[0].mxu0
      %870 = vmatprep.mubr.f32.mxu0 0.0
      %871 = vmatmul.mubr.f32.gmra.mrb[0].mxu0 %v735
      %v872 = vpop.f32.mrb[0].mxu0
      %v873 = vadd.f32 0.0, %v872
      %v874 = vpop.f32.mrb[0].mxu0
      %875 = vmatprep.mubr.f32.mxu0 0.0
      %876 = vmatmul.mubr.f32.gmra.mrb[0].mxu0 %v737
      %v877 = vpop.f32.mrb[0].mxu0
      %v878 = vadd.f32 0.0, %v877
      %v879 = vpop.f32.mrb[0].mxu0
      %880 = vmatprep.mubr.f32.mxu0 0.0
      %881 = vmatmul.mubr.f32.gmra.mrb[0].mxu0 %v739
      %v882 = vpop.f32.mrb[0].mxu0
      %v883 = vadd.f32 0.0, %v882
      %v884 = vpop.f32.mrb[0].mxu0
      %885 = vmatprep.mubr.f32.mxu0 0.0
      %886 = vmatmul.mubr.f32.gmra.mrb[0].mxu0 %v741
      %v887 = vpop.f32.mrb[0].mxu0
      %v888 = vadd.f32 0.0, %v887
      %v889 = vpop.f32.mrb[0].mxu0
      %890 = vmatprep.mubr.f32.mxu0 0.0
      %891 = vmatmul.mubr.f32.gmra.mrb[0].mxu0 %v743
      %v892 = vpop.f32.mrb[0].mxu0
      %v893 = vadd.f32 0.0, %v892
      %v894 = vpop.f32.mrb[0].mxu0
      %895 = vmatprep.mubr.f32.mxu0 0.0
      %896 = vmatmul.mubr.f32.gmra.mrb[0].mxu0 %v745
      %v897 = vpop.f32.mrb[0].mxu0
      %v898 = vadd.f32 0.0, %v897
      %v899 = vpop.f32.mrb[0].mxu0
      %900 = vmatprep.mubr.f32.mxu0 0.0
      %901 = vmatmul.mubr.f32.gmra.mrb[0].mxu0 %v747
      %v902 = vpop.f32.mrb[0].mxu0
      %v903 = vadd.f32 0.0, %v902
      %v904 = vpop.f32.mrb[0].mxu0
      %905 = vmatprep.mubr.f32.mxu0 0.0
      %906 = vmatmul.mubr.f32.gmra.mrb[0].mxu0 %v749
      %v907 = vpop.f32.mrb[0].mxu0
      %v908 = vadd.f32 0.0, %v907
      %v909 = vpop.f32.mrb[0].mxu0
      %910 = vdwg.mxu0
      %v911 = vadd.f32 %v621, %v833
      %v912 = vadd.f32 %v626, %v838
      %v913 = vadd.f32 %v631, %v843
      %v914 = vadd.f32 %v636, %v848
      %v915 = vadd.f32 %v641, %v853
      %v916 = vadd.f32 %v646, %v858
      %v917 = vadd.f32 %v651, %v863
      %v918 = vadd.f32 %v656, %v868
      %v919 = vadd.f32 %v661, %v873
      %v920 = vadd.f32 %v666, %v878
      %v921 = vadd.f32 %v671, %v883
      %v922 = vadd.f32 %v676, %v888
      %v923 = vadd.f32 %v681, %v893
      %v924 = vadd.f32 %v686, %v898
      %v925 = vadd.f32 %v691, %v903
      %v926 = vadd.f32 %v696, %v908
      %s927 = scalar_lea.vmem %s1, 384
      %v928 = vld [vmem:[%s927] sm:$0xff]
      %v929 = vld [vmem:[%s927 + $0x8] sm:$0xff]
      %v930 = vld [vmem:[%s927 + $0x10] sm:$0xff]
      %v931 = vld [vmem:[%s927 + $0x18] sm:$0xff]
      %v932 = vld [vmem:[%s927 + $0x20] sm:$0xff]
      %v933 = vld [vmem:[%s927 + $0x28] sm:$0xff]
      %v934 = vld [vmem:[%s927 + $0x30] sm:$0xff]
      %v935 = vld [vmem:[%s927 + $0x38] sm:$0xff]
      %v936 = vld [vmem:[%s927 + $0x40] sm:$0xff]
      %v937 = vld [vmem:[%s927 + $0x48] sm:$0xff]
      %v938 = vld [vmem:[%s927 + $0x50] sm:$0xff]
      %v939 = vld [vmem:[%s927 + $0x58] sm:$0xff]
      %v940 = vld [vmem:[%s927 + $0x60] sm:$0xff]
      %v941 = vld [vmem:[%s927 + $0x68] sm:$0xff]
      %v942 = vld [vmem:[%s927 + $0x70] sm:$0xff]
      %v943 = vld [vmem:[%s927 + $0x78] sm:$0xff]
      %vm944 = vcmask 1044480
      %v945 = vrot.slane %v292, 3
      %v946 = vrot.slane %v293, 3
      %v947 = vsel %vm944, %v945, %v946
      %v948 = vrot.slane %v294, 3
      %v949 = vsel %vm944, %v946, %v948
      %v950 = vrot.slane %v295, 3
      %v951 = vsel %vm944, %v948, %v950
      %v952 = vrot.slane %v296, 3
      %v953 = vsel %vm944, %v950, %v952
      %v954 = vrot.slane %v297, 3
      %v955 = vsel %vm944, %v952, %v954
      %v956 = vrot.slane %v298, 3
      %v957 = vsel %vm944, %v954, %v956
      %v958 = vrot.slane %v299, 3
      %v959 = vsel %vm944, %v956, %v958
      %v960 = vrot.slane %v300, 3
      %v961 = vsel %vm944, %v958, %v960
      %v962 = vrot.slane %v301, 3
      %v963 = vsel %vm944, %v960, %v962
      %v964 = vrot.slane %v302, 3
      %v965 = vsel %vm944, %v962, %v964
      %v966 = vrot.slane %v303, 3
      %v967 = vsel %vm944, %v964, %v966
      %v968 = vrot.slane %v304, 3
      %v969 = vsel %vm944, %v966, %v968
      %v970 = vrot.slane %v305, 3
      %v971 = vsel %vm944, %v968, %v970
      %v972 = vrot.slane %v306, 3
      %v973 = vsel %vm944, %v970, %v972
      %v974 = vrot.slane %v307, 3
      %v975 = vsel %vm944, %v972, %v974
      %v976 = vrot.slane %v308, 3
      %v977 = vsel %vm944, %v974, %v976
      %994 = vmatprep.subr.mxu0 0.0
      %995 = vmatpush1.msra.mxu0 %v928
      %996 = vmatprep.subr.mxu0 0.0
      %997 = vmatpush1.msra.mxu0 %v929
      %998 = vmatprep.subr.mxu0 0.0
      %999 = vmatpush1.msra.mxu0 %v930
      %1000 = vmatprep.subr.mxu0 0.0
      %1001 = vmatpush1.msra.mxu0 %v931
      %1002 = vmatprep.subr.mxu0 0.0
      %1003 = vmatpush1.msra.mxu0 %v932
      %1004 = vmatprep.subr.mxu0 0.0
      %1005 = vmatpush1.msra.mxu0 %v933
      %1006 = vmatprep.subr.mxu0 0.0
      %1007 = vmatpush1.msra.mxu0 %v934
      %1008 = vmatprep.subr.mxu0 0.0
      %1009 = vmatpush1.msra.mxu0 %v935
      %1010 = vmatprep.subr.mxu0 0.0
      %1011 = vmatpush1.msra.mxu0 %v936
      %1012 = vmatprep.subr.mxu0 0.0
      %1013 = vmatpush1.msra.mxu0 %v937
      %1014 = vmatprep.subr.mxu0 0.0
      %1015 = vmatpush1.msra.mxu0 %v938
      %1016 = vmatprep.subr.mxu0 0.0
      %1017 = vmatpush1.msra.mxu0 %v939
      %1018 = vmatprep.subr.mxu0 0.0
      %1019 = vmatpush1.msra.mxu0 %v940
      %1020 = vmatprep.subr.mxu0 0.0
      %1021 = vmatpush1.msra.mxu0 %v941
      %1022 = vmatprep.subr.mxu0 0.0
      %1023 = vmatpush1.msra.mxu0 %v942
      %1024 = vmatprep.subr.mxu0 0.0
      %1025 = vmatpush1.msra.mxu0 %v943
      %1026 = vmatprep.subr.mxu0 0.0
      %1027 = vmatpush1.msra.mxu0 0.0
      %1028 = vmatprep.subr.mxu0 0.0
      %1029 = vmatpush1.msra.mxu0 0.0
      %1030 = vmatprep.subr.mxu0 0.0
      %1031 = vmatpush1.msra.mxu0 0.0
      %1032 = vmatprep.subr.mxu0 0.0
      %1033 = vmatpush1.msra.mxu0 0.0
      %1034 = vmatprep.subr.mxu0 0.0
      %1035 = vmatpush1.msra.mxu0 0.0
      %1036 = vmatprep.subr.mxu0 0.0
      %1037 = vmatpush1.msra.mxu0 0.0
      %1038 = vmatprep.subr.mxu0 0.0
      %1039 = vmatpush1.msra.mxu0 0.0
      %1040 = vmatprep.subr.mxu0 0.0
      %1041 = vmatpush1.msra.mxu0 0.0
      %1042 = vmatprep.subr.mxu0 0.0
      %1043 = vmatpush1.msra.mxu0 0.0
      %1044 = vmatprep.subr.mxu0 0.0
      %1045 = vmatpush1.msra.mxu0 0.0
      %1046 = vmatprep.subr.mxu0 0.0
      %1047 = vmatpush1.msra.mxu0 0.0
      %1048 = vmatprep.subr.mxu0 0.0
      %1049 = vmatpush1.msra.mxu0 0.0
      %1050 = vmatprep.subr.mxu0 0.0
      %1051 = vmatpush1.msra.mxu0 0.0
      %1052 = vmatprep.subr.mxu0 0.0
      %1053 = vmatpush1.msra.mxu0 0.0
      %1054 = vmatprep.subr.mxu0 0.0
      %1055 = vmatpush1.msra.mxu0 0.0
      %1056 = vmatprep.subr.mxu0 0.0
      %1057 = vmatpush1.msra.mxu0 0.0
      %1058 = vmatprep.mubr.f32.mxu0 0.0
      %1059 = vmatmul.mubr.f32.gmra.mrb[0].mxu0 %v947
      %v1060 = vpop.f32.mrb[0].mxu0
      %v1061 = vadd.f32 0.0, %v1060
      %v1062 = vpop.f32.mrb[0].mxu0
      %1063 = vmatprep.mubr.f32.mxu0 0.0
      %1064 = vmatmul.mubr.f32.gmra.mrb[0].mxu0 %v949
      %v1065 = vpop.f32.mrb[0].mxu0
      %v1066 = vadd.f32 0.0, %v1065
      %v1067 = vpop.f32.mrb[0].mxu0
      %1068 = vmatprep.mubr.f32.mxu0 0.0
      %1069 = vmatmul.mubr.f32.gmra.mrb[0].mxu0 %v951
      %v1070 = vpop.f32.mrb[0].mxu0
      %v1071 = vadd.f32 0.0, %v1070
      %v1072 = vpop.f32.mrb[0].mxu0
      %1073 = vmatprep.mubr.f32.mxu0 0.0
      %1074 = vmatmul.mubr.f32.gmra.mrb[0].mxu0 %v953
      %v1075 = vpop.f32.mrb[0].mxu0
      %v1076 = vadd.f32 0.0, %v1075
      %v1077 = vpop.f32.mrb[0].mxu0
      %1078 = vmatprep.mubr.f32.mxu0 0.0
      %1079 = vmatmul.mubr.f32.gmra.mrb[0].mxu0 %v955
      %v1080 = vpop.f32.mrb[0].mxu0
      %v1081 = vadd.f32 0.0, %v1080
      %v1082 = vpop.f32.mrb[0].mxu0
      %1083 = vmatprep.mubr.f32.mxu0 0.0
      %1084 = vmatmul.mubr.f32.gmra.mrb[0].mxu0 %v957
      %v1085 = vpop.f32.mrb[0].mxu0
      %v1086 = vadd.f32 0.0, %v1085
      %v1087 = vpop.f32.mrb[0].mxu0
      %1088 = vmatprep.mubr.f32.mxu0 0.0
      %1089 = vmatmul.mubr.f32.gmra.mrb[0].mxu0 %v959
      %v1090 = vpop.f32.mrb[0].mxu0
      %v1091 = vadd.f32 0.0, %v1090
      %v1092 = vpop.f32.mrb[0].mxu0
      %1093 = vmatprep.mubr.f32.mxu0 0.0
      %1094 = vmatmul.mubr.f32.gmra.mrb[0].mxu0 %v961
      %v1095 = vpop.f32.mrb[0].mxu0
      %v1096 = vadd.f32 0.0, %v1095
      %v1097 = vpop.f32.mrb[0].mxu0
      %1098 = vmatprep.mubr.f32.mxu0 0.0
      %1099 = vmatmul.mubr.f32.gmra.mrb[0].mxu0 %v963
      %v1100 = vpop.f32.mrb[0].mxu0
      %v1101 = vadd.f32 0.0, %v1100
      %v1102 = vpop.f32.mrb[0].mxu0
      %1103 = vmatprep.mubr.f32.mxu0 0.0
      %1104 = vmatmul.mubr.f32.gmra.mrb[0].mxu0 %v965
      %v1105 = vpop.f32.mrb[0].mxu0
      %v1106 = vadd.f32 0.0, %v1105
      %v1107 = vpop.f32.mrb[0].mxu0
      %1108 = vmatprep.mubr.f32.mxu0 0.0
      %1109 = vmatmul.mubr.f32.gmra.mrb[0].mxu0 %v967
      %v1110 = vpop.f32.mrb[0].mxu0
      %v1111 = vadd.f32 0.0, %v1110
      %v1112 = vpop.f32.mrb[0].mxu0
      %1113 = vmatprep.mubr.f32.mxu0 0.0
      %1114 = vmatmul.mubr.f32.gmra.mrb[0].mxu0 %v969
      %v1115 = vpop.f32.mrb[0].mxu0
      %v1116 = vadd.f32 0.0, %v1115
      %v1117 = vpop.f32.mrb[0].mxu0
      %1118 = vmatprep.mubr.f32.mxu0 0.0
      %1119 = vmatmul.mubr.f32.gmra.mrb[0].mxu0 %v971
      %v1120 = vpop.f32.mrb[0].mxu0
      %v1121 = vadd.f32 0.0, %v1120
      %v1122 = vpop.f32.mrb[0].mxu0
      %1123 = vmatprep.mubr.f32.mxu0 0.0
      %1124 = vmatmul.mubr.f32.gmra.mrb[0].mxu0 %v973
      %v1125 = vpop.f32.mrb[0].mxu0
      %v1126 = vadd.f32 0.0, %v1125
      %v1127 = vpop.f32.mrb[0].mxu0
      %1128 = vmatprep.mubr.f32.mxu0 0.0
      %1129 = vmatmul.mubr.f32.gmra.mrb[0].mxu0 %v975
      %v1130 = vpop.f32.mrb[0].mxu0
      %v1131 = vadd.f32 0.0, %v1130
      %v1132 = vpop.f32.mrb[0].mxu0
      %1133 = vmatprep.mubr.f32.mxu0 0.0
      %1134 = vmatmul.mubr.f32.gmra.mrb[0].mxu0 %v977
      %v1135 = vpop.f32.mrb[0].mxu0
      %v1136 = vadd.f32 0.0, %v1135
      %v1137 = vpop.f32.mrb[0].mxu0
      %1138 = vdwg.mxu0
      %v1139 = vadd.f32 %v911, %v1061
      %v1140 = vadd.f32 %v912, %v1066
      %v1141 = vadd.f32 %v913, %v1071
      %v1142 = vadd.f32 %v914, %v1076
      %v1143 = vadd.f32 %v915, %v1081
      %v1144 = vadd.f32 %v916, %v1086
      %v1145 = vadd.f32 %v917, %v1091
      %v1146 = vadd.f32 %v918, %v1096
      %v1147 = vadd.f32 %v919, %v1101
      %v1148 = vadd.f32 %v920, %v1106
      %v1149 = vadd.f32 %v921, %v1111
      %v1150 = vadd.f32 %v922, %v1116
      %v1151 = vadd.f32 %v923, %v1121
      %v1152 = vadd.f32 %v924, %v1126
      %v1153 = vadd.f32 %v925, %v1131
      %v1154 = vadd.f32 %v926, %v1136
      %s1155 = scalar_lea.vmem %s1, 512
      %v1156 = vld [vmem:[%s1155] sm:$0xff]
      %v1157 = vld [vmem:[%s1155 + $0x8] sm:$0xff]
      %v1158 = vld [vmem:[%s1155 + $0x10] sm:$0xff]
      %v1159 = vld [vmem:[%s1155 + $0x18] sm:$0xff]
      %v1160 = vld [vmem:[%s1155 + $0x20] sm:$0xff]
      %v1161 = vld [vmem:[%s1155 + $0x28] sm:$0xff]
      %v1162 = vld [vmem:[%s1155 + $0x30] sm:$0xff]
      %v1163 = vld [vmem:[%s1155 + $0x38] sm:$0xff]
      %v1164 = vld [vmem:[%s1155 + $0x40] sm:$0xff]
      %v1165 = vld [vmem:[%s1155 + $0x48] sm:$0xff]
      %v1166 = vld [vmem:[%s1155 + $0x50] sm:$0xff]
      %v1167 = vld [vmem:[%s1155 + $0x58] sm:$0xff]
      %v1168 = vld [vmem:[%s1155 + $0x60] sm:$0xff]
      %v1169 = vld [vmem:[%s1155 + $0x68] sm:$0xff]
      %v1170 = vld [vmem:[%s1155 + $0x70] sm:$0xff]
      %v1171 = vld [vmem:[%s1155 + $0x78] sm:$0xff]
      %vm1172 = vcmask 1043456
      %v1173 = vrot.slane %v292, 4
      %v1174 = vrot.slane %v293, 4
      %v1175 = vsel %vm1172, %v1173, %v1174
      %v1176 = vrot.slane %v294, 4
      %v1177 = vsel %vm1172, %v1174, %v1176
      %v1178 = vrot.slane %v295, 4
      %v1179 = vsel %vm1172, %v1176, %v1178
      %v1180 = vrot.slane %v296, 4
      %v1181 = vsel %vm1172, %v1178, %v1180
      %v1182 = vrot.slane %v297, 4
      %v1183 = vsel %vm1172, %v1180, %v1182
      %v1184 = vrot.slane %v298, 4
      %v1185 = vsel %vm1172, %v1182, %v1184
      %v1186 = vrot.slane %v299, 4
      %v1187 = vsel %vm1172, %v1184, %v1186
      %v1188 = vrot.slane %v300, 4
      %v1189 = vsel %vm1172, %v1186, %v1188
      %v1190 = vrot.slane %v301, 4
      %v1191 = vsel %vm1172, %v1188, %v1190
      %v1192 = vrot.slane %v302, 4
      %v1193 = vsel %vm1172, %v1190, %v1192
      %v1194 = vrot.slane %v303, 4
      %v1195 = vsel %vm1172, %v1192, %v1194
      %v1196 = vrot.slane %v304, 4
      %v1197 = vsel %vm1172, %v1194, %v1196
      %v1198 = vrot.slane %v305, 4
      %v1199 = vsel %vm1172, %v1196, %v1198
      %v1200 = vrot.slane %v306, 4
      %v1201 = vsel %vm1172, %v1198, %v1200
      %v1202 = vrot.slane %v307, 4
      %v1203 = vsel %vm1172, %v1200, %v1202
      %v1204 = vrot.slane %v308, 4
      %v1205 = vsel %vm1172, %v1202, %v1204
      %1222 = vmatprep.subr.mxu0 0.0
      %1223 = vmatpush1.msra.mxu0 %v1156
      %1224 = vmatprep.subr.mxu0 0.0
      %1225 = vmatpush1.msra.mxu0 %v1157
      %1226 = vmatprep.subr.mxu0 0.0
      %1227 = vmatpush1.msra.mxu0 %v1158
      %1228 = vmatprep.subr.mxu0 0.0
      %1229 = vmatpush1.msra.mxu0 %v1159
      %1230 = vmatprep.subr.mxu0 0.0
      %1231 = vmatpush1.msra.mxu0 %v1160
      %1232 = vmatprep.subr.mxu0 0.0
      %1233 = vmatpush1.msra.mxu0 %v1161
      %1234 = vmatprep.subr.mxu0 0.0
      %1235 = vmatpush1.msra.mxu0 %v1162
      %1236 = vmatprep.subr.mxu0 0.0
      %1237 = vmatpush1.msra.mxu0 %v1163
      %1238 = vmatprep.subr.mxu0 0.0
      %1239 = vmatpush1.msra.mxu0 %v1164
      %1240 = vmatprep.subr.mxu0 0.0
      %1241 = vmatpush1.msra.mxu0 %v1165
      %1242 = vmatprep.subr.mxu0 0.0
      %1243 = vmatpush1.msra.mxu0 %v1166
      %1244 = vmatprep.subr.mxu0 0.0
      %1245 = vmatpush1.msra.mxu0 %v1167
      %1246 = vmatprep.subr.mxu0 0.0
      %1247 = vmatpush1.msra.mxu0 %v1168
      %1248 = vmatprep.subr.mxu0 0.0
      %1249 = vmatpush1.msra.mxu0 %v1169
      %1250 = vmatprep.subr.mxu0 0.0
      %1251 = vmatpush1.msra.mxu0 %v1170
      %1252 = vmatprep.subr.mxu0 0.0
      %1253 = vmatpush1.msra.mxu0 %v1171
      %1254 = vmatprep.subr.mxu0 0.0
      %1255 = vmatpush1.msra.mxu0 0.0
      %1256 = vmatprep.subr.mxu0 0.0
      %1257 = vmatpush1.msra.mxu0 0.0
      %1258 = vmatprep.subr.mxu0 0.0
      %1259 = vmatpush1.msra.mxu0 0.0
      %1260 = vmatprep.subr.mxu0 0.0
      %1261 = vmatpush1.msra.mxu0 0.0
      %1262 = vmatprep.subr.mxu0 0.0
      %1263 = vmatpush1.msra.mxu0 0.0
      %1264 = vmatprep.subr.mxu0 0.0
      %1265 = vmatpush1.msra.mxu0 0.0
      %1266 = vmatprep.subr.mxu0 0.0
      %1267 = vmatpush1.msra.mxu0 0.0
      %1268 = vmatprep.subr.mxu0 0.0
      %1269 = vmatpush1.msra.mxu0 0.0
      %1270 = vmatprep.subr.mxu0 0.0
      %1271 = vmatpush1.msra.mxu0 0.0
      %1272 = vmatprep.subr.mxu0 0.0
      %1273 = vmatpush1.msra.mxu0 0.0
      %1274 = vmatprep.subr.mxu0 0.0
      %1275 = vmatpush1.msra.mxu0 0.0
      %1276 = vmatprep.subr.mxu0 0.0
      %1277 = vmatpush1.msra.mxu0 0.0
      %1278 = vmatprep.subr.mxu0 0.0
      %1279 = vmatpush1.msra.mxu0 0.0
      %1280 = vmatprep.subr.mxu0 0.0
      %1281 = vmatpush1.msra.mxu0 0.0
      %1282 = vmatprep.subr.mxu0 0.0
      %1283 = vmatpush1.msra.mxu0 0.0
      %1284 = vmatprep.subr.mxu0 0.0
      %1285 = vmatpush1.msra.mxu0 0.0
      %1286 = vmatprep.mubr.f32.mxu0 0.0
      %1287 = vmatmul.mubr.f32.gmra.mrb[0].mxu0 %v1175
      %v1288 = vpop.f32.mrb[0].mxu0
      %v1289 = vadd.f32 0.0, %v1288
      %v1290 = vpop.f32.mrb[0].mxu0
      %1291 = vmatprep.mubr.f32.mxu0 0.0
      %1292 = vmatmul.mubr.f32.gmra.mrb[0].mxu0 %v1177
      %v1293 = vpop.f32.mrb[0].mxu0
      %v1294 = vadd.f32 0.0, %v1293
      %v1295 = vpop.f32.mrb[0].mxu0
      %1296 = vmatprep.mubr.f32.mxu0 0.0
      %1297 = vmatmul.mubr.f32.gmra.mrb[0].mxu0 %v1179
      %v1298 = vpop.f32.mrb[0].mxu0
      %v1299 = vadd.f32 0.0, %v1298
      %v1300 = vpop.f32.mrb[0].mxu0
      %1301 = vmatprep.mubr.f32.mxu0 0.0
      %1302 = vmatmul.mubr.f32.gmra.mrb[0].mxu0 %v1181
      %v1303 = vpop.f32.mrb[0].mxu0
      %v1304 = vadd.f32 0.0, %v1303
      %v1305 = vpop.f32.mrb[0].mxu0
      %1306 = vmatprep.mubr.f32.mxu0 0.0
      %1307 = vmatmul.mubr.f32.gmra.mrb[0].mxu0 %v1183
      %v1308 = vpop.f32.mrb[0].mxu0
      %v1309 = vadd.f32 0.0, %v1308
      %v1310 = vpop.f32.mrb[0].mxu0
      %1311 = vmatprep.mubr.f32.mxu0 0.0
      %1312 = vmatmul.mubr.f32.gmra.mrb[0].mxu0 %v1185
      %v1313 = vpop.f32.mrb[0].mxu0
      %v1314 = vadd.f32 0.0, %v1313
      %v1315 = vpop.f32.mrb[0].mxu0
      %1316 = vmatprep.mubr.f32.mxu0 0.0
      %1317 = vmatmul.mubr.f32.gmra.mrb[0].mxu0 %v1187
      %v1318 = vpop.f32.mrb[0].mxu0
      %v1319 = vadd.f32 0.0, %v1318
      %v1320 = vpop.f32.mrb[0].mxu0
      %1321 = vmatprep.mubr.f32.mxu0 0.0
      %1322 = vmatmul.mubr.f32.gmra.mrb[0].mxu0 %v1189
      %v1323 = vpop.f32.mrb[0].mxu0
      %v1324 = vadd.f32 0.0, %v1323
      %v1325 = vpop.f32.mrb[0].mxu0
      %1326 = vmatprep.mubr.f32.mxu0 0.0
      %1327 = vmatmul.mubr.f32.gmra.mrb[0].mxu0 %v1191
      %v1328 = vpop.f32.mrb[0].mxu0
      %v1329 = vadd.f32 0.0, %v1328
      %v1330 = vpop.f32.mrb[0].mxu0
      %1331 = vmatprep.mubr.f32.mxu0 0.0
      %1332 = vmatmul.mubr.f32.gmra.mrb[0].mxu0 %v1193
      %v1333 = vpop.f32.mrb[0].mxu0
      %v1334 = vadd.f32 0.0, %v1333
      %v1335 = vpop.f32.mrb[0].mxu0
      %1336 = vmatprep.mubr.f32.mxu0 0.0
      %1337 = vmatmul.mubr.f32.gmra.mrb[0].mxu0 %v1195
      %v1338 = vpop.f32.mrb[0].mxu0
      %v1339 = vadd.f32 0.0, %v1338
      %v1340 = vpop.f32.mrb[0].mxu0
      %1341 = vmatprep.mubr.f32.mxu0 0.0
      %1342 = vmatmul.mubr.f32.gmra.mrb[0].mxu0 %v1197
      %v1343 = vpop.f32.mrb[0].mxu0
      %v1344 = vadd.f32 0.0, %v1343
      %v1345 = vpop.f32.mrb[0].mxu0
      %1346 = vmatprep.mubr.f32.mxu0 0.0
      %1347 = vmatmul.mubr.f32.gmra.mrb[0].mxu0 %v1199
      %v1348 = vpop.f32.mrb[0].mxu0
      %v1349 = vadd.f32 0.0, %v1348
      %v1350 = vpop.f32.mrb[0].mxu0
      %1351 = vmatprep.mubr.f32.mxu0 0.0
      %1352 = vmatmul.mubr.f32.gmra.mrb[0].mxu0 %v1201
      %v1353 = vpop.f32.mrb[0].mxu0
      %v1354 = vadd.f32 0.0, %v1353
      %v1355 = vpop.f32.mrb[0].mxu0
      %1356 = vmatprep.mubr.f32.mxu0 0.0
      %1357 = vmatmul.mubr.f32.gmra.mrb[0].mxu0 %v1203
      %v1358 = vpop.f32.mrb[0].mxu0
      %v1359 = vadd.f32 0.0, %v1358
      %v1360 = vpop.f32.mrb[0].mxu0
      %1361 = vmatprep.mubr.f32.mxu0 0.0
      %1362 = vmatmul.mubr.f32.gmra.mrb[0].mxu0 %v1205
      %v1363 = vpop.f32.mrb[0].mxu0
      %v1364 = vadd.f32 0.0, %v1363
      %v1365 = vpop.f32.mrb[0].mxu0
      %1366 = vdwg.mxu0
      %v1367 = vadd.f32 %v1139, %v1289
      %v1368 = vadd.f32 %v1140, %v1294
      %v1369 = vadd.f32 %v1141, %v1299
      %v1370 = vadd.f32 %v1142, %v1304
      %v1371 = vadd.f32 %v1143, %v1309
      %v1372 = vadd.f32 %v1144, %v1314
      %v1373 = vadd.f32 %v1145, %v1319
      %v1374 = vadd.f32 %v1146, %v1324
      %v1375 = vadd.f32 %v1147, %v1329
      %v1376 = vadd.f32 %v1148, %v1334
      %v1377 = vadd.f32 %v1149, %v1339
      %v1378 = vadd.f32 %v1150, %v1344
      %v1379 = vadd.f32 %v1151, %v1349
      %v1380 = vadd.f32 %v1152, %v1354
      %v1381 = vadd.f32 %v1153, %v1359
      %v1382 = vadd.f32 %v1154, %v1364
      %v1383 = vadd.f32 %v1367, %v1368
      %v1384 = vadd.f32 %v1383, %v1369
      %v1385 = vadd.f32 %v1384, %v1370
      %v1386 = vadd.f32 %v1385, %v1371
      %v1387 = vadd.f32 %v1386, %v1372
      %v1388 = vadd.f32 %v1387, %v1373
      %v1389 = vadd.f32 %v1388, %v1374
      %v1390 = vadd.f32 %v1389, %v1375
      %v1391 = vadd.f32 %v1390, %v1376
      %v1392 = vadd.f32 %v1391, %v1377
      %v1393 = vadd.f32 %v1392, %v1378
      %v1394 = vadd.f32 %v1393, %v1379
      %v1395 = vadd.f32 %v1394, %v1380
      %v1396 = vadd.f32 %v1395, %v1381
      %v1397 = vadd.f32 %v1396, %v1382
      %v1398 = vrot.slane %v1397, 4
      %v1399 = vadd.f32 %v1397, %v1398
      %v1400 = vrot.slane %v1399, 2
      %v1401 = vadd.f32 %v1399, %v1400
      %v1402 = vrot.slane %v1401, 1
      %v1403 = vadd.f32 %v1401, %v1402
      %v1404 = vmul.f32 %v1367, %v1367
      %v1405 = vmul.f32 %v1368, %v1368
      %v1406 = vmul.f32 %v1369, %v1369
      %v1407 = vmul.f32 %v1370, %v1370
      %v1408 = vmul.f32 %v1371, %v1371
      %v1409 = vmul.f32 %v1372, %v1372
      %v1410 = vmul.f32 %v1373, %v1373
      %v1411 = vmul.f32 %v1374, %v1374
      %v1412 = vmul.f32 %v1375, %v1375
      %v1413 = vmul.f32 %v1376, %v1376
      %v1414 = vmul.f32 %v1377, %v1377
      %v1415 = vmul.f32 %v1378, %v1378
      %v1416 = vmul.f32 %v1379, %v1379
      %v1417 = vmul.f32 %v1380, %v1380
      %v1418 = vmul.f32 %v1381, %v1381
      %v1419 = vmul.f32 %v1382, %v1382
      %v1420 = vadd.f32 %v1404, %v1405
      %v1421 = vadd.f32 %v1420, %v1406
      %v1422 = vadd.f32 %v1421, %v1407
      %v1423 = vadd.f32 %v1422, %v1408
      %v1424 = vadd.f32 %v1423, %v1409
      %v1425 = vadd.f32 %v1424, %v1410
      %v1426 = vadd.f32 %v1425, %v1411
      %v1427 = vadd.f32 %v1426, %v1412
      %v1428 = vadd.f32 %v1427, %v1413
      %v1429 = vadd.f32 %v1428, %v1414
      %v1430 = vadd.f32 %v1429, %v1415
      %v1431 = vadd.f32 %v1430, %v1416
      %v1432 = vadd.f32 %v1431, %v1417
      %v1433 = vadd.f32 %v1432, %v1418
      %v1434 = vadd.f32 %v1433, %v1419
      %v1435 = vrot.slane %v1434, 4
      %v1436 = vadd.f32 %v1434, %v1435
      %v1437 = vrot.slane %v1436, 2
      %v1438 = vadd.f32 %v1436, %v1437
      %v1439 = vrot.slane %v1438, 1
      %v1440 = vadd.f32 %v1438, %v1439
      %vm1441 = vcmask 1040384
      %v1442 = vsel %vm1441, %v1403, %v1440
      %p1443 = scmp.eq.s32.totalorder %s23, 0
      %p1444 = scmp.eq.s32.totalorder %s24, 0
      %p1445 = pnand %p1443, %p1444
      %p1446 = pneg %p1445
      // Predicated region
      $region37: #{_lambda_.6} parent=35 // pred_check
        _
      $region38: #{_lambda_.6} parent=35 // pred_check_branch
        %1448 = sbr.rel (%p1445) target = $region40
      $region39: #{_lambda_.6} parent=35 // pred_region
        %1449 = vst [vmem:[%s289] sm:$0x3] 0.0
      $region40: #{_lambda_.6} parent=35 // pred_fallthru
        _
      %v1450 = vld [vmem:[%s289] sm:$0x3]
      %v1451 = vadd.f32 %v1450, %v1442
      %1452 = vst [vmem:[%s289] sm:$0x3] %v1451
      %1453 = vst [vmem:[%s282] sm:$0xff] %v1367
      %1454 = vst [vmem:[%s282 + $0x8] sm:$0xff] %v1368
      %1455 = vst [vmem:[%s282 + $0x10] sm:$0xff] %v1369
      %1456 = vst [vmem:[%s282 + $0x18] sm:$0xff] %v1370
      %1457 = vst [vmem:[%s282 + $0x20] sm:$0xff] %v1371
      %1458 = vst [vmem:[%s282 + $0x28] sm:$0xff] %v1372
      %1459 = vst [vmem:[%s282 + $0x30] sm:$0xff] %v1373
      %1460 = vst [vmem:[%s282 + $0x38] sm:$0xff] %v1374
      %1461 = vst [vmem:[%s282 + $0x40] sm:$0xff] %v1375
      %1462 = vst [vmem:[%s282 + $0x48] sm:$0xff] %v1376
      %1463 = vst [vmem:[%s282 + $0x50] sm:$0xff] %v1377
      %1464 = vst [vmem:[%s282 + $0x58] sm:$0xff] %v1378
      %1465 = vst [vmem:[%s282 + $0x60] sm:$0xff] %v1379
      %1466 = vst [vmem:[%s282 + $0x68] sm:$0xff] %v1380
      %1467 = vst [vmem:[%s282 + $0x70] sm:$0xff] %v1381
      %1468 = vst [vmem:[%s282 + $0x78] sm:$0xff] %v1382
      %s1469 = smul.u32 %s22, 2
      %s1470 = sadd.s32 %s1469, %s23
      %s1471 = smul.u32 16, %s24
      %p1472 = scmp.lt.s32.totalorder %s1470, 3
      %s1473 = scalar_select %p1472, %s1470, 3
      %p1474 = scmp.lt.s32.totalorder %s1471, 31
      %s1475 = scalar_select %p1474, %s1471, 31
      %s1476 = smul.addr %s1473, 32
      %s1477 = sadd.s32 %s1475, %s1476
      %s1478 = smul.addr %s1477, 8
      %s1479 = scalar_lea.vmem %s4, %s1478
      %p1480 = scmp.lt.s32.totalorder %s22, 1
      %s1481 = scalar_select %p1480, %s22, 1
      %s1482 = smul.addr %s1481, 2
      %s1483 = scalar_lea.vmem %s5, %s1482
      // Predicated region
      $region41: #{_lambda_.6} parent=35 // pred_check
        %p1484 = pneg %p153
      $region42: #{_lambda_.6} parent=35 // pred_check_branch
        %1486 = sbr.rel (%p1484) target = $region44
      $region43: #{_lambda_.6} parent=35 // pred_region
        %s1487 = smul.u32 %s22, 2
        %s1488 = sadd.s32 %s1487, %s23
        %s1489 = smul.u32 16, %s24
      $region44: #{_lambda_.6} parent=35 // pred_fallthru
        _
      // Predicated region
      $region45: #{_lambda_.6} parent=35 // pred_check
        %p1490 = pneg %p179
      $region46: #{_lambda_.6} parent=35 // pred_check_branch
        %1492 = sbr.rel (%p1490) target = $region48
      $region47: #{_lambda_.6} parent=35 // pred_region
        _
      $region48: #{_lambda_.6} parent=35 // pred_fallthru
        _
    $region36: #{_lambda_.6} parent=5 // pred_fallthru
      _
    %p1493 = scmp.le.s32.totalorder 2, %s12
    // Predicated region
    $region49: #{_lambda_.6} parent=5 // pred_check
      %p1494 = pneg %p1493
    $region50: #{_lambda_.6} parent=5 // pred_check_branch
      %1496 = sbr.rel (%p1494) target = $region52
    $region51: #{_lambda_.6} parent=5 // pred_region
      %s1497 = ssub.s32 %s12, 2
      // Predicated region
      $region53: #{_lambda_.6} parent=51 // pred_check
        %p1498 = pneg %p159
      $region54: #{_lambda_.6} parent=51 // pred_check_branch
        %1500 = sbr.rel (%p1498) target = $region56
      $region55: #{_lambda_.6} parent=51 // pred_region
        %s1501 = smul.u32 %s25, 2
        %s1502 = sadd.s32 %s1501, %s26
        %s1503 = smul.u32 16, %s27
        %p1504 = scmp.lt.s32.totalorder %s1502, 3
        %s1505 = scalar_select %p1504, %s1502, 3
        %p1506 = scmp.lt.s32.totalorder %s1503, 31
        %s1507 = scalar_select %p1506, %s1503, 31
        %s1508 = smul.addr %s1505, 32
        %s1509 = sadd.s32 %s1507, %s1508
        %s1510 = smul.addr %s1509, 8
        %s1511 = scalar_lea.vmem %s4, %s1510
      $region56: #{_lambda_.6} parent=51 // pred_fallthru
        _
      // Predicated region
      $region57: #{_lambda_.6} parent=51 // pred_check
        %p1512 = pneg %p185
      $region58: #{_lambda_.6} parent=51 // pred_check_branch
        %1514 = sbr.rel (%p1512) target = $region60
      $region59: #{_lambda_.6} parent=51 // pred_region
        %p1515 = scmp.lt.s32.totalorder %s25, 1
        %s1516 = scalar_select %p1515, %s25, 1
        %s1517 = smul.addr %s1516, 2
        %s1518 = scalar_lea.vmem %s5, %s1517
      $region60: #{_lambda_.6} parent=51 // pred_fallthru
        _
    $region52: #{_lambda_.6} parent=5 // pred_fallthru
      _
  $region6: #{_lambda_.6} parent=0 // loop_footer
    %s16 = sadd.s32 1, %s12
  $region7: #{_lambda_.6} parent=0 // loop_footer_branch
    %11 = sbr.rel target = $region3
  $region8: #{_lambda_.6} parent=0 // loop_exit
    _

// kernel: _lambda_.11
$region0: #{_lambda_.11}
  #allocation0 [shape = 'u32[]', space=smem, size = 0x4, offset = 0x4, fixed_abs, tag = 'smem constant byte address 0x4 - core index']
  #allocation1 [shape = 'u32[144,128]{1,0:T(1,128)}', space=vmem, size = 0x12000, scoped, tag = 'internal scratch']
  %s0 = inlined_call_operand.vmem [shape: f32[1024,128], index: 0, kind: input, shape index: {}]
  %s1 = inlined_call_operand.vmem [shape: f32[1,128], index: 1, kind: input, shape index: {}]
  %s2 = inlined_call_operand.vmem [shape: f32[1,128], index: 2, kind: input, shape index: {}]
  %s3 = inlined_call_operand.vmem [shape: f32[1024,128], index: 3, kind: input, shape index: {}]
  %s4 = inlined_call_operand.vmem [shape: f32[1,128], index: 4, kind: input, shape index: {}]
  %s5 = inlined_call_operand.vmem [shape: f32[1,128], index: 5, kind: input, shape index: {}]
  %s6 = inlined_call_operand.vmem [shape: f32[1024,128], index: 6, kind: output, shape index: {}]
  %s7 = sld [smem:[#allocation0]]
  $region34: #{_lambda_.11} parent=0
    _
  %s9 = ssub.s32 1, %s7
  %s10 = scalar_select 0, %s9, %s7
  // Predicated region
  $region2: #{_lambda_.11} parent=0 // pred_check
    _
  $region3: #{_lambda_.11} parent=0 // pred_check_branch
    %12 = sbr.rel (0) target = $region5
  $region4: #{_lambda_.11} parent=0 // pred_region
    _
  $region5: #{_lambda_.11} parent=0 // pred_fallthru
    _
  // Predicated region
  $region6: #{_lambda_.11} parent=0 // pred_check
    _
  $region7: #{_lambda_.11} parent=0 // pred_check_branch
    %14 = sbr.rel (0) target = $region9
  $region8: #{_lambda_.11} parent=0 // pred_region
    _
  $region9: #{_lambda_.11} parent=0 // pred_fallthru
    _
  // Predicated region
  $region10: #{_lambda_.11} parent=0 // pred_check
    _
  $region11: #{_lambda_.11} parent=0 // pred_check_branch
    %16 = sbr.rel (0) target = $region13
  $region12: #{_lambda_.11} parent=0 // pred_region
    _
  $region13: #{_lambda_.11} parent=0 // pred_fallthru
    _
  // Predicated region
  $region14: #{_lambda_.11} parent=0 // pred_check
    _
  $region15: #{_lambda_.11} parent=0 // pred_check_branch
    %18 = sbr.rel (0) target = $region17
  $region16: #{_lambda_.11} parent=0 // pred_region
    _
  $region17: #{_lambda_.11} parent=0 // pred_fallthru
    _
  // Predicated region
  $region18: #{_lambda_.11} parent=0 // pred_check
    _
  $region19: #{_lambda_.11} parent=0 // pred_check_branch
    %20 = sbr.rel (0) target = $region21
  $region20: #{_lambda_.11} parent=0 // pred_region
    _
  $region21: #{_lambda_.11} parent=0 // pred_fallthru
    _
  // Predicated region
  $region22: #{_lambda_.11} parent=0 // pred_check
    _
  $region23: #{_lambda_.11} parent=0 // pred_check_branch
    %22 = sbr.rel (0) target = $region25
  $region24: #{_lambda_.11} parent=0 // pred_region
    _
  $region25: #{_lambda_.11} parent=0 // pred_fallthru
    _
  %v23 = vld [vmem:[%s0] sm:$0xff]
  %v24 = vld [vmem:[%s0 + $0x8] sm:$0xff]
  %v25 = vld [vmem:[%s0 + $0x10] sm:$0xff]
  %v26 = vld [vmem:[%s0 + $0x18] sm:$0xff]
  %v27 = vld [vmem:[%s0 + $0x20] sm:$0xff]
  %v28 = vld [vmem:[%s0 + $0x28] sm:$0xff]
  %v29 = vld [vmem:[%s0 + $0x30] sm:$0xff]
  %v30 = vld [vmem:[%s0 + $0x38] sm:$0xff]
  %v31 = vld [vmem:[%s0 + $0x40] sm:$0xff]
  %v32 = vld [vmem:[%s0 + $0x48] sm:$0xff]
  %v33 = vld [vmem:[%s0 + $0x50] sm:$0xff]
  %v34 = vld [vmem:[%s0 + $0x58] sm:$0xff]
  %v35 = vld [vmem:[%s0 + $0x60] sm:$0xff]
  %v36 = vld [vmem:[%s0 + $0x68] sm:$0xff]
  %v37 = vld [vmem:[%s0 + $0x70] sm:$0xff]
  %v38 = vld [vmem:[%s0 + $0x78] sm:$0xff]
  %v39 = vld [vmem:[%s0 + $0x80] sm:$0xff]
  %v40 = vld [vmem:[%s0 + $0x88] sm:$0xff]
  %v41 = vld [vmem:[%s0 + $0x90] sm:$0xff]
  %v42 = vld [vmem:[%s0 + $0x98] sm:$0xff]
  %v43 = vld [vmem:[%s0 + $0xa0] sm:$0xff]
  %v44 = vld [vmem:[%s0 + $0xa8] sm:$0xff]
  %v45 = vld [vmem:[%s0 + $0xb0] sm:$0xff]
  %v46 = vld [vmem:[%s0 + $0xb8] sm:$0xff]
  %v47 = vld [vmem:[%s0 + $0xc0] sm:$0xff]
  %v48 = vld [vmem:[%s0 + $0xc8] sm:$0xff]
  %v49 = vld [vmem:[%s0 + $0xd0] sm:$0xff]
  %v50 = vld [vmem:[%s0 + $0xd8] sm:$0xff]
  %v51 = vld [vmem:[%s0 + $0xe0] sm:$0xff]
  %v52 = vld [vmem:[%s0 + $0xe8] sm:$0xff]
  %v53 = vld [vmem:[%s0 + $0xf0] sm:$0xff]
  %v54 = vld [vmem:[%s0 + $0xf8] sm:$0xff]
  %v55 = vld [vmem:[%s0 + $0x100] sm:$0xff]
  %v56 = vld [vmem:[%s0 + $0x108] sm:$0xff]
  %v57 = vld [vmem:[%s0 + $0x110] sm:$0xff]
  %v58 = vld [vmem:[%s0 + $0x118] sm:$0xff]
  %v59 = vld [vmem:[%s0 + $0x120] sm:$0xff]
  %v60 = vld [vmem:[%s0 + $0x128] sm:$0xff]
  %v61 = vld [vmem:[%s0 + $0x130] sm:$0xff]
  %v62 = vld [vmem:[%s0 + $0x138] sm:$0xff]
  %v63 = vld [vmem:[%s0 + $0x140] sm:$0xff]
  %v64 = vld [vmem:[%s0 + $0x148] sm:$0xff]
  %v65 = vld [vmem:[%s0 + $0x150] sm:$0xff]
  %v66 = vld [vmem:[%s0 + $0x158] sm:$0xff]
  %v67 = vld [vmem:[%s0 + $0x160] sm:$0xff]
  %v68 = vld [vmem:[%s0 + $0x168] sm:$0xff]
  %v69 = vld [vmem:[%s0 + $0x170] sm:$0xff]
  %v70 = vld [vmem:[%s0 + $0x178] sm:$0xff]
  %v71 = vld [vmem:[%s0 + $0x180] sm:$0xff]
  %v72 = vld [vmem:[%s0 + $0x188] sm:$0xff]
  %v73 = vld [vmem:[%s0 + $0x190] sm:$0xff]
  %v74 = vld [vmem:[%s0 + $0x198] sm:$0xff]
  %v75 = vld [vmem:[%s0 + $0x1a0] sm:$0xff]
  %v76 = vld [vmem:[%s0 + $0x1a8] sm:$0xff]
  %v77 = vld [vmem:[%s0 + $0x1b0] sm:$0xff]
  %v78 = vld [vmem:[%s0 + $0x1b8] sm:$0xff]
  %v79 = vld [vmem:[%s0 + $0x1c0] sm:$0xff]
  %v80 = vld [vmem:[%s0 + $0x1c8] sm:$0xff]
  %v81 = vld [vmem:[%s0 + $0x1d0] sm:$0xff]
  %v82 = vld [vmem:[%s0 + $0x1d8] sm:$0xff]
  %v83 = vld [vmem:[%s0 + $0x1e0] sm:$0xff]
  %v84 = vld [vmem:[%s0 + $0x1e8] sm:$0xff]
  %v85 = vld [vmem:[%s0 + $0x1f0] sm:$0xff]
  %v86 = vld [vmem:[%s0 + $0x1f8] sm:$0xff]
  %v87 = vld [vmem:[%s0 + $0x200] sm:$0xff]
  %v88 = vld [vmem:[%s0 + $0x208] sm:$0xff]
  %v89 = vld [vmem:[%s0 + $0x210] sm:$0xff]
  %v90 = vld [vmem:[%s0 + $0x218] sm:$0xff]
  %v91 = vld [vmem:[%s0 + $0x220] sm:$0xff]
  %v92 = vld [vmem:[%s0 + $0x228] sm:$0xff]
  %v93 = vld [vmem:[%s0 + $0x230] sm:$0xff]
  %v94 = vld [vmem:[%s0 + $0x238] sm:$0xff]
  %v95 = vld [vmem:[%s0 + $0x240] sm:$0xff]
  %v96 = vld [vmem:[%s0 + $0x248] sm:$0xff]
  %v97 = vld [vmem:[%s0 + $0x250] sm:$0xff]
  %v98 = vld [vmem:[%s0 + $0x258] sm:$0xff]
  %v99 = vld [vmem:[%s0 + $0x260] sm:$0xff]
  %v100 = vld [vmem:[%s0 + $0x268] sm:$0xff]
  %v101 = vld [vmem:[%s0 + $0x270] sm:$0xff]
  %v102 = vld [vmem:[%s0 + $0x278] sm:$0xff]
  %v103 = vld [vmem:[%s0 + $0x280] sm:$0xff]
  %v104 = vld [vmem:[%s0 + $0x288] sm:$0xff]
  %v105 = vld [vmem:[%s0 + $0x290] sm:$0xff]
  %v106 = vld [vmem:[%s0 + $0x298] sm:$0xff]
  %v107 = vld [vmem:[%s0 + $0x2a0] sm:$0xff]
  %v108 = vld [vmem:[%s0 + $0x2a8] sm:$0xff]
  %v109 = vld [vmem:[%s0 + $0x2b0] sm:$0xff]
  %v110 = vld [vmem:[%s0 + $0x2b8] sm:$0xff]
  %v111 = vld [vmem:[%s0 + $0x2c0] sm:$0xff]
  %v112 = vld [vmem:[%s0 + $0x2c8] sm:$0xff]
  %v113 = vld [vmem:[%s0 + $0x2d0] sm:$0xff]
  %v114 = vld [vmem:[%s0 + $0x2d8] sm:$0xff]
  %v115 = vld [vmem:[%s0 + $0x2e0] sm:$0xff]
  %v116 = vld [vmem:[%s0 + $0x2e8] sm:$0xff]
  %v117 = vld [vmem:[%s0 + $0x2f0] sm:$0xff]
  %v118 = vld [vmem:[%s0 + $0x2f8] sm:$0xff]
  %v119 = vld [vmem:[%s0 + $0x300] sm:$0xff]
  %v120 = vld [vmem:[%s0 + $0x308] sm:$0xff]
  %v121 = vld [vmem:[%s0 + $0x310] sm:$0xff]
  %v122 = vld [vmem:[%s0 + $0x318] sm:$0xff]
  %v123 = vld [vmem:[%s0 + $0x320] sm:$0xff]
  %v124 = vld [vmem:[%s0 + $0x328] sm:$0xff]
  %v125 = vld [vmem:[%s0 + $0x330] sm:$0xff]
  %v126 = vld [vmem:[%s0 + $0x338] sm:$0xff]
  %v127 = vld [vmem:[%s0 + $0x340] sm:$0xff]
  %v128 = vld [vmem:[%s0 + $0x348] sm:$0xff]
  %v129 = vld [vmem:[%s0 + $0x350] sm:$0xff]
  %v130 = vld [vmem:[%s0 + $0x358] sm:$0xff]
  %v131 = vld [vmem:[%s0 + $0x360] sm:$0xff]
  %v132 = vld [vmem:[%s0 + $0x368] sm:$0xff]
  %v133 = vld [vmem:[%s0 + $0x370] sm:$0xff]
  %v134 = vld [vmem:[%s0 + $0x378] sm:$0xff]
  %v135 = vld [vmem:[%s0 + $0x380] sm:$0xff]
  %v136 = vld [vmem:[%s0 + $0x388] sm:$0xff]
  %v137 = vld [vmem:[%s0 + $0x390] sm:$0xff]
  %v138 = vld [vmem:[%s0 + $0x398] sm:$0xff]
  %v139 = vld [vmem:[%s0 + $0x3a0] sm:$0xff]
  %v140 = vld [vmem:[%s0 + $0x3a8] sm:$0xff]
  %v141 = vld [vmem:[%s0 + $0x3b0] sm:$0xff]
  %v142 = vld [vmem:[%s0 + $0x3b8] sm:$0xff]
  %v143 = vld [vmem:[%s0 + $0x3c0] sm:$0xff]
  %v144 = vld [vmem:[%s0 + $0x3c8] sm:$0xff]
  %v145 = vld [vmem:[%s0 + $0x3d0] sm:$0xff]
  %v146 = vld [vmem:[%s0 + $0x3d8] sm:$0xff]
  %v147 = vld [vmem:[%s0 + $0x3e0] sm:$0xff]
  %v148 = vld [vmem:[%s0 + $0x3e8] sm:$0xff]
  %v149 = vld [vmem:[%s0 + $0x3f0] sm:$0xff]
  %v150 = vld [vmem:[%s0 + $0x3f8] sm:$0xff]
  %v151 = vld [vmem:[%s1] sm:$0x1]
  %v153 = vlaneseq
  %v154 = vshrl.u32 %v153, 7
  %v155 = vsub.s32 0, %v154
  %v156 = vrot.slane %v151, %v155
  %v158 = vmul.f32 %v23, %v156
  %v159 = vmul.f32 %v24, %v156
  %v160 = vmul.f32 %v25, %v156
  %v161 = vmul.f32 %v26, %v156
  %v162 = vmul.f32 %v27, %v156
  %v163 = vmul.f32 %v28, %v156
  %v164 = vmul.f32 %v29, %v156
  %v165 = vmul.f32 %v30, %v156
  %v166 = vmul.f32 %v31, %v156
  %v167 = vmul.f32 %v32, %v156
  %v168 = vmul.f32 %v33, %v156
  %v169 = vmul.f32 %v34, %v156
  %v170 = vmul.f32 %v35, %v156
  %v171 = vmul.f32 %v36, %v156
  %v172 = vmul.f32 %v37, %v156
  %v173 = vmul.f32 %v38, %v156
  %v174 = vmul.f32 %v39, %v156
  %v175 = vmul.f32 %v40, %v156
  %v176 = vmul.f32 %v41, %v156
  %v177 = vmul.f32 %v42, %v156
  %v178 = vmul.f32 %v43, %v156
  %v179 = vmul.f32 %v44, %v156
  %v180 = vmul.f32 %v45, %v156
  %v181 = vmul.f32 %v46, %v156
  %v182 = vmul.f32 %v47, %v156
  %v183 = vmul.f32 %v48, %v156
  %v184 = vmul.f32 %v49, %v156
  %v185 = vmul.f32 %v50, %v156
  %v186 = vmul.f32 %v51, %v156
  %v187 = vmul.f32 %v52, %v156
  %v188 = vmul.f32 %v53, %v156
  %v189 = vmul.f32 %v54, %v156
  %v190 = vmul.f32 %v55, %v156
  %v191 = vmul.f32 %v56, %v156
  %v192 = vmul.f32 %v57, %v156
  %v193 = vmul.f32 %v58, %v156
  %v194 = vmul.f32 %v59, %v156
  %v195 = vmul.f32 %v60, %v156
  %v196 = vmul.f32 %v61, %v156
  %v197 = vmul.f32 %v62, %v156
  %v198 = vmul.f32 %v63, %v156
  %v199 = vmul.f32 %v64, %v156
  %v200 = vmul.f32 %v65, %v156
  %v201 = vmul.f32 %v66, %v156
  %v202 = vmul.f32 %v67, %v156
  %v203 = vmul.f32 %v68, %v156
  %v204 = vmul.f32 %v69, %v156
  %v205 = vmul.f32 %v70, %v156
  %v206 = vmul.f32 %v71, %v156
  %v207 = vmul.f32 %v72, %v156
  %v208 = vmul.f32 %v73, %v156
  %v209 = vmul.f32 %v74, %v156
  %v210 = vmul.f32 %v75, %v156
  %v211 = vmul.f32 %v76, %v156
  %v212 = vmul.f32 %v77, %v156
  %v213 = vmul.f32 %v78, %v156
  %v214 = vmul.f32 %v79, %v156
  %v215 = vmul.f32 %v80, %v156
  %v216 = vmul.f32 %v81, %v156
  %v217 = vmul.f32 %v82, %v156
  %v218 = vmul.f32 %v83, %v156
  %v219 = vmul.f32 %v84, %v156
  %v220 = vmul.f32 %v85, %v156
  %v221 = vmul.f32 %v86, %v156
  %v222 = vmul.f32 %v87, %v156
  %v223 = vmul.f32 %v88, %v156
  %v224 = vmul.f32 %v89, %v156
  %v225 = vmul.f32 %v90, %v156
  %v226 = vmul.f32 %v91, %v156
  %v227 = vmul.f32 %v92, %v156
  %v228 = vmul.f32 %v93, %v156
  %v229 = vmul.f32 %v94, %v156
  %v230 = vmul.f32 %v95, %v156
  %v231 = vmul.f32 %v96, %v156
  %v232 = vmul.f32 %v97, %v156
  %v233 = vmul.f32 %v98, %v156
  %v234 = vmul.f32 %v99, %v156
  %v235 = vmul.f32 %v100, %v156
  %v236 = vmul.f32 %v101, %v156
  %v237 = vmul.f32 %v102, %v156
  %v238 = vmul.f32 %v103, %v156
  %v239 = vmul.f32 %v104, %v156
  %v240 = vmul.f32 %v105, %v156
  %v241 = vmul.f32 %v106, %v156
  %v242 = vmul.f32 %v107, %v156
  %v243 = vmul.f32 %v108, %v156
  %v244 = vmul.f32 %v109, %v156
  %v245 = vmul.f32 %v110, %v156
  %v246 = vmul.f32 %v111, %v156
  %v247 = vmul.f32 %v112, %v156
  %v248 = vmul.f32 %v113, %v156
  %v249 = vmul.f32 %v114, %v156
  %v250 = vmul.f32 %v115, %v156
  %v251 = vmul.f32 %v116, %v156
  %v252 = vmul.f32 %v117, %v156
  %v253 = vmul.f32 %v118, %v156
  %v254 = vmul.f32 %v119, %v156
  %v255 = vmul.f32 %v120, %v156
  %v256 = vmul.f32 %v121, %v156
  %v257 = vmul.f32 %v122, %v156
  %v258 = vmul.f32 %v123, %v156
  %v259 = vmul.f32 %v124, %v156
  %v260 = vmul.f32 %v125, %v156
  %v261 = vmul.f32 %v126, %v156
  %v262 = vmul.f32 %v127, %v156
  %v263 = vmul.f32 %v128, %v156
  %v264 = vmul.f32 %v129, %v156
  %v265 = vmul.f32 %v130, %v156
  %v266 = vmul.f32 %v131, %v156
  %v267 = vmul.f32 %v132, %v156
  %v268 = vmul.f32 %v133, %v156
  %v269 = vmul.f32 %v134, %v156
  %v270 = vmul.f32 %v135, %v156
  %v271 = vmul.f32 %v136, %v156
  %v272 = vmul.f32 %v137, %v156
  %v273 = vmul.f32 %v138, %v156
  %v274 = vmul.f32 %v139, %v156
  %v275 = vmul.f32 %v140, %v156
  %v276 = vmul.f32 %v141, %v156
  %v277 = vmul.f32 %v142, %v156
  %v278 = vmul.f32 %v143, %v156
  %v279 = vmul.f32 %v144, %v156
  %v280 = vmul.f32 %v145, %v156
  %v281 = vmul.f32 %v146, %v156
  %v282 = vmul.f32 %v147, %v156
  %v283 = vmul.f32 %v148, %v156
  %v284 = vmul.f32 %v149, %v156
  %v285 = vmul.f32 %v150, %v156
  %v286 = vld [vmem:[%s2] sm:$0x1]
  %v288 = vlaneseq
  %v289 = vshrl.u32 %v288, 7
  %v290 = vsub.s32 0, %v289
  %v291 = vrot.slane %v286, %v290
  %v293 = vadd.f32 %v158, %v291
  %v294 = vadd.f32 %v159, %v291
  %v295 = vadd.f32 %v160, %v291
  %v296 = vadd.f32 %v161, %v291
  %v297 = vadd.f32 %v162, %v291
  %v298 = vadd.f32 %v163, %v291
  %v299 = vadd.f32 %v164, %v291
  %v300 = vadd.f32 %v165, %v291
  %v301 = vadd.f32 %v166, %v291
  %v302 = vadd.f32 %v167, %v291
  %v303 = vadd.f32 %v168, %v291
  %v304 = vadd.f32 %v169, %v291
  %v305 = vadd.f32 %v170, %v291
  %v306 = vadd.f32 %v171, %v291
  %v307 = vadd.f32 %v172, %v291
  %v308 = vadd.f32 %v173, %v291
  %v309 = vadd.f32 %v174, %v291
  %v310 = vadd.f32 %v175, %v291
  %v311 = vadd.f32 %v176, %v291
  %v312 = vadd.f32 %v177, %v291
  %v313 = vadd.f32 %v178, %v291
  %v314 = vadd.f32 %v179, %v291
  %v315 = vadd.f32 %v180, %v291
  %v316 = vadd.f32 %v181, %v291
  %v317 = vadd.f32 %v182, %v291
  %v318 = vadd.f32 %v183, %v291
  %v319 = vadd.f32 %v184, %v291
  %v320 = vadd.f32 %v185, %v291
  %v321 = vadd.f32 %v186, %v291
  %v322 = vadd.f32 %v187, %v291
  %v323 = vadd.f32 %v188, %v291
  %v324 = vadd.f32 %v189, %v291
  %v325 = vadd.f32 %v190, %v291
  %v326 = vadd.f32 %v191, %v291
  %v327 = vadd.f32 %v192, %v291
  %v328 = vadd.f32 %v193, %v291
  %v329 = vadd.f32 %v194, %v291
  %v330 = vadd.f32 %v195, %v291
  %v331 = vadd.f32 %v196, %v291
  %v332 = vadd.f32 %v197, %v291
  %v333 = vadd.f32 %v198, %v291
  %v334 = vadd.f32 %v199, %v291
  %v335 = vadd.f32 %v200, %v291
  %v336 = vadd.f32 %v201, %v291
  %v337 = vadd.f32 %v202, %v291
  %v338 = vadd.f32 %v203, %v291
  %v339 = vadd.f32 %v204, %v291
  %v340 = vadd.f32 %v205, %v291
  %v341 = vadd.f32 %v206, %v291
  %v342 = vadd.f32 %v207, %v291
  %v343 = vadd.f32 %v208, %v291
  %v344 = vadd.f32 %v209, %v291
  %v345 = vadd.f32 %v210, %v291
  %v346 = vadd.f32 %v211, %v291
  %v347 = vadd.f32 %v212, %v291
  %v348 = vadd.f32 %v213, %v291
  %v349 = vadd.f32 %v214, %v291
  %v350 = vadd.f32 %v215, %v291
  %v351 = vadd.f32 %v216, %v291
  %v352 = vadd.f32 %v217, %v291
  %v353 = vadd.f32 %v218, %v291
  %v354 = vadd.f32 %v219, %v291
  %v355 = vadd.f32 %v220, %v291
  %v356 = vadd.f32 %v221, %v291
  %v357 = vadd.f32 %v222, %v291
  %v358 = vadd.f32 %v223, %v291
  %v359 = vadd.f32 %v224, %v291
  %v360 = vadd.f32 %v225, %v291
  %v361 = vadd.f32 %v226, %v291
  %v362 = vadd.f32 %v227, %v291
  %v363 = vadd.f32 %v228, %v291
  %v364 = vadd.f32 %v229, %v291
  %v365 = vadd.f32 %v230, %v291
  %v366 = vadd.f32 %v231, %v291
  %v367 = vadd.f32 %v232, %v291
  %v368 = vadd.f32 %v233, %v291
  %v369 = vadd.f32 %v234, %v291
  %v370 = vadd.f32 %v235, %v291
  %v371 = vadd.f32 %v236, %v291
  %v372 = vadd.f32 %v237, %v291
  %v373 = vadd.f32 %v238, %v291
  %v374 = vadd.f32 %v239, %v291
  %v375 = vadd.f32 %v240, %v291
  %v376 = vadd.f32 %v241, %v291
  %v377 = vadd.f32 %v242, %v291
  %v378 = vadd.f32 %v243, %v291
  %v379 = vadd.f32 %v244, %v291
  %v380 = vadd.f32 %v245, %v291
  %v381 = vadd.f32 %v246, %v291
  %v382 = vadd.f32 %v247, %v291
  %v383 = vadd.f32 %v248, %v291
  %v384 = vadd.f32 %v249, %v291
  %v385 = vadd.f32 %v250, %v291
  %v386 = vadd.f32 %v251, %v291
  %v387 = vadd.f32 %v252, %v291
  %v388 = vadd.f32 %v253, %v291
  %v389 = vadd.f32 %v254, %v291
  %v390 = vadd.f32 %v255, %v291
  %v391 = vadd.f32 %v256, %v291
  %v392 = vadd.f32 %v257, %v291
  %v393 = vadd.f32 %v258, %v291
  %v394 = vadd.f32 %v259, %v291
  %v395 = vadd.f32 %v260, %v291
  %v396 = vadd.f32 %v261, %v291
  %v397 = vadd.f32 %v262, %v291
  %v398 = vadd.f32 %v263, %v291
  %v399 = vadd.f32 %v264, %v291
  %v400 = vadd.f32 %v265, %v291
  %v401 = vadd.f32 %v266, %v291
  %v402 = vadd.f32 %v267, %v291
  %v403 = vadd.f32 %v268, %v291
  %v404 = vadd.f32 %v269, %v291
  %v405 = vadd.f32 %v270, %v291
  %v406 = vadd.f32 %v271, %v291
  %v407 = vadd.f32 %v272, %v291
  %v408 = vadd.f32 %v273, %v291
  %v409 = vadd.f32 %v274, %v291
  %v410 = vadd.f32 %v275, %v291
  %v411 = vadd.f32 %v276, %v291
  %v412 = vadd.f32 %v277, %v291
  %v413 = vadd.f32 %v278, %v291
  %v414 = vadd.f32 %v279, %v291
  %v415 = vadd.f32 %v280, %v291
  %v416 = vadd.f32 %v281, %v291
  %v417 = vadd.f32 %v282, %v291
  %v418 = vadd.f32 %v283, %v291
  %v419 = vadd.f32 %v284, %v291
  %v420 = vadd.f32 %v285, %v291
  %v421 = vld [vmem:[%s3] sm:$0xff]
  %v422 = vld [vmem:[%s3 + $0x8] sm:$0xff]
  %v423 = vld [vmem:[%s3 + $0x10] sm:$0xff]
  %v424 = vld [vmem:[%s3 + $0x18] sm:$0xff]
  %v425 = vld [vmem:[%s3 + $0x20] sm:$0xff]
  %v426 = vld [vmem:[%s3 + $0x28] sm:$0xff]
  %v427 = vld [vmem:[%s3 + $0x30] sm:$0xff]
  %v428 = vld [vmem:[%s3 + $0x38] sm:$0xff]
  %v429 = vld [vmem:[%s3 + $0x40] sm:$0xff]
  %v430 = vld [vmem:[%s3 + $0x48] sm:$0xff]
  %v431 = vld [vmem:[%s3 + $0x50] sm:$0xff]
  %v432 = vld [vmem:[%s3 + $0x58] sm:$0xff]
  %v433 = vld [vmem:[%s3 + $0x60] sm:$0xff]
  %v434 = vld [vmem:[%s3 + $0x68] sm:$0xff]
  %v435 = vld [vmem:[%s3 + $0x70] sm:$0xff]
  %v436 = vld [vmem:[%s3 + $0x78] sm:$0xff]
  %v437 = vld [vmem:[%s3 + $0x80] sm:$0xff]
  %v438 = vld [vmem:[%s3 + $0x88] sm:$0xff]
  %v439 = vld [vmem:[%s3 + $0x90] sm:$0xff]
  %v440 = vld [vmem:[%s3 + $0x98] sm:$0xff]
  %v441 = vld [vmem:[%s3 + $0xa0] sm:$0xff]
  %v442 = vld [vmem:[%s3 + $0xa8] sm:$0xff]
  %v443 = vld [vmem:[%s3 + $0xb0] sm:$0xff]
  %v444 = vld [vmem:[%s3 + $0xb8] sm:$0xff]
  %v445 = vld [vmem:[%s3 + $0xc0] sm:$0xff]
  %v446 = vld [vmem:[%s3 + $0xc8] sm:$0xff]
  %v447 = vld [vmem:[%s3 + $0xd0] sm:$0xff]
  %v448 = vld [vmem:[%s3 + $0xd8] sm:$0xff]
  %v449 = vld [vmem:[%s3 + $0xe0] sm:$0xff]
  %v450 = vld [vmem:[%s3 + $0xe8] sm:$0xff]
  %v451 = vld [vmem:[%s3 + $0xf0] sm:$0xff]
  %v452 = vld [vmem:[%s3 + $0xf8] sm:$0xff]
  %v453 = vld [vmem:[%s3 + $0x100] sm:$0xff]
  %v454 = vld [vmem:[%s3 + $0x108] sm:$0xff]
  %v455 = vld [vmem:[%s3 + $0x110] sm:$0xff]
  %v456 = vld [vmem:[%s3 + $0x118] sm:$0xff]
  %v457 = vld [vmem:[%s3 + $0x120] sm:$0xff]
  %v458 = vld [vmem:[%s3 + $0x128] sm:$0xff]
  %v459 = vld [vmem:[%s3 + $0x130] sm:$0xff]
  %v460 = vld [vmem:[%s3 + $0x138] sm:$0xff]
  %v461 = vld [vmem:[%s3 + $0x140] sm:$0xff]
  %v462 = vld [vmem:[%s3 + $0x148] sm:$0xff]
  %v463 = vld [vmem:[%s3 + $0x150] sm:$0xff]
  %v464 = vld [vmem:[%s3 + $0x158] sm:$0xff]
  %v465 = vld [vmem:[%s3 + $0x160] sm:$0xff]
  %v466 = vld [vmem:[%s3 + $0x168] sm:$0xff]
  %v467 = vld [vmem:[%s3 + $0x170] sm:$0xff]
  %v468 = vld [vmem:[%s3 + $0x178] sm:$0xff]
  %v469 = vld [vmem:[%s3 + $0x180] sm:$0xff]
  %v470 = vld [vmem:[%s3 + $0x188] sm:$0xff]
  %v471 = vld [vmem:[%s3 + $0x190] sm:$0xff]
  %v472 = vld [vmem:[%s3 + $0x198] sm:$0xff]
  %v473 = vld [vmem:[%s3 + $0x1a0] sm:$0xff]
  %v474 = vld [vmem:[%s3 + $0x1a8] sm:$0xff]
  %v475 = vld [vmem:[%s3 + $0x1b0] sm:$0xff]
  %v476 = vld [vmem:[%s3 + $0x1b8] sm:$0xff]
  %v477 = vld [vmem:[%s3 + $0x1c0] sm:$0xff]
  %v478 = vld [vmem:[%s3 + $0x1c8] sm:$0xff]
  %v479 = vld [vmem:[%s3 + $0x1d0] sm:$0xff]
  %v480 = vld [vmem:[%s3 + $0x1d8] sm:$0xff]
  %v481 = vld [vmem:[%s3 + $0x1e0] sm:$0xff]
  %v482 = vld [vmem:[%s3 + $0x1e8] sm:$0xff]
  %v483 = vld [vmem:[%s3 + $0x1f0] sm:$0xff]
  %v484 = vld [vmem:[%s3 + $0x1f8] sm:$0xff]
  %v485 = vld [vmem:[%s3 + $0x200] sm:$0xff]
  %v486 = vld [vmem:[%s3 + $0x208] sm:$0xff]
  %v487 = vld [vmem:[%s3 + $0x210] sm:$0xff]
  %v488 = vld [vmem:[%s3 + $0x218] sm:$0xff]
  %v489 = vld [vmem:[%s3 + $0x220] sm:$0xff]
  %v490 = vld [vmem:[%s3 + $0x228] sm:$0xff]
  %v491 = vld [vmem:[%s3 + $0x230] sm:$0xff]
  %v492 = vld [vmem:[%s3 + $0x238] sm:$0xff]
  %v493 = vld [vmem:[%s3 + $0x240] sm:$0xff]
  %v494 = vld [vmem:[%s3 + $0x248] sm:$0xff]
  %v495 = vld [vmem:[%s3 + $0x250] sm:$0xff]
  %v496 = vld [vmem:[%s3 + $0x258] sm:$0xff]
  %v497 = vld [vmem:[%s3 + $0x260] sm:$0xff]
  %v498 = vld [vmem:[%s3 + $0x268] sm:$0xff]
  %v499 = vld [vmem:[%s3 + $0x270] sm:$0xff]
  %v500 = vld [vmem:[%s3 + $0x278] sm:$0xff]
  %v501 = vld [vmem:[%s3 + $0x280] sm:$0xff]
  %v502 = vld [vmem:[%s3 + $0x288] sm:$0xff]
  %v503 = vld [vmem:[%s3 + $0x290] sm:$0xff]
  %v504 = vld [vmem:[%s3 + $0x298] sm:$0xff]
  %v505 = vld [vmem:[%s3 + $0x2a0] sm:$0xff]
  %v506 = vld [vmem:[%s3 + $0x2a8] sm:$0xff]
  %v507 = vld [vmem:[%s3 + $0x2b0] sm:$0xff]
  %v508 = vld [vmem:[%s3 + $0x2b8] sm:$0xff]
  %v509 = vld [vmem:[%s3 + $0x2c0] sm:$0xff]
  %v510 = vld [vmem:[%s3 + $0x2c8] sm:$0xff]
  %v511 = vld [vmem:[%s3 + $0x2d0] sm:$0xff]
  %v512 = vld [vmem:[%s3 + $0x2d8] sm:$0xff]
  %v513 = vld [vmem:[%s3 + $0x2e0] sm:$0xff]
  %v514 = vld [vmem:[%s3 + $0x2e8] sm:$0xff]
  %v515 = vld [vmem:[%s3 + $0x2f0] sm:$0xff]
  %v516 = vld [vmem:[%s3 + $0x2f8] sm:$0xff]
  %v517 = vld [vmem:[%s3 + $0x300] sm:$0xff]
  %v518 = vld [vmem:[%s3 + $0x308] sm:$0xff]
  %v519 = vld [vmem:[%s3 + $0x310] sm:$0xff]
  %v520 = vld [vmem:[%s3 + $0x318] sm:$0xff]
  %v521 = vld [vmem:[%s3 + $0x320] sm:$0xff]
  %v522 = vld [vmem:[%s3 + $0x328] sm:$0xff]
  %v523 = vld [vmem:[%s3 + $0x330] sm:$0xff]
  %v524 = vld [vmem:[%s3 + $0x338] sm:$0xff]
  %v525 = vld [vmem:[%s3 + $0x340] sm:$0xff]
  %v526 = vld [vmem:[%s3 + $0x348] sm:$0xff]
  %v527 = vld [vmem:[%s3 + $0x350] sm:$0xff]
  %v528 = vld [vmem:[%s3 + $0x358] sm:$0xff]
  %v529 = vld [vmem:[%s3 + $0x360] sm:$0xff]
  %v530 = vld [vmem:[%s3 + $0x368] sm:$0xff]
  %v531 = vld [vmem:[%s3 + $0x370] sm:$0xff]
  %v532 = vld [vmem:[%s3 + $0x378] sm:$0xff]
  %v533 = vld [vmem:[%s3 + $0x380] sm:$0xff]
  %v534 = vld [vmem:[%s3 + $0x388] sm:$0xff]
  %v535 = vld [vmem:[%s3 + $0x390] sm:$0xff]
  %v536 = vld [vmem:[%s3 + $0x398] sm:$0xff]
  %v537 = vld [vmem:[%s3 + $0x3a0] sm:$0xff]
  %v538 = vld [vmem:[%s3 + $0x3a8] sm:$0xff]
  %v539 = vld [vmem:[%s3 + $0x3b0] sm:$0xff]
  %v540 = vld [vmem:[%s3 + $0x3b8] sm:$0xff]
  %v541 = vld [vmem:[%s3 + $0x3c0] sm:$0xff]
  %v542 = vld [vmem:[%s3 + $0x3c8] sm:$0xff]
  %v543 = vld [vmem:[%s3 + $0x3d0] sm:$0xff]
  %v544 = vld [vmem:[%s3 + $0x3d8] sm:$0xff]
  %v545 = vld [vmem:[%s3 + $0x3e0] sm:$0xff]
  %v546 = vld [vmem:[%s3 + $0x3e8] sm:$0xff]
  %v547 = vld [vmem:[%s3 + $0x3f0] sm:$0xff]
  %v548 = vld [vmem:[%s3 + $0x3f8] sm:$0xff]
  %v549 = vld [vmem:[%s4] sm:$0x1]
  %v551 = vlaneseq
  %v552 = vshrl.u32 %v551, 7
  %v553 = vsub.s32 0, %v552
  %v554 = vrot.slane %v549, %v553
  %v556 = vmul.f32 %v421, %v554
  %v557 = vmul.f32 %v422, %v554
  %v558 = vmul.f32 %v423, %v554
  %v559 = vmul.f32 %v424, %v554
  %v560 = vmul.f32 %v425, %v554
  %v561 = vmul.f32 %v426, %v554
  %v562 = vmul.f32 %v427, %v554
  %v563 = vmul.f32 %v428, %v554
  %v564 = vmul.f32 %v429, %v554
  %v565 = vmul.f32 %v430, %v554
  %v566 = vmul.f32 %v431, %v554
  %v567 = vmul.f32 %v432, %v554
  %v568 = vmul.f32 %v433, %v554
  %v569 = vmul.f32 %v434, %v554
  %v570 = vmul.f32 %v435, %v554
  %v571 = vmul.f32 %v436, %v554
  %v572 = vmul.f32 %v437, %v554
  %v573 = vmul.f32 %v438, %v554
  %v574 = vmul.f32 %v439, %v554
  %v575 = vmul.f32 %v440, %v554
  %v576 = vmul.f32 %v441, %v554
  %v577 = vmul.f32 %v442, %v554
  %v578 = vmul.f32 %v443, %v554
  %v579 = vmul.f32 %v444, %v554
  %v580 = vmul.f32 %v445, %v554
  %v581 = vmul.f32 %v446, %v554
  %v582 = vmul.f32 %v447, %v554
  %v583 = vmul.f32 %v448, %v554
  %v584 = vmul.f32 %v449, %v554
  %v585 = vmul.f32 %v450, %v554
  %v586 = vmul.f32 %v451, %v554
  %v587 = vmul.f32 %v452, %v554
  %v588 = vmul.f32 %v453, %v554
  %v589 = vmul.f32 %v454, %v554
  %v590 = vmul.f32 %v455, %v554
  %v591 = vmul.f32 %v456, %v554
  %v592 = vmul.f32 %v457, %v554
  %v593 = vmul.f32 %v458, %v554
  %v594 = vmul.f32 %v459, %v554
  %v595 = vmul.f32 %v460, %v554
  %v596 = vmul.f32 %v461, %v554
  %v597 = vmul.f32 %v462, %v554
  %v598 = vmul.f32 %v463, %v554
  %v599 = vmul.f32 %v464, %v554
  %v600 = vmul.f32 %v465, %v554
  %v601 = vmul.f32 %v466, %v554
  %v602 = vmul.f32 %v467, %v554
  %v603 = vmul.f32 %v468, %v554
  %v604 = vmul.f32 %v469, %v554
  %v605 = vmul.f32 %v470, %v554
  %v606 = vmul.f32 %v471, %v554
  %v607 = vmul.f32 %v472, %v554
  %v608 = vmul.f32 %v473, %v554
  %v609 = vmul.f32 %v474, %v554
  %v610 = vmul.f32 %v475, %v554
  %v611 = vmul.f32 %v476, %v554
  %v612 = vmul.f32 %v477, %v554
  %v613 = vmul.f32 %v478, %v554
  %v614 = vmul.f32 %v479, %v554
  %v615 = vmul.f32 %v480, %v554
  %v616 = vmul.f32 %v481, %v554
  %v617 = vmul.f32 %v482, %v554
  %v618 = vmul.f32 %v483, %v554
  %v619 = vmul.f32 %v484, %v554
  %v620 = vmul.f32 %v485, %v554
  %v621 = vmul.f32 %v486, %v554
  %v622 = vmul.f32 %v487, %v554
  %v623 = vmul.f32 %v488, %v554
  %v624 = vmul.f32 %v489, %v554
  %v625 = vmul.f32 %v490, %v554
  %v626 = vmul.f32 %v491, %v554
  %v627 = vmul.f32 %v492, %v554
  %v628 = vmul.f32 %v493, %v554
  %v629 = vmul.f32 %v494, %v554
  %v630 = vmul.f32 %v495, %v554
  %v631 = vmul.f32 %v496, %v554
  %v632 = vmul.f32 %v497, %v554
  %v633 = vmul.f32 %v498, %v554
  %v634 = vmul.f32 %v499, %v554
  %v635 = vmul.f32 %v500, %v554
  %v636 = vmul.f32 %v501, %v554
  %v637 = vmul.f32 %v502, %v554
  %v638 = vmul.f32 %v503, %v554
  %v639 = vmul.f32 %v504, %v554
  %v640 = vmul.f32 %v505, %v554
  %v641 = vmul.f32 %v506, %v554
  %v642 = vmul.f32 %v507, %v554
  %v643 = vmul.f32 %v508, %v554
  %v644 = vmul.f32 %v509, %v554
  %v645 = vmul.f32 %v510, %v554
  %v646 = vmul.f32 %v511, %v554
  %v647 = vmul.f32 %v512, %v554
  %v648 = vmul.f32 %v513, %v554
  %v649 = vmul.f32 %v514, %v554
  %v650 = vmul.f32 %v515, %v554
  %v651 = vmul.f32 %v516, %v554
  %v652 = vmul.f32 %v517, %v554
  %v653 = vmul.f32 %v518, %v554
  %v654 = vmul.f32 %v519, %v554
  %v655 = vmul.f32 %v520, %v554
  %v656 = vmul.f32 %v521, %v554
  %v657 = vmul.f32 %v522, %v554
  %v658 = vmul.f32 %v523, %v554
  %v659 = vmul.f32 %v524, %v554
  %v660 = vmul.f32 %v525, %v554
  %v661 = vmul.f32 %v526, %v554
  %v662 = vmul.f32 %v527, %v554
  %v663 = vmul.f32 %v528, %v554
  %v664 = vmul.f32 %v529, %v554
  %v665 = vmul.f32 %v530, %v554
  %v666 = vmul.f32 %v531, %v554
  %v667 = vmul.f32 %v532, %v554
  %v668 = vmul.f32 %v533, %v554
  %v669 = vmul.f32 %v534, %v554
  %v670 = vmul.f32 %v535, %v554
  %v671 = vmul.f32 %v536, %v554
  %v672 = vmul.f32 %v537, %v554
  %v673 = vmul.f32 %v538, %v554
  %v674 = vmul.f32 %v539, %v554
  %v675 = vmul.f32 %v540, %v554
  %v676 = vmul.f32 %v541, %v554
  %v677 = vmul.f32 %v542, %v554
  %v678 = vmul.f32 %v543, %v554
  %v679 = vmul.f32 %v544, %v554
  %v680 = vmul.f32 %v545, %v554
  %v681 = vmul.f32 %v546, %v554
  %v682 = vmul.f32 %v547, %v554
  %v683 = vmul.f32 %v548, %v554
  %v684 = vld [vmem:[%s5] sm:$0x1]
  %v686 = vlaneseq
  %v687 = vshrl.u32 %v686, 7
  %v688 = vsub.s32 0, %v687
  %v689 = vrot.slane %v684, %v688
  %v691 = vadd.f32 %v556, %v689
  %v692 = vadd.f32 %v557, %v689
  %v693 = vadd.f32 %v558, %v689
  %v694 = vadd.f32 %v559, %v689
  %v695 = vadd.f32 %v560, %v689
  %v696 = vadd.f32 %v561, %v689
  %v697 = vadd.f32 %v562, %v689
  %v698 = vadd.f32 %v563, %v689
  %v699 = vadd.f32 %v564, %v689
  %v700 = vadd.f32 %v565, %v689
  %v701 = vadd.f32 %v566, %v689
  %v702 = vadd.f32 %v567, %v689
  %v703 = vadd.f32 %v568, %v689
  %v704 = vadd.f32 %v569, %v689
  %v705 = vadd.f32 %v570, %v689
  %v706 = vadd.f32 %v571, %v689
  %v707 = vadd.f32 %v572, %v689
  %v708 = vadd.f32 %v573, %v689
  %v709 = vadd.f32 %v574, %v689
  %v710 = vadd.f32 %v575, %v689
  %v711 = vadd.f32 %v576, %v689
  %v712 = vadd.f32 %v577, %v689
  %v713 = vadd.f32 %v578, %v689
  %v714 = vadd.f32 %v579, %v689
  %v715 = vadd.f32 %v580, %v689
  %v716 = vadd.f32 %v581, %v689
  %v717 = vadd.f32 %v582, %v689
  %v718 = vadd.f32 %v583, %v689
  %v719 = vadd.f32 %v584, %v689
  %v720 = vadd.f32 %v585, %v689
  %v721 = vadd.f32 %v586, %v689
  %v722 = vadd.f32 %v587, %v689
  %v723 = vadd.f32 %v588, %v689
  %v724 = vadd.f32 %v589, %v689
  %v725 = vadd.f32 %v590, %v689
  %v726 = vadd.f32 %v591, %v689
  %v727 = vadd.f32 %v592, %v689
  %v728 = vadd.f32 %v593, %v689
  %v729 = vadd.f32 %v594, %v689
  %v730 = vadd.f32 %v595, %v689
  %v731 = vadd.f32 %v596, %v689
  %v732 = vadd.f32 %v597, %v689
  %v733 = vadd.f32 %v598, %v689
  %v734 = vadd.f32 %v599, %v689
  %v735 = vadd.f32 %v600, %v689
  %v736 = vadd.f32 %v601, %v689
  %v737 = vadd.f32 %v602, %v689
  %v738 = vadd.f32 %v603, %v689
  %v739 = vadd.f32 %v604, %v689
  %v740 = vadd.f32 %v605, %v689
  %v741 = vadd.f32 %v606, %v689
  %v742 = vadd.f32 %v607, %v689
  %v743 = vadd.f32 %v608, %v689
  %v744 = vadd.f32 %v609, %v689
  %v745 = vadd.f32 %v610, %v689
  %v746 = vadd.f32 %v611, %v689
  %v747 = vadd.f32 %v612, %v689
  %v748 = vadd.f32 %v613, %v689
  %v749 = vadd.f32 %v614, %v689
  %v750 = vadd.f32 %v615, %v689
  %v751 = vadd.f32 %v616, %v689
  %v752 = vadd.f32 %v617, %v689
  %v753 = vadd.f32 %v618, %v689
  %v754 = vadd.f32 %v619, %v689
  %v755 = vadd.f32 %v620, %v689
  %v756 = vadd.f32 %v621, %v689
  %v757 = vadd.f32 %v622, %v689
  %v758 = vadd.f32 %v623, %v689
  %v759 = vadd.f32 %v624, %v689
  %v760 = vadd.f32 %v625, %v689
  %v761 = vadd.f32 %v626, %v689
  %v762 = vadd.f32 %v627, %v689
  %v763 = vadd.f32 %v628, %v689
  %v764 = vadd.f32 %v629, %v689
  %v765 = vadd.f32 %v630, %v689
  %v766 = vadd.f32 %v631, %v689
  %v767 = vadd.f32 %v632, %v689
  %v768 = vadd.f32 %v633, %v689
  %v769 = vadd.f32 %v634, %v689
  %v770 = vadd.f32 %v635, %v689
  %v771 = vadd.f32 %v636, %v689
  %v772 = vadd.f32 %v637, %v689
  %v773 = vadd.f32 %v638, %v689
  %v774 = vadd.f32 %v639, %v689
  %v775 = vadd.f32 %v640, %v689
  %v776 = vadd.f32 %v641, %v689
  %v777 = vadd.f32 %v642, %v689
  %v778 = vadd.f32 %v643, %v689
  %v779 = vadd.f32 %v644, %v689
  %v780 = vadd.f32 %v645, %v689
  %v781 = vadd.f32 %v646, %v689
  %v782 = vadd.f32 %v647, %v689
  %v783 = vadd.f32 %v648, %v689
  %v784 = vadd.f32 %v649, %v689
  %v785 = vadd.f32 %v650, %v689
  %v786 = vadd.f32 %v651, %v689
  %v787 = vadd.f32 %v652, %v689
  %v788 = vadd.f32 %v653, %v689
  %v789 = vadd.f32 %v654, %v689
  %v790 = vadd.f32 %v655, %v689
  %v791 = vadd.f32 %v656, %v689
  %v792 = vadd.f32 %v657, %v689
  %v793 = vadd.f32 %v658, %v689
  %v794 = vadd.f32 %v659, %v689
  %v795 = vadd.f32 %v660, %v689
  %v796 = vadd.f32 %v661, %v689
  %v797 = vadd.f32 %v662, %v689
  %v798 = vadd.f32 %v663, %v689
  %v799 = vadd.f32 %v664, %v689
  %v800 = vadd.f32 %v665, %v689
  %v801 = vadd.f32 %v666, %v689
  %v802 = vadd.f32 %v667, %v689
  %v803 = vadd.f32 %v668, %v689
  %v804 = vadd.f32 %v669, %v689
  %v805 = vadd.f32 %v670, %v689
  %v806 = vadd.f32 %v671, %v689
  %v807 = vadd.f32 %v672, %v689
  %v808 = vadd.f32 %v673, %v689
  %v809 = vadd.f32 %v674, %v689
  %v810 = vadd.f32 %v675, %v689
  %v811 = vadd.f32 %v676, %v689
  %v812 = vadd.f32 %v677, %v689
  %v813 = vadd.f32 %v678, %v689
  %v814 = vadd.f32 %v679, %v689
  %v815 = vadd.f32 %v680, %v689
  %v816 = vadd.f32 %v681, %v689
  %v817 = vadd.f32 %v682, %v689
  %v818 = vadd.f32 %v683, %v689
  %v819 = vadd.f32 %v293, %v691
  %v820 = vadd.f32 %v294, %v692
  %v821 = vadd.f32 %v295, %v693
  %v822 = vadd.f32 %v296, %v694
  %v823 = vadd.f32 %v297, %v695
  %v824 = vadd.f32 %v298, %v696
  %v825 = vadd.f32 %v299, %v697
  %v826 = vadd.f32 %v300, %v698
  %v827 = vadd.f32 %v301, %v699
  %v828 = vadd.f32 %v302, %v700
  %v829 = vadd.f32 %v303, %v701
  %v830 = vadd.f32 %v304, %v702
  %v831 = vadd.f32 %v305, %v703
  %v832 = vadd.f32 %v306, %v704
  %v833 = vadd.f32 %v307, %v705
  %v834 = vadd.f32 %v308, %v706
  %v835 = vadd.f32 %v309, %v707
  %v836 = vadd.f32 %v310, %v708
  %v837 = vadd.f32 %v311, %v709
  %v838 = vadd.f32 %v312, %v710
  %v839 = vadd.f32 %v313, %v711
  %v840 = vadd.f32 %v314, %v712
  %v841 = vadd.f32 %v315, %v713
  %v842 = vadd.f32 %v316, %v714
  %v843 = vadd.f32 %v317, %v715
  %v844 = vadd.f32 %v318, %v716
  %v845 = vadd.f32 %v319, %v717
  %v846 = vadd.f32 %v320, %v718
  %v847 = vadd.f32 %v321, %v719
  %v848 = vadd.f32 %v322, %v720
  %v849 = vadd.f32 %v323, %v721
  %v850 = vadd.f32 %v324, %v722
  %v851 = vadd.f32 %v325, %v723
  %v852 = vadd.f32 %v326, %v724
  %v853 = vadd.f32 %v327, %v725
  %v854 = vadd.f32 %v328, %v726
  %v855 = vadd.f32 %v329, %v727
  %v856 = vadd.f32 %v330, %v728
  %v857 = vadd.f32 %v331, %v729
  %v858 = vadd.f32 %v332, %v730
  %v859 = vadd.f32 %v333, %v731
  %v860 = vadd.f32 %v334, %v732
  %v861 = vadd.f32 %v335, %v733
  %v862 = vadd.f32 %v336, %v734
  %v863 = vadd.f32 %v337, %v735
  %v864 = vadd.f32 %v338, %v736
  %v865 = vadd.f32 %v339, %v737
  %v866 = vadd.f32 %v340, %v738
  %v867 = vadd.f32 %v341, %v739
  %v868 = vadd.f32 %v342, %v740
  %v869 = vadd.f32 %v343, %v741
  %v870 = vadd.f32 %v344, %v742
  %v871 = vadd.f32 %v345, %v743
  %v872 = vadd.f32 %v346, %v744
  %v873 = vadd.f32 %v347, %v745
  %v874 = vadd.f32 %v348, %v746
  %v875 = vadd.f32 %v349, %v747
  %v876 = vadd.f32 %v350, %v748
  %v877 = vadd.f32 %v351, %v749
  %v878 = vadd.f32 %v352, %v750
  %v879 = vadd.f32 %v353, %v751
  %v880 = vadd.f32 %v354, %v752
  %v881 = vadd.f32 %v355, %v753
  %v882 = vadd.f32 %v356, %v754
  %v883 = vadd.f32 %v357, %v755
  %v884 = vadd.f32 %v358, %v756
  %v885 = vadd.f32 %v359, %v757
  %v886 = vadd.f32 %v360, %v758
  %v887 = vadd.f32 %v361, %v759
  %v888 = vadd.f32 %v362, %v760
  %v889 = vadd.f32 %v363, %v761
  %v890 = vadd.f32 %v364, %v762
  %v891 = vadd.f32 %v365, %v763
  %v892 = vadd.f32 %v366, %v764
  %v893 = vadd.f32 %v367, %v765
  %v894 = vadd.f32 %v368, %v766
  %v895 = vadd.f32 %v369, %v767
  %v896 = vadd.f32 %v370, %v768
  %v897 = vadd.f32 %v371, %v769
  %v898 = vadd.f32 %v372, %v770
  %v899 = vadd.f32 %v373, %v771
  %v900 = vadd.f32 %v374, %v772
  %v901 = vadd.f32 %v375, %v773
  %v902 = vadd.f32 %v376, %v774
  %v903 = vadd.f32 %v377, %v775
  %v904 = vadd.f32 %v378, %v776
  %v905 = vadd.f32 %v379, %v777
  %v906 = vadd.f32 %v380, %v778
  %v907 = vadd.f32 %v381, %v779
  %v908 = vadd.f32 %v382, %v780
  %v909 = vadd.f32 %v383, %v781
  %v910 = vadd.f32 %v384, %v782
  %v911 = vadd.f32 %v385, %v783
  %v912 = vadd.f32 %v386, %v784
  %v913 = vadd.f32 %v387, %v785
  %v914 = vadd.f32 %v388, %v786
  %v915 = vadd.f32 %v389, %v787
  %v916 = vadd.f32 %v390, %v788
  %v917 = vadd.f32 %v391, %v789
  %v918 = vadd.f32 %v392, %v790
  %v919 = vadd.f32 %v393, %v791
  %v920 = vadd.f32 %v394, %v792
  %v921 = vadd.f32 %v395, %v793
  %v922 = vadd.f32 %v396, %v794
  %v923 = vadd.f32 %v397, %v795
  %v924 = vadd.f32 %v398, %v796
  %v925 = vadd.f32 %v399, %v797
  %v926 = vadd.f32 %v400, %v798
  %v927 = vadd.f32 %v401, %v799
  %v928 = vadd.f32 %v402, %v800
  %v929 = vadd.f32 %v403, %v801
  %v930 = vadd.f32 %v404, %v802
  %v931 = vadd.f32 %v405, %v803
  %v932 = vadd.f32 %v406, %v804
  %v933 = vadd.f32 %v407, %v805
  %v934 = vadd.f32 %v408, %v806
  %v935 = vadd.f32 %v409, %v807
  %v936 = vadd.f32 %v410, %v808
  %v937 = vadd.f32 %v411, %v809
  %v938 = vadd.f32 %v412, %v810
  %v939 = vadd.f32 %v413, %v811
  %v940 = vadd.f32 %v414, %v812
  %v941 = vadd.f32 %v415, %v813
  %v942 = vadd.f32 %v416, %v814
  %v943 = vadd.f32 %v417, %v815
  %v944 = vadd.f32 %v418, %v816
  %v945 = vadd.f32 %v419, %v817
  %v946 = vadd.f32 %v420, %v818
  %v947 = vmax.f32 %v819, 0.0
  %v948 = vmax.f32 %v820, 0.0
  %v949 = vmax.f32 %v821, 0.0
  %v950 = vmax.f32 %v822, 0.0
  %v951 = vmax.f32 %v823, 0.0
  %v952 = vmax.f32 %v824, 0.0
  %v953 = vmax.f32 %v825, 0.0
  %v954 = vmax.f32 %v826, 0.0
  %v955 = vmax.f32 %v827, 0.0
  %v956 = vmax.f32 %v828, 0.0
  %v957 = vmax.f32 %v829, 0.0
  %v958 = vmax.f32 %v830, 0.0
  %v959 = vmax.f32 %v831, 0.0
  %v960 = vmax.f32 %v832, 0.0
  %v961 = vmax.f32 %v833, 0.0
  %v962 = vmax.f32 %v834, 0.0
  %v963 = vmax.f32 %v835, 0.0
  %v964 = vmax.f32 %v836, 0.0
  %v965 = vmax.f32 %v837, 0.0
  %v966 = vmax.f32 %v838, 0.0
  %v967 = vmax.f32 %v839, 0.0
  %v968 = vmax.f32 %v840, 0.0
  %v969 = vmax.f32 %v841, 0.0
  %v970 = vmax.f32 %v842, 0.0
  %v971 = vmax.f32 %v843, 0.0
  %v972 = vmax.f32 %v844, 0.0
  %v973 = vmax.f32 %v845, 0.0
  %v974 = vmax.f32 %v846, 0.0
  %v975 = vmax.f32 %v847, 0.0
  %v976 = vmax.f32 %v848, 0.0
  %v977 = vmax.f32 %v849, 0.0
  %v978 = vmax.f32 %v850, 0.0
  %v979 = vmax.f32 %v851, 0.0
  %v980 = vmax.f32 %v852, 0.0
  %v981 = vmax.f32 %v853, 0.0
  %v982 = vmax.f32 %v854, 0.0
  %v983 = vmax.f32 %v855, 0.0
  %v984 = vmax.f32 %v856, 0.0
  %v985 = vmax.f32 %v857, 0.0
  %v986 = vmax.f32 %v858, 0.0
  %v987 = vmax.f32 %v859, 0.0
  %v988 = vmax.f32 %v860, 0.0
  %v989 = vmax.f32 %v861, 0.0
  %v990 = vmax.f32 %v862, 0.0
  %v991 = vmax.f32 %v863, 0.0
  %v992 = vmax.f32 %v864, 0.0
  %v993 = vmax.f32 %v865, 0.0
  %v994 = vmax.f32 %v866, 0.0
  %v995 = vmax.f32 %v867, 0.0
  %v996 = vmax.f32 %v868, 0.0
  %v997 = vmax.f32 %v869, 0.0
  %v998 = vmax.f32 %v870, 0.0
  %v999 = vmax.f32 %v871, 0.0
  %v1000 = vmax.f32 %v872, 0.0
  %v1001 = vmax.f32 %v873, 0.0
  %v1002 = vmax.f32 %v874, 0.0
  %v1003 = vmax.f32 %v875, 0.0
  %v1004 = vmax.f32 %v876, 0.0
  %v1005 = vmax.f32 %v877, 0.0
  %v1006 = vmax.f32 %v878, 0.0
  %v1007 = vmax.f32 %v879, 0.0
  %v1008 = vmax.f32 %v880, 0.0
  %v1009 = vmax.f32 %v881, 0.0
  %v1010 = vmax.f32 %v882, 0.0
  %v1011 = vmax.f32 %v883, 0.0
  %v1012 = vmax.f32 %v884, 0.0
  %v1013 = vmax.f32 %v885, 0.0
  %v1014 = vmax.f32 %v886, 0.0
  %v1015 = vmax.f32 %v887, 0.0
  %v1016 = vmax.f32 %v888, 0.0
  %v1017 = vmax.f32 %v889, 0.0
  %v1018 = vmax.f32 %v890, 0.0
  %v1019 = vmax.f32 %v891, 0.0
  %v1020 = vmax.f32 %v892, 0.0
  %v1021 = vmax.f32 %v893, 0.0
  %v1022 = vmax.f32 %v894, 0.0
  %v1023 = vmax.f32 %v895, 0.0
  %v1024 = vmax.f32 %v896, 0.0
  %v1025 = vmax.f32 %v897, 0.0
  %v1026 = vmax.f32 %v898, 0.0
  %v1027 = vmax.f32 %v899, 0.0
  %v1028 = vmax.f32 %v900, 0.0
  %v1029 = vmax.f32 %v901, 0.0
  %v1030 = vmax.f32 %v902, 0.0
  %v1031 = vmax.f32 %v903, 0.0
  %v1032 = vmax.f32 %v904, 0.0
  %v1033 = vmax.f32 %v905, 0.0
  %v1034 = vmax.f32 %v906, 0.0
  %v1035 = vmax.f32 %v907, 0.0
  %v1036 = vmax.f32 %v908, 0.0
  %v1037 = vmax.f32 %v909, 0.0
  %v1038 = vmax.f32 %v910, 0.0
  %v1039 = vmax.f32 %v911, 0.0
  %v1040 = vmax.f32 %v912, 0.0
  %v1041 = vmax.f32 %v913, 0.0
  %v1042 = vmax.f32 %v914, 0.0
  %v1043 = vmax.f32 %v915, 0.0
  %v1044 = vmax.f32 %v916, 0.0
  %v1045 = vmax.f32 %v917, 0.0
  %v1046 = vmax.f32 %v918, 0.0
  %v1047 = vmax.f32 %v919, 0.0
  %v1048 = vmax.f32 %v920, 0.0
  %v1049 = vmax.f32 %v921, 0.0
  %v1050 = vmax.f32 %v922, 0.0
  %v1051 = vmax.f32 %v923, 0.0
  %v1052 = vmax.f32 %v924, 0.0
  %v1053 = vmax.f32 %v925, 0.0
  %v1054 = vmax.f32 %v926, 0.0
  %v1055 = vmax.f32 %v927, 0.0
  %v1056 = vmax.f32 %v928, 0.0
  %v1057 = vmax.f32 %v929, 0.0
  %v1058 = vmax.f32 %v930, 0.0
  %v1059 = vmax.f32 %v931, 0.0
  %v1060 = vmax.f32 %v932, 0.0
  %v1061 = vmax.f32 %v933, 0.0
  %v1062 = vmax.f32 %v934, 0.0
  %v1063 = vmax.f32 %v935, 0.0
  %v1064 = vmax.f32 %v936, 0.0
  %v1065 = vmax.f32 %v937, 0.0
  %v1066 = vmax.f32 %v938, 0.0
  %v1067 = vmax.f32 %v939, 0.0
  %v1068 = vmax.f32 %v940, 0.0
  %v1069 = vmax.f32 %v941, 0.0
  %v1070 = vmax.f32 %v942, 0.0
  %v1071 = vmax.f32 %v943, 0.0
  %v1072 = vmax.f32 %v944, 0.0
  %v1073 = vmax.f32 %v945, 0.0
  %v1074 = vmax.f32 %v946, 0.0
  %1075 = vst [vmem:[%s6] sm:$0xff] %v947
  %1076 = vst [vmem:[%s6 + $0x8] sm:$0xff] %v948
  %1077 = vst [vmem:[%s6 + $0x10] sm:$0xff] %v949
  %1078 = vst [vmem:[%s6 + $0x18] sm:$0xff] %v950
  %1079 = vst [vmem:[%s6 + $0x20] sm:$0xff] %v951
  %1080 = vst [vmem:[%s6 + $0x28] sm:$0xff] %v952
  %1081 = vst [vmem:[%s6 + $0x30] sm:$0xff] %v953
  %1082 = vst [vmem:[%s6 + $0x38] sm:$0xff] %v954
  %1083 = vst [vmem:[%s6 + $0x40] sm:$0xff] %v955
  %1084 = vst [vmem:[%s6 + $0x48] sm:$0xff] %v956
  %1085 = vst [vmem:[%s6 + $0x50] sm:$0xff] %v957
  %1086 = vst [vmem:[%s6 + $0x58] sm:$0xff] %v958
  %1087 = vst [vmem:[%s6 + $0x60] sm:$0xff] %v959
  %1088 = vst [vmem:[%s6 + $0x68] sm:$0xff] %v960
  %1089 = vst [vmem:[%s6 + $0x70] sm:$0xff] %v961
  %1090 = vst [vmem:[%s6 + $0x78] sm:$0xff] %v962
  %1091 = vst [vmem:[%s6 + $0x80] sm:$0xff] %v963
  %1092 = vst [vmem:[%s6 + $0x88] sm:$0xff] %v964
  %1093 = vst [vmem:[%s6 + $0x90] sm:$0xff] %v965
  %1094 = vst [vmem:[%s6 + $0x98] sm:$0xff] %v966
  %1095 = vst [vmem:[%s6 + $0xa0] sm:$0xff] %v967
  %1096 = vst [vmem:[%s6 + $0xa8] sm:$0xff] %v968
  %1097 = vst [vmem:[%s6 + $0xb0] sm:$0xff] %v969
  %1098 = vst [vmem:[%s6 + $0xb8] sm:$0xff] %v970
  %1099 = vst [vmem:[%s6 + $0xc0] sm:$0xff] %v971
  %1100 = vst [vmem:[%s6 + $0xc8] sm:$0xff] %v972
  %1101 = vst [vmem:[%s6 + $0xd0] sm:$0xff] %v973
  %1102 = vst [vmem:[%s6 + $0xd8] sm:$0xff] %v974
  %1103 = vst [vmem:[%s6 + $0xe0] sm:$0xff] %v975
  %1104 = vst [vmem:[%s6 + $0xe8] sm:$0xff] %v976
  %1105 = vst [vmem:[%s6 + $0xf0] sm:$0xff] %v977
  %1106 = vst [vmem:[%s6 + $0xf8] sm:$0xff] %v978
  %1107 = vst [vmem:[%s6 + $0x100] sm:$0xff] %v979
  %1108 = vst [vmem:[%s6 + $0x108] sm:$0xff] %v980
  %1109 = vst [vmem:[%s6 + $0x110] sm:$0xff] %v981
  %1110 = vst [vmem:[%s6 + $0x118] sm:$0xff] %v982
  %1111 = vst [vmem:[%s6 + $0x120] sm:$0xff] %v983
  %1112 = vst [vmem:[%s6 + $0x128] sm:$0xff] %v984
  %1113 = vst [vmem:[%s6 + $0x130] sm:$0xff] %v985
  %1114 = vst [vmem:[%s6 + $0x138] sm:$0xff] %v986
  %1115 = vst [vmem:[%s6 + $0x140] sm:$0xff] %v987
  %1116 = vst [vmem:[%s6 + $0x148] sm:$0xff] %v988
  %1117 = vst [vmem:[%s6 + $0x150] sm:$0xff] %v989
  %1118 = vst [vmem:[%s6 + $0x158] sm:$0xff] %v990
  %1119 = vst [vmem:[%s6 + $0x160] sm:$0xff] %v991
  %1120 = vst [vmem:[%s6 + $0x168] sm:$0xff] %v992
  %1121 = vst [vmem:[%s6 + $0x170] sm:$0xff] %v993
  %1122 = vst [vmem:[%s6 + $0x178] sm:$0xff] %v994
  %1123 = vst [vmem:[%s6 + $0x180] sm:$0xff] %v995
  %1124 = vst [vmem:[%s6 + $0x188] sm:$0xff] %v996
  %1125 = vst [vmem:[%s6 + $0x190] sm:$0xff] %v997
  %1126 = vst [vmem:[%s6 + $0x198] sm:$0xff] %v998
  %1127 = vst [vmem:[%s6 + $0x1a0] sm:$0xff] %v999
  %1128 = vst [vmem:[%s6 + $0x1a8] sm:$0xff] %v1000
  %1129 = vst [vmem:[%s6 + $0x1b0] sm:$0xff] %v1001
  %1130 = vst [vmem:[%s6 + $0x1b8] sm:$0xff] %v1002
  %1131 = vst [vmem:[%s6 + $0x1c0] sm:$0xff] %v1003
  %1132 = vst [vmem:[%s6 + $0x1c8] sm:$0xff] %v1004
  %1133 = vst [vmem:[%s6 + $0x1d0] sm:$0xff] %v1005
  %1134 = vst [vmem:[%s6 + $0x1d8] sm:$0xff] %v1006
  %1135 = vst [vmem:[%s6 + $0x1e0] sm:$0xff] %v1007
  %1136 = vst [vmem:[%s6 + $0x1e8] sm:$0xff] %v1008
  %1137 = vst [vmem:[%s6 + $0x1f0] sm:$0xff] %v1009
  %1138 = vst [vmem:[%s6 + $0x1f8] sm:$0xff] %v1010
  %1139 = vst [vmem:[%s6 + $0x200] sm:$0xff] %v1011
  %1140 = vst [vmem:[%s6 + $0x208] sm:$0xff] %v1012
  %1141 = vst [vmem:[%s6 + $0x210] sm:$0xff] %v1013
  %1142 = vst [vmem:[%s6 + $0x218] sm:$0xff] %v1014
  %1143 = vst [vmem:[%s6 + $0x220] sm:$0xff] %v1015
  %1144 = vst [vmem:[%s6 + $0x228] sm:$0xff] %v1016
  %1145 = vst [vmem:[%s6 + $0x230] sm:$0xff] %v1017
  %1146 = vst [vmem:[%s6 + $0x238] sm:$0xff] %v1018
  %1147 = vst [vmem:[%s6 + $0x240] sm:$0xff] %v1019
  %1148 = vst [vmem:[%s6 + $0x248] sm:$0xff] %v1020
  %1149 = vst [vmem:[%s6 + $0x250] sm:$0xff] %v1021
  %1150 = vst [vmem:[%s6 + $0x258] sm:$0xff] %v1022
  %1151 = vst [vmem:[%s6 + $0x260] sm:$0xff] %v1023
  %1152 = vst [vmem:[%s6 + $0x268] sm:$0xff] %v1024
  %1153 = vst [vmem:[%s6 + $0x270] sm:$0xff] %v1025
  %1154 = vst [vmem:[%s6 + $0x278] sm:$0xff] %v1026
  %1155 = vst [vmem:[%s6 + $0x280] sm:$0xff] %v1027
  %1156 = vst [vmem:[%s6 + $0x288] sm:$0xff] %v1028
  %1157 = vst [vmem:[%s6 + $0x290] sm:$0xff] %v1029
  %1158 = vst [vmem:[%s6 + $0x298] sm:$0xff] %v1030
  %1159 = vst [vmem:[%s6 + $0x2a0] sm:$0xff] %v1031
  %1160 = vst [vmem:[%s6 + $0x2a8] sm:$0xff] %v1032
  %1161 = vst [vmem:[%s6 + $0x2b0] sm:$0xff] %v1033
  %1162 = vst [vmem:[%s6 + $0x2b8] sm:$0xff] %v1034
  %1163 = vst [vmem:[%s6 + $0x2c0] sm:$0xff] %v1035
  %1164 = vst [vmem:[%s6 + $0x2c8] sm:$0xff] %v1036
  %1165 = vst [vmem:[%s6 + $0x2d0] sm:$0xff] %v1037
  %1166 = vst [vmem:[%s6 + $0x2d8] sm:$0xff] %v1038
  %1167 = vst [vmem:[%s6 + $0x2e0] sm:$0xff] %v1039
  %1168 = vst [vmem:[%s6 + $0x2e8] sm:$0xff] %v1040
  %1169 = vst [vmem:[%s6 + $0x2f0] sm:$0xff] %v1041
  %1170 = vst [vmem:[%s6 + $0x2f8] sm:$0xff] %v1042
  %1171 = vst [vmem:[%s6 + $0x300] sm:$0xff] %v1043
  %1172 = vst [vmem:[%s6 + $0x308] sm:$0xff] %v1044
  %1173 = vst [vmem:[%s6 + $0x310] sm:$0xff] %v1045
  %1174 = vst [vmem:[%s6 + $0x318] sm:$0xff] %v1046
  %1175 = vst [vmem:[%s6 + $0x320] sm:$0xff] %v1047
  %1176 = vst [vmem:[%s6 + $0x328] sm:$0xff] %v1048
  %1177 = vst [vmem:[%s6 + $0x330] sm:$0xff] %v1049
  %1178 = vst [vmem:[%s6 + $0x338] sm:$0xff] %v1050
  %1179 = vst [vmem:[%s6 + $0x340] sm:$0xff] %v1051
  %1180 = vst [vmem:[%s6 + $0x348] sm:$0xff] %v1052
  %1181 = vst [vmem:[%s6 + $0x350] sm:$0xff] %v1053
  %1182 = vst [vmem:[%s6 + $0x358] sm:$0xff] %v1054
  %1183 = vst [vmem:[%s6 + $0x360] sm:$0xff] %v1055
  %1184 = vst [vmem:[%s6 + $0x368] sm:$0xff] %v1056
  %1185 = vst [vmem:[%s6 + $0x370] sm:$0xff] %v1057
  %1186 = vst [vmem:[%s6 + $0x378] sm:$0xff] %v1058
  %1187 = vst [vmem:[%s6 + $0x380] sm:$0xff] %v1059
  %1188 = vst [vmem:[%s6 + $0x388] sm:$0xff] %v1060
  %1189 = vst [vmem:[%s6 + $0x390] sm:$0xff] %v1061
  %1190 = vst [vmem:[%s6 + $0x398] sm:$0xff] %v1062
  %1191 = vst [vmem:[%s6 + $0x3a0] sm:$0xff] %v1063
  %1192 = vst [vmem:[%s6 + $0x3a8] sm:$0xff] %v1064
  %1193 = vst [vmem:[%s6 + $0x3b0] sm:$0xff] %v1065
  %1194 = vst [vmem:[%s6 + $0x3b8] sm:$0xff] %v1066
  %1195 = vst [vmem:[%s6 + $0x3c0] sm:$0xff] %v1067
  %1196 = vst [vmem:[%s6 + $0x3c8] sm:$0xff] %v1068
  %1197 = vst [vmem:[%s6 + $0x3d0] sm:$0xff] %v1069
  %1198 = vst [vmem:[%s6 + $0x3d8] sm:$0xff] %v1070
  %1199 = vst [vmem:[%s6 + $0x3e0] sm:$0xff] %v1071
  %1200 = vst [vmem:[%s6 + $0x3e8] sm:$0xff] %v1072
  %1201 = vst [vmem:[%s6 + $0x3f0] sm:$0xff] %v1073
  %1202 = vst [vmem:[%s6 + $0x3f8] sm:$0xff] %v1074
  // Predicated region
  $region26: #{_lambda_.11} parent=0 // pred_check
    _
  $region27: #{_lambda_.11} parent=0 // pred_check_branch
    %1204 = sbr.rel (0) target = $region29
  $region28: #{_lambda_.11} parent=0 // pred_region
    _
  $region29: #{_lambda_.11} parent=0 // pred_fallthru
    _
  // Predicated region
  $region30: #{_lambda_.11} parent=0 // pred_check
    _
  $region31: #{_lambda_.11} parent=0 // pred_check_branch
    %1206 = sbr.rel (0) target = $region33
  $region32: #{_lambda_.11} parent=0 // pred_region
    _
  $region33: #{_lambda_.11} parent=0 // pred_fallthru
    _

</llo_original>
